<compile_context>
chip_gen: v5e
topology: v5e:2x2
jax: 0.10.0
libtpu: 0.0.40
codegen_flags: <defaults>
</compile_context>

<pallas_src>
import math

import jax
import jax.numpy as jnp
from jax.experimental import pallas as pl
from jax.experimental.pallas import tpu as pltpu  # noqa: F401  (imported per convention)

# ----------------------------- config ---------------------------------------
VOCAB_SIZE = 64
HIDDEN = 32
NUM_HEADS = 4
HEAD_DIM = HIDDEN // NUM_HEADS
NUM_LAYERS = 2
FFN = 64
SEQ = 8
BATCH = 2
BS = BATCH * SEQ
PAD_TOKEN_ID = 0
LN_EPS = 1e-5
INIT_STD = 0.02
ATTN_SCALE = 1.0 / math.sqrt(HEAD_DIM)


# ----------------------------- fused kernel ----------------------------------
def fused_forward_kernel(
    ids_col_ref,      # (BS, 1)  int32  token ids (column form, for one-hot gather)
    ids_row_ref,      # (B, S)   int32  token ids (row form, for key padding mask)
    emb_ref,          # (V, H)   f32    token embedding table (tied with output)
    pe_ref,           # (BS, H)  f32    sinusoidal positional encoding (batch-tiled)
    emb_ln_g_ref, emb_ln_b_ref,     # (1, H)
    fin_ln_g_ref, fin_ln_b_ref,     # (1, H)
    w_qkv_ref, b_qkv_ref,           # (L, H, 3H), (L, 1, 3H)  fused Q|K|V projection
    w_o_ref, b_o_ref,               # (L, H, H),  (L, 1, H)
    w1_ref, b1_ref,                 # (L, H, F),  (L, 1, F)
    w2_ref, b2_ref,                 # (L, F, H),  (L, 1, H)
    ln1_g_ref, ln1_b_ref,           # (L, 1, H)
    ln2_g_ref, ln2_b_ref,           # (L, 1, H)
    hid_ref,          # (BS, H)  f32  out: final hidden state
    logits_ref,       # (BS, V)  f32  out: tied-embedding logits
):
    def layer_norm(h, g, b):
        mu = jnp.mean(h, axis=-1, keepdims=True)
        var = jnp.mean((h - mu) ** 2, axis=-1, keepdims=True)
        return (h - mu) * jax.lax.rsqrt(var + LN_EPS) * g + b

    # ---- token embedding gather as one-hot matmul (stays on MXU, in VMEM) ----
    ids_col = ids_col_ref[...]                                         # (BS, 1) i32
    vocab_iota = jax.lax.broadcasted_iota(jnp.int32, (BS, VOCAB_SIZE), 1)
    one_hot = (vocab_iota == ids_col).astype(jnp.float32)              # (BS, V)
    emb = emb_ref[...]                                                 # (V, H)
    tok = jnp.dot(one_hot, emb, preferred_element_type=jnp.float32)    # (BS, H)

    # ---- embeddings: add PE, LayerNorm (dropout = identity in eval) ----
    x = layer_norm(tok + pe_ref[...], emb_ln_g_ref[...], emb_ln_b_ref[...])

    # ---- attention bias per batch: causal AND key-not-pad, additive -1e9 ----
    row = jax.lax.broadcasted_iota(jnp.int32, (SEQ, SEQ), 0)
    col = jax.lax.broadcasted_iota(jnp.int32, (SEQ, SEQ), 1)
    causal = (row >= col).astype(jnp.float32)                          # (S, S)
    key_valid = (ids_row_ref[...] != PAD_TOKEN_ID).astype(jnp.float32)  # (B, S)
    biases = []
    for b in range(BATCH):
        allow = causal * key_valid[b:b + 1, :]                         # (S, S)
        biases.append((allow - 1.0) * 1e9)                             # 0 or -1e9

    gelu_c = 0.7978845608028654  # sqrt(2/pi)

    # ---- transformer layers, fully unrolled, all activations in VMEM ----
    for l in range(NUM_LAYERS):
        # fused Q|K|V projection: one (BS,H)@(H,3H) MXU pass
        qkv = (jnp.dot(x, w_qkv_ref[l], preferred_element_type=jnp.float32)
               + b_qkv_ref[l])                                         # (BS, 3H)
        q = qkv[:, 0:HIDDEN]
        k = qkv[:, HIDDEN:2 * HIDDEN]
        v = qkv[:, 2 * HIDDEN:3 * HIDDEN]

        # attention, unrolled over (batch, head) on VMEM slices — no transposes,
        # no grid, bias loaded once per batch
        batch_blocks = []
        for b in range(BATCH):
            r0 = b * SEQ
            bias_b = biases[b]
            head_outs = []
            for h in range(NUM_HEADS):
                c0 = h * HEAD_DIM
                q_bh = q[r0:r0 + SEQ, c0:c0 + HEAD_DIM]                # (S, Dh)
                k_bh = k[r0:r0 + SEQ, c0:c0 + HEAD_DIM]
                v_bh = v[r0:r0 + SEQ, c0:c0 + HEAD_DIM]
                s = jax.lax.dot_general(
                    q_bh, k_bh, (((1,), (1,)), ((), ())),
                    preferred_element_type=jnp.float32,
                ) * ATTN_SCALE + bias_b                                # (S, S)
                m = jnp.max(s, axis=-1, keepdims=True)
                p = jnp.exp(s - m)
                p = p * pl.reciprocal(jnp.sum(p, axis=-1, keepdims=True), approx=True)
                head_outs.append(
                    jnp.dot(p, v_bh, preferred_element_type=jnp.float32))  # (S, Dh)
            batch_blocks.append(jnp.concatenate(head_outs, axis=-1))   # (S, H)
        attn = jnp.concatenate(batch_blocks, axis=0)                   # (BS, H)

        # output projection + residual + post-LN 1
        attn = (jnp.dot(attn, w_o_ref[l], preferred_element_type=jnp.float32)
                + b_o_ref[l])
        x = layer_norm(x + attn, ln1_g_ref[l], ln1_b_ref[l])

        # FFN: W1 + GELU (tanh approx) + W2, residual + post-LN 2
        hmid = (jnp.dot(x, w1_ref[l], preferred_element_type=jnp.float32)
                + b1_ref[l])                                           # (BS, F)
        hmid = 0.5 * hmid * (1.0 + jnp.tanh(gelu_c * (hmid + 0.044715 * hmid * hmid * hmid)))
        ffn = (jnp.dot(hmid, w2_ref[l], preferred_element_type=jnp.float32)
               + b2_ref[l])                                            # (BS, H)
        x = layer_norm(x + ffn, ln2_g_ref[l], ln2_b_ref[l])

    # ---- final LayerNorm + tied-embedding logits (transposed contraction) ----
    x = layer_norm(x, fin_ln_g_ref[...], fin_ln_b_ref[...])
    hid_ref[...] = x
    logits_ref[...] = jax.lax.dot_general(
        x, emb, (((1,), (1,)), ((), ())), preferred_element_type=jnp.float32)


# ----------------------------- parameters ------------------------------------
def sinusoidal_pe(seq_len, hidden):
    pos = jnp.arange(seq_len, dtype=jnp.float32)[:, None]
    div = jnp.exp(
        jnp.arange(0, hidden, 2, dtype=jnp.float32) * (-math.log(10000.0) / hidden)
    )
    pe = jnp.zeros((seq_len, hidden), jnp.float32)
    pe = pe.at[:, 0::2].set(jnp.sin(pos * div))
    pe = pe.at[:, 1::2].set(jnp.cos(pos * div))
    return pe


def init_params(key):
    def nrm(k, shape):
        return INIT_STD * jax.random.normal(k, shape, jnp.float32)

    keys = jax.random.split(key, 1 + NUM_LAYERS)
    emb = nrm(keys[0], (VOCAB_SIZE, HIDDEN))
    emb = emb.at[PAD_TOKEN_ID].set(0.0)  # padding_idx row zeroed

    w_qkv, b_qkv, w_o, b_o = [], [], [], []
    w1, b1, w2, b2 = [], [], [], []
    for l in range(NUM_LAYERS):
        ks = jax.random.split(keys[1 + l], 6)
        wq, wk, wv = nrm(ks[0], (HIDDEN, HIDDEN)), nrm(ks[1], (HIDDEN, HIDDEN)), nrm(ks[2], (HIDDEN, HIDDEN))
        w_qkv.append(jnp.concatenate([wq, wk, wv], axis=1))     # (H, 3H)
        b_qkv.append(jnp.zeros((1, 3 * HIDDEN), jnp.float32))
        w_o.append(nrm(ks[3], (HIDDEN, HIDDEN)))
        b_o.append(jnp.zeros((1, HIDDEN), jnp.float32))
        w1.append(nrm(ks[4], (HIDDEN, FFN)))
        b1.append(jnp.zeros((1, FFN), jnp.float32))
        w2.append(nrm(ks[5], (FFN, HIDDEN)))
        b2.append(jnp.zeros((1, HIDDEN), jnp.float32))

    ones_lh = jnp.ones((NUM_LAYERS, 1, HIDDEN), jnp.float32)
    zeros_lh = jnp.zeros((NUM_LAYERS, 1, HIDDEN), jnp.float32)

    pe = sinusoidal_pe(SEQ, HIDDEN)                              # (S, H)
    pe_tiled = jnp.tile(pe, (BATCH, 1))                          # (B*S, H)

    return dict(
        emb=emb,
        pe=pe_tiled,
        emb_ln_g=jnp.ones((1, HIDDEN), jnp.float32),
        emb_ln_b=jnp.zeros((1, HIDDEN), jnp.float32),
        final_ln_g=jnp.ones((1, HIDDEN), jnp.float32),
        final_ln_b=jnp.zeros((1, HIDDEN), jnp.float32),
        w_qkv=jnp.stack(w_qkv), b_qkv=jnp.stack(b_qkv),
        w_o=jnp.stack(w_o), b_o=jnp.stack(b_o),
        w1=jnp.stack(w1), b1=jnp.stack(b1),
        w2=jnp.stack(w2), b2=jnp.stack(b2),
        ln1_g=ones_lh, ln1_b=zeros_lh,
        ln2_g=ones_lh, ln2_b=zeros_lh,
    )


# ----------------------------- forward pass -----------------------------------
def transformer_forward(params, input_ids):
    B, S = input_ids.shape
    ids_col = input_ids.reshape(B * S, 1).astype(jnp.int32)
    ids_row = input_ids.astype(jnp.int32)

    hid, logits = pl.pallas_call(
        fused_forward_kernel,
        out_shape=(
            jax.ShapeDtypeStruct((B * S, HIDDEN), jnp.float32),
            jax.ShapeDtypeStruct((B * S, VOCAB_SIZE), jnp.float32),
        ),
    )(
        ids_col, ids_row, params["emb"], params["pe"],
        params["emb_ln_g"], params["emb_ln_b"],
        params["final_ln_g"], params["final_ln_b"],
        params["w_qkv"], params["b_qkv"], params["w_o"], params["b_o"],
        params["w1"], params["b1"], params["w2"], params["b2"],
        params["ln1_g"], params["ln1_b"], params["ln2_g"], params["ln2_b"],
    )

    return {
        "last_hidden_state": hid.reshape(B, S, HIDDEN),
        "logits": logits.reshape(B, S, VOCAB_SIZE),
    }


# ----------------------------- main -------------------------------------------
if __name__ == "__main__":
    key = jax.random.PRNGKey(0)
    pkey, dkey = jax.random.split(key)
    params = init_params(pkey)

    # a few pad tokens (id 0) may appear, exercising the padding mask
    input_ids = jax.random.randint(dkey, (BATCH, SEQ), 0, VOCAB_SIZE, dtype=jnp.int32)

    outputs = jax.jit(transformer_forward)(params, input_ids)
    jax.block_until_ready(outputs)

    assert outputs["last_hidden_state"].shape == (BATCH, SEQ, HIDDEN)
    assert outputs["logits"].shape == (BATCH, SEQ, VOCAB_SIZE)
    assert bool(jnp.all(jnp.isfinite(outputs["logits"])))

    print("KERNEL_OK")
</pallas_src>

<mosaic_0001>
module attributes {stable_mosaic.version = 11 : i64} {
  func.func @fused_forward_kernel(%arg0: memref<16x1xi32, #tpu.memory_space<vmem>>, %arg1: memref<2x8xi32, #tpu.memory_space<vmem>>, %arg2: memref<64x32xf32, #tpu.memory_space<vmem>>, %arg3: memref<16x32xf32, #tpu.memory_space<vmem>>, %arg4: memref<1x32xf32, #tpu.memory_space<vmem>>, %arg5: memref<1x32xf32, #tpu.memory_space<vmem>>, %arg6: memref<1x32xf32, #tpu.memory_space<vmem>>, %arg7: memref<1x32xf32, #tpu.memory_space<vmem>>, %arg8: memref<2x32x96xf32, #tpu.memory_space<vmem>>, %arg9: memref<2x1x96xf32, #tpu.memory_space<vmem>>, %arg10: memref<2x32x32xf32, #tpu.memory_space<vmem>>, %arg11: memref<2x1x32xf32, #tpu.memory_space<vmem>>, %arg12: memref<2x32x64xf32, #tpu.memory_space<vmem>>, %arg13: memref<2x1x64xf32, #tpu.memory_space<vmem>>, %arg14: memref<2x64x32xf32, #tpu.memory_space<vmem>>, %arg15: memref<2x1x32xf32, #tpu.memory_space<vmem>>, %arg16: memref<2x1x32xf32, #tpu.memory_space<vmem>>, %arg17: memref<2x1x32xf32, #tpu.memory_space<vmem>>, %arg18: memref<2x1x32xf32, #tpu.memory_space<vmem>>, %arg19: memref<2x1x32xf32, #tpu.memory_space<vmem>>, %arg20: memref<16x32xf32, #tpu.memory_space<vmem>>, %arg21: memref<16x64xf32, #tpu.memory_space<vmem>>) attributes {dimension_semantics = [], scalar_prefetch = 0 : i64, scratch_operands = 0 : i64, tpu.core_type = #tpu.core_type<tc>} {
    %c0 = arith.constant 0 : index
    %c0_0 = arith.constant 0 : index
    %0 = vector.load %arg0[%c0, %c0_0] : memref<16x1xi32, #tpu.memory_space<vmem>>, vector<16x1xi32>
    %1 = tpu.iota {dimensions = array<i32: 1>} : vector<16x64xi32>
    %2 = vector.broadcast %0 : vector<16x1xi32> to vector<16x64xi32>
    %3 = arith.cmpi eq, %1, %2 : vector<16x64xi32>
    %4 = arith.extui %3 : vector<16x64xi1> to vector<16x64xi32>
    %5 = arith.sitofp %4 : vector<16x64xi32> to vector<16x64xf32>
    %c0_1 = arith.constant 0 : index
    %c0_2 = arith.constant 0 : index
    %6 = vector.load %arg2[%c0_1, %c0_2] : memref<64x32xf32, #tpu.memory_space<vmem>>, vector<64x32xf32>
    %cst = arith.constant dense<0.000000e+00> : vector<16x32xf32>
    %7 = tpu.matmul %5, %6, %cst {dimension_numbers = #tpu.dot_dimension_numbers<[1], [0], [0], [1], [0, 0, 1, 1], [], []>} : vector<16x64xf32>, vector<64x32xf32>, vector<16x32xf32> -> vector<16x32xf32>
    %c0_3 = arith.constant 0 : index
    %c0_4 = arith.constant 0 : index
    %8 = vector.load %arg3[%c0_3, %c0_4] : memref<16x32xf32, #tpu.memory_space<vmem>>, vector<16x32xf32>
    %9 = arith.addf %7, %8 : vector<16x32xf32>
    %c0_5 = arith.constant 0 : index
    %c0_6 = arith.constant 0 : index
    %10 = vector.load %arg4[%c0_5, %c0_6] : memref<1x32xf32, #tpu.memory_space<vmem>>, vector<1x32xf32>
    %c0_7 = arith.constant 0 : index
    %c0_8 = arith.constant 0 : index
    %11 = vector.load %arg5[%c0_7, %c0_8] : memref<1x32xf32, #tpu.memory_space<vmem>>, vector<1x32xf32>
    %cst_9 = arith.constant dense<0.000000e+00> : vector<16xf32>
    %12 = vector.multi_reduction <add>, %9, %cst_9 [1] : vector<16x32xf32> to vector<16xf32>
    %13 = vector.shape_cast %12 : vector<16xf32> to vector<16x1xf32>
    %cst_10 = arith.constant 3.200000e+01 : f32
    %14 = vector.broadcast %cst_10 : f32 to vector<16x1xf32>
    %15 = arith.divf %13, %14 : vector<16x1xf32>
    %16 = vector.broadcast %15 : vector<16x1xf32> to vector<16x32xf32>
    %17 = arith.subf %9, %16 : vector<16x32xf32>
    %18 = arith.mulf %17, %17 : vector<16x32xf32>
    %cst_11 = arith.constant dense<0.000000e+00> : vector<16xf32>
    %19 = vector.multi_reduction <add>, %18, %cst_11 [1] : vector<16x32xf32> to vector<16xf32>
    %20 = vector.shape_cast %19 : vector<16xf32> to vector<16x1xf32>
    %cst_12 = arith.constant 3.200000e+01 : f32
    %21 = vector.broadcast %cst_12 : f32 to vector<16x1xf32>
    %22 = arith.divf %20, %21 : vector<16x1xf32>
    %23 = vector.broadcast %15 : vector<16x1xf32> to vector<16x32xf32>
    %24 = arith.subf %9, %23 : vector<16x32xf32>
    %cst_13 = arith.constant 9.99999974E-6 : f32
    %25 = vector.broadcast %cst_13 : f32 to vector<16x1xf32>
    %26 = arith.addf %22, %25 : vector<16x1xf32>
    %27 = math.rsqrt %26 : vector<16x1xf32>
    %28 = vector.broadcast %27 : vector<16x1xf32> to vector<16x32xf32>
    %29 = arith.mulf %24, %28 : vector<16x32xf32>
    %30 = vector.broadcast %10 : vector<1x32xf32> to vector<16x32xf32>
    %31 = arith.mulf %29, %30 : vector<16x32xf32>
    %32 = vector.broadcast %11 : vector<1x32xf32> to vector<16x32xf32>
    %33 = arith.addf %31, %32 : vector<16x32xf32>
    %34 = tpu.iota {dimensions = array<i32: 0>} : vector<8x8xi32>
    %35 = tpu.iota {dimensions = array<i32: 1>} : vector<8x8xi32>
    %36 = arith.cmpi sge, %34, %35 : vector<8x8xi32>
    %37 = arith.extui %36 : vector<8x8xi1> to vector<8x8xi32>
    %38 = arith.sitofp %37 : vector<8x8xi32> to vector<8x8xf32>
    %c0_14 = arith.constant 0 : index
    %c0_15 = arith.constant 0 : index
    %39 = vector.load %arg1[%c0_14, %c0_15] : memref<2x8xi32, #tpu.memory_space<vmem>>, vector<2x8xi32>
    %c0_i32 = arith.constant 0 : i32
    %40 = vector.broadcast %c0_i32 : i32 to vector<2x8xi32>
    %41 = arith.cmpi ne, %39, %40 : vector<2x8xi32>
    %42 = arith.extui %41 : vector<2x8xi1> to vector<2x8xi32>
    %43 = arith.sitofp %42 : vector<2x8xi32> to vector<2x8xf32>
    %44 = vector.extract_strided_slice %43 {offsets = [0, 0], sizes = [1, 8], strides = [1, 1]} : vector<2x8xf32> to vector<1x8xf32>
    %45 = vector.broadcast %44 : vector<1x8xf32> to vector<8x8xf32>
    %46 = arith.mulf %38, %45 : vector<8x8xf32>
    %cst_16 = arith.constant 1.000000e+00 : f32
    %47 = vector.broadcast %cst_16 : f32 to vector<8x8xf32>
    %48 = arith.subf %46, %47 : vector<8x8xf32>
    %cst_17 = arith.constant 1.000000e+09 : f32
    %49 = vector.broadcast %cst_17 : f32 to vector<8x8xf32>
    %50 = arith.mulf %48, %49 : vector<8x8xf32>
    %51 = vector.extract_strided_slice %43 {offsets = [1, 0], sizes = [1, 8], strides = [1, 1]} : vector<2x8xf32> to vector<1x8xf32>
    %52 = vector.broadcast %51 : vector<1x8xf32> to vector<8x8xf32>
    %53 = arith.mulf %38, %52 : vector<8x8xf32>
    %cst_18 = arith.constant 1.000000e+00 : f32
    %54 = vector.broadcast %cst_18 : f32 to vector<8x8xf32>
    %55 = arith.subf %53, %54 : vector<8x8xf32>
    %cst_19 = arith.constant 1.000000e+09 : f32
    %56 = vector.broadcast %cst_19 : f32 to vector<8x8xf32>
    %57 = arith.mulf %55, %56 : vector<8x8xf32>
    %c0_20 = arith.constant 0 : index
    %c0_21 = arith.constant 0 : index
    %c0_22 = arith.constant 0 : index
    %58 = vector.load %arg8[%c0_20, %c0_21, %c0_22] : memref<2x32x96xf32, #tpu.memory_space<vmem>>, vector<1x32x96xf32>
    %59 = vector.shape_cast %58 : vector<1x32x96xf32> to vector<32x96xf32>
    %cst_23 = arith.constant dense<0.000000e+00> : vector<16x96xf32>
    %60 = tpu.matmul %33, %59, %cst_23 {dimension_numbers = #tpu.dot_dimension_numbers<[1], [0], [0], [1], [0, 0, 1, 1], [], []>} : vector<16x32xf32>, vector<32x96xf32>, vector<16x96xf32> -> vector<16x96xf32>
    %c0_24 = arith.constant 0 : index
    %c0_25 = arith.constant 0 : index
    %c0_26 = arith.constant 0 : index
    %61 = vector.load %arg9[%c0_24, %c0_25, %c0_26] : memref<2x1x96xf32, #tpu.memory_space<vmem>>, vector<1x1x96xf32>
    %62 = vector.shape_cast %61 : vector<1x1x96xf32> to vector<1x96xf32>
    %63 = vector.broadcast %62 : vector<1x96xf32> to vector<16x96xf32>
    %64 = arith.addf %60, %63 : vector<16x96xf32>
    %65 = vector.extract_strided_slice %64 {offsets = [0, 0], sizes = [16, 32], strides = [1, 1]} : vector<16x96xf32> to vector<16x32xf32>
    %66 = vector.extract_strided_slice %64 {offsets = [0, 32], sizes = [16, 32], strides = [1, 1]} : vector<16x96xf32> to vector<16x32xf32>
    %67 = vector.extract_strided_slice %64 {offsets = [0, 64], sizes = [16, 32], strides = [1, 1]} : vector<16x96xf32> to vector<16x32xf32>
    %68 = vector.extract_strided_slice %65 {offsets = [0, 0], sizes = [8, 8], strides = [1, 1]} : vector<16x32xf32> to vector<8x8xf32>
    %69 = vector.extract_strided_slice %66 {offsets = [0, 0], sizes = [8, 8], strides = [1, 1]} : vector<16x32xf32> to vector<8x8xf32>
    %70 = vector.extract_strided_slice %67 {offsets = [0, 0], sizes = [8, 8], strides = [1, 1]} : vector<16x32xf32> to vector<8x8xf32>
    %cst_27 = arith.constant dense<0.000000e+00> : vector<8x8xf32>
    %71 = tpu.matmul %68, %69, %cst_27 {dimension_numbers = #tpu.dot_dimension_numbers<[1], [1], [0], [0], [0, 0, 1, 0], [], []>} : vector<8x8xf32>, vector<8x8xf32>, vector<8x8xf32> -> vector<8x8xf32>
    %cst_28 = arith.constant 0.353553385 : f32
    %72 = vector.broadcast %cst_28 : f32 to vector<8x8xf32>
    %73 = arith.mulf %71, %72 : vector<8x8xf32>
    %74 = arith.addf %73, %50 : vector<8x8xf32>
    %cst_29 = arith.constant dense<0xFF800000> : vector<8xf32>
    %75 = vector.multi_reduction <maximumf>, %74, %cst_29 [1] : vector<8x8xf32> to vector<8xf32>
    %76 = vector.shape_cast %75 : vector<8xf32> to vector<8x1xf32>
    %77 = vector.broadcast %76 : vector<8x1xf32> to vector<8x8xf32>
    %78 = arith.subf %74, %77 : vector<8x8xf32>
    %79 = math.exp %78 : vector<8x8xf32>
    %cst_30 = arith.constant dense<0.000000e+00> : vector<8xf32>
    %80 = vector.multi_reduction <add>, %79, %cst_30 [1] : vector<8x8xf32> to vector<8xf32>
    %81 = vector.shape_cast %80 : vector<8xf32> to vector<8x1xf32>
    %82 = tpu.reciprocal %81 {approx = true} : vector<8x1xf32> -> vector<8x1xf32>
    %83 = vector.broadcast %82 : vector<8x1xf32> to vector<8x8xf32>
    %84 = arith.mulf %79, %83 : vector<8x8xf32>
    %cst_31 = arith.constant dense<0.000000e+00> : vector<8x8xf32>
    %85 = tpu.matmul %84, %70, %cst_31 {dimension_numbers = #tpu.dot_dimension_numbers<[1], [0], [0], [1], [0, 0, 1, 1], [], []>} : vector<8x8xf32>, vector<8x8xf32>, vector<8x8xf32> -> vector<8x8xf32>
    %86 = vector.extract_strided_slice %65 {offsets = [0, 8], sizes = [8, 8], strides = [1, 1]} : vector<16x32xf32> to vector<8x8xf32>
    %87 = vector.extract_strided_slice %66 {offsets = [0, 8], sizes = [8, 8], strides = [1, 1]} : vector<16x32xf32> to vector<8x8xf32>
    %88 = vector.extract_strided_slice %67 {offsets = [0, 8], sizes = [8, 8], strides = [1, 1]} : vector<16x32xf32> to vector<8x8xf32>
    %cst_32 = arith.constant dense<0.000000e+00> : vector<8x8xf32>
    %89 = tpu.matmul %86, %87, %cst_32 {dimension_numbers = #tpu.dot_dimension_numbers<[1], [1], [0], [0], [0, 0, 1, 0], [], []>} : vector<8x8xf32>, vector<8x8xf32>, vector<8x8xf32> -> vector<8x8xf32>
    %cst_33 = arith.constant 0.353553385 : f32
    %90 = vector.broadcast %cst_33 : f32 to vector<8x8xf32>
    %91 = arith.mulf %89, %90 : vector<8x8xf32>
    %92 = arith.addf %91, %50 : vector<8x8xf32>
    %cst_34 = arith.constant dense<0xFF800000> : vector<8xf32>
    %93 = vector.multi_reduction <maximumf>, %92, %cst_34 [1] : vector<8x8xf32> to vector<8xf32>
    %94 = vector.shape_cast %93 : vector<8xf32> to vector<8x1xf32>
    %95 = vector.broadcast %94 : vector<8x1xf32> to vector<8x8xf32>
    %96 = arith.subf %92, %95 : vector<8x8xf32>
    %97 = math.exp %96 : vector<8x8xf32>
    %cst_35 = arith.constant dense<0.000000e+00> : vector<8xf32>
    %98 = vector.multi_reduction <add>, %97, %cst_35 [1] : vector<8x8xf32> to vector<8xf32>
    %99 = vector.shape_cast %98 : vector<8xf32> to vector<8x1xf32>
    %100 = tpu.reciprocal %99 {approx = true} : vector<8x1xf32> -> vector<8x1xf32>
    %101 = vector.broadcast %100 : vector<8x1xf32> to vector<8x8xf32>
    %102 = arith.mulf %97, %101 : vector<8x8xf32>
    %cst_36 = arith.constant dense<0.000000e+00> : vector<8x8xf32>
    %103 = tpu.matmul %102, %88, %cst_36 {dimension_numbers = #tpu.dot_dimension_numbers<[1], [0], [0], [1], [0, 0, 1, 1], [], []>} : vector<8x8xf32>, vector<8x8xf32>, vector<8x8xf32> -> vector<8x8xf32>
    %104 = vector.extract_strided_slice %65 {offsets = [0, 16], sizes = [8, 8], strides = [1, 1]} : vector<16x32xf32> to vector<8x8xf32>
    %105 = vector.extract_strided_slice %66 {offsets = [0, 16], sizes = [8, 8], strides = [1, 1]} : vector<16x32xf32> to vector<8x8xf32>
    %106 = vector.extract_strided_slice %67 {offsets = [0, 16], sizes = [8, 8], strides = [1, 1]} : vector<16x32xf32> to vector<8x8xf32>
    %cst_37 = arith.constant dense<0.000000e+00> : vector<8x8xf32>
    %107 = tpu.matmul %104, %105, %cst_37 {dimension_numbers = #tpu.dot_dimension_numbers<[1], [1], [0], [0], [0, 0, 1, 0], [], []>} : vector<8x8xf32>, vector<8x8xf32>, vector<8x8xf32> -> vector<8x8xf32>
    %cst_38 = arith.constant 0.353553385 : f32
    %108 = vector.broadcast %cst_38 : f32 to vector<8x8xf32>
    %109 = arith.mulf %107, %108 : vector<8x8xf32>
    %110 = arith.addf %109, %50 : vector<8x8xf32>
    %cst_39 = arith.constant dense<0xFF800000> : vector<8xf32>
    %111 = vector.multi_reduction <maximumf>, %110, %cst_39 [1] : vector<8x8xf32> to vector<8xf32>
    %112 = vector.shape_cast %111 : vector<8xf32> to vector<8x1xf32>
    %113 = vector.broadcast %112 : vector<8x1xf32> to vector<8x8xf32>
    %114 = arith.subf %110, %113 : vector<8x8xf32>
    %115 = math.exp %114 : vector<8x8xf32>
    %cst_40 = arith.constant dense<0.000000e+00> : vector<8xf32>
    %116 = vector.multi_reduction <add>, %115, %cst_40 [1] : vector<8x8xf32> to vector<8xf32>
    %117 = vector.shape_cast %116 : vector<8xf32> to vector<8x1xf32>
    %118 = tpu.reciprocal %117 {approx = true} : vector<8x1xf32> -> vector<8x1xf32>
    %119 = vector.broadcast %118 : vector<8x1xf32> to vector<8x8xf32>
    %120 = arith.mulf %115, %119 : vector<8x8xf32>
    %cst_41 = arith.constant dense<0.000000e+00> : vector<8x8xf32>
    %121 = tpu.matmul %120, %106, %cst_41 {dimension_numbers = #tpu.dot_dimension_numbers<[1], [0], [0], [1], [0, 0, 1, 1], [], []>} : vector<8x8xf32>, vector<8x8xf32>, vector<8x8xf32> -> vector<8x8xf32>
    %122 = vector.extract_strided_slice %65 {offsets = [0, 24], sizes = [8, 8], strides = [1, 1]} : vector<16x32xf32> to vector<8x8xf32>
    %123 = vector.extract_strided_slice %66 {offsets = [0, 24], sizes = [8, 8], strides = [1, 1]} : vector<16x32xf32> to vector<8x8xf32>
    %124 = vector.extract_strided_slice %67 {offsets = [0, 24], sizes = [8, 8], strides = [1, 1]} : vector<16x32xf32> to vector<8x8xf32>
    %cst_42 = arith.constant dense<0.000000e+00> : vector<8x8xf32>
    %125 = tpu.matmul %122, %123, %cst_42 {dimension_numbers = #tpu.dot_dimension_numbers<[1], [1], [0], [0], [0, 0, 1, 0], [], []>} : vector<8x8xf32>, vector<8x8xf32>, vector<8x8xf32> -> vector<8x8xf32>
    %cst_43 = arith.constant 0.353553385 : f32
    %126 = vector.broadcast %cst_43 : f32 to vector<8x8xf32>
    %127 = arith.mulf %125, %126 : vector<8x8xf32>
    %128 = arith.addf %127, %50 : vector<8x8xf32>
    %cst_44 = arith.constant dense<0xFF800000> : vector<8xf32>
    %129 = vector.multi_reduction <maximumf>, %128, %cst_44 [1] : vector<8x8xf32> to vector<8xf32>
    %130 = vector.shape_cast %129 : vector<8xf32> to vector<8x1xf32>
    %131 = vector.broadcast %130 : vector<8x1xf32> to vector<8x8xf32>
    %132 = arith.subf %128, %131 : vector<8x8xf32>
    %133 = math.exp %132 : vector<8x8xf32>
    %cst_45 = arith.constant dense<0.000000e+00> : vector<8xf32>
    %134 = vector.multi_reduction <add>, %133, %cst_45 [1] : vector<8x8xf32> to vector<8xf32>
    %135 = vector.shape_cast %134 : vector<8xf32> to vector<8x1xf32>
    %136 = tpu.reciprocal %135 {approx = true} : vector<8x1xf32> -> vector<8x1xf32>
    %137 = vector.broadcast %136 : vector<8x1xf32> to vector<8x8xf32>
    %138 = arith.mulf %133, %137 : vector<8x8xf32>
    %cst_46 = arith.constant dense<0.000000e+00> : vector<8x8xf32>
    %139 = tpu.matmul %138, %124, %cst_46 {dimension_numbers = #tpu.dot_dimension_numbers<[1], [0], [0], [1], [0, 0, 1, 1], [], []>} : vector<8x8xf32>, vector<8x8xf32>, vector<8x8xf32> -> vector<8x8xf32>
    %140 = tpu.concatenate %85, %103, %121, %139 in 1 : vector<8x8xf32>, vector<8x8xf32>, vector<8x8xf32>, vector<8x8xf32> -> vector<8x32xf32>
    %141 = vector.extract_strided_slice %65 {offsets = [8, 0], sizes = [8, 8], strides = [1, 1]} : vector<16x32xf32> to vector<8x8xf32>
    %142 = vector.extract_strided_slice %66 {offsets = [8, 0], sizes = [8, 8], strides = [1, 1]} : vector<16x32xf32> to vector<8x8xf32>
    %143 = vector.extract_strided_slice %67 {offsets = [8, 0], sizes = [8, 8], strides = [1, 1]} : vector<16x32xf32> to vector<8x8xf32>
    %cst_47 = arith.constant dense<0.000000e+00> : vector<8x8xf32>
    %144 = tpu.matmul %141, %142, %cst_47 {dimension_numbers = #tpu.dot_dimension_numbers<[1], [1], [0], [0], [0, 0, 1, 0], [], []>} : vector<8x8xf32>, vector<8x8xf32>, vector<8x8xf32> -> vector<8x8xf32>
    %cst_48 = arith.constant 0.353553385 : f32
    %145 = vector.broadcast %cst_48 : f32 to vector<8x8xf32>
    %146 = arith.mulf %144, %145 : vector<8x8xf32>
    %147 = arith.addf %146, %57 : vector<8x8xf32>
    %cst_49 = arith.constant dense<0xFF800000> : vector<8xf32>
    %148 = vector.multi_reduction <maximumf>, %147, %cst_49 [1] : vector<8x8xf32> to vector<8xf32>
    %149 = vector.shape_cast %148 : vector<8xf32> to vector<8x1xf32>
    %150 = vector.broadcast %149 : vector<8x1xf32> to vector<8x8xf32>
    %151 = arith.subf %147, %150 : vector<8x8xf32>
    %152 = math.exp %151 : vector<8x8xf32>
    %cst_50 = arith.constant dense<0.000000e+00> : vector<8xf32>
    %153 = vector.multi_reduction <add>, %152, %cst_50 [1] : vector<8x8xf32> to vector<8xf32>
    %154 = vector.shape_cast %153 : vector<8xf32> to vector<8x1xf32>
    %155 = tpu.reciprocal %154 {approx = true} : vector<8x1xf32> -> vector<8x1xf32>
    %156 = vector.broadcast %155 : vector<8x1xf32> to vector<8x8xf32>
    %157 = arith.mulf %152, %156 : vector<8x8xf32>
    %cst_51 = arith.constant dense<0.000000e+00> : vector<8x8xf32>
    %158 = tpu.matmul %157, %143, %cst_51 {dimension_numbers = #tpu.dot_dimension_numbers<[1], [0], [0], [1], [0, 0, 1, 1], [], []>} : vector<8x8xf32>, vector<8x8xf32>, vector<8x8xf32> -> vector<8x8xf32>
    %159 = vector.extract_strided_slice %65 {offsets = [8, 8], sizes = [8, 8], strides = [1, 1]} : vector<16x32xf32> to vector<8x8xf32>
    %160 = vector.extract_strided_slice %66 {offsets = [8, 8], sizes = [8, 8], strides = [1, 1]} : vector<16x32xf32> to vector<8x8xf32>
    %161 = vector.extract_strided_slice %67 {offsets = [8, 8], sizes = [8, 8], strides = [1, 1]} : vector<16x32xf32> to vector<8x8xf32>
    %cst_52 = arith.constant dense<0.000000e+00> : vector<8x8xf32>
    %162 = tpu.matmul %159, %160, %cst_52 {dimension_numbers = #tpu.dot_dimension_numbers<[1], [1], [0], [0], [0, 0, 1, 0], [], []>} : vector<8x8xf32>, vector<8x8xf32>, vector<8x8xf32> -> vector<8x8xf32>
    %cst_53 = arith.constant 0.353553385 : f32
    %163 = vector.broadcast %cst_53 : f32 to vector<8x8xf32>
    %164 = arith.mulf %162, %163 : vector<8x8xf32>
    %165 = arith.addf %164, %57 : vector<8x8xf32>
    %cst_54 = arith.constant dense<0xFF800000> : vector<8xf32>
    %166 = vector.multi_reduction <maximumf>, %165, %cst_54 [1] : vector<8x8xf32> to vector<8xf32>
    %167 = vector.shape_cast %166 : vector<8xf32> to vector<8x1xf32>
    %168 = vector.broadcast %167 : vector<8x1xf32> to vector<8x8xf32>
    %169 = arith.subf %165, %168 : vector<8x8xf32>
    %170 = math.exp %169 : vector<8x8xf32>
    %cst_55 = arith.constant dense<0.000000e+00> : vector<8xf32>
    %171 = vector.multi_reduction <add>, %170, %cst_55 [1] : vector<8x8xf32> to vector<8xf32>
    %172 = vector.shape_cast %171 : vector<8xf32> to vector<8x1xf32>
    %173 = tpu.reciprocal %172 {approx = true} : vector<8x1xf32> -> vector<8x1xf32>
    %174 = vector.broadcast %173 : vector<8x1xf32> to vector<8x8xf32>
    %175 = arith.mulf %170, %174 : vector<8x8xf32>
    %cst_56 = arith.constant dense<0.000000e+00> : vector<8x8xf32>
    %176 = tpu.matmul %175, %161, %cst_56 {dimension_numbers = #tpu.dot_dimension_numbers<[1], [0], [0], [1], [0, 0, 1, 1], [], []>} : vector<8x8xf32>, vector<8x8xf32>, vector<8x8xf32> -> vector<8x8xf32>
    %177 = vector.extract_strided_slice %65 {offsets = [8, 16], sizes = [8, 8], strides = [1, 1]} : vector<16x32xf32> to vector<8x8xf32>
    %178 = vector.extract_strided_slice %66 {offsets = [8, 16], sizes = [8, 8], strides = [1, 1]} : vector<16x32xf32> to vector<8x8xf32>
    %179 = vector.extract_strided_slice %67 {offsets = [8, 16], sizes = [8, 8], strides = [1, 1]} : vector<16x32xf32> to vector<8x8xf32>
    %cst_57 = arith.constant dense<0.000000e+00> : vector<8x8xf32>
    %180 = tpu.matmul %177, %178, %cst_57 {dimension_numbers = #tpu.dot_dimension_numbers<[1], [1], [0], [0], [0, 0, 1, 0], [], []>} : vector<8x8xf32>, vector<8x8xf32>, vector<8x8xf32> -> vector<8x8xf32>
    %cst_58 = arith.constant 0.353553385 : f32
    %181 = vector.broadcast %cst_58 : f32 to vector<8x8xf32>
    %182 = arith.mulf %180, %181 : vector<8x8xf32>
    %183 = arith.addf %182, %57 : vector<8x8xf32>
    %cst_59 = arith.constant dense<0xFF800000> : vector<8xf32>
    %184 = vector.multi_reduction <maximumf>, %183, %cst_59 [1] : vector<8x8xf32> to vector<8xf32>
    %185 = vector.shape_cast %184 : vector<8xf32> to vector<8x1xf32>
    %186 = vector.broadcast %185 : vector<8x1xf32> to vector<8x8xf32>
    %187 = arith.subf %183, %186 : vector<8x8xf32>
    %188 = math.exp %187 : vector<8x8xf32>
    %cst_60 = arith.constant dense<0.000000e+00> : vector<8xf32>
    %189 = vector.multi_reduction <add>, %188, %cst_60 [1] : vector<8x8xf32> to vector<8xf32>
    %190 = vector.shape_cast %189 : vector<8xf32> to vector<8x1xf32>
    %191 = tpu.reciprocal %190 {approx = true} : vector<8x1xf32> -> vector<8x1xf32>
    %192 = vector.broadcast %191 : vector<8x1xf32> to vector<8x8xf32>
    %193 = arith.mulf %188, %192 : vector<8x8xf32>
    %cst_61 = arith.constant dense<0.000000e+00> : vector<8x8xf32>
    %194 = tpu.matmul %193, %179, %cst_61 {dimension_numbers = #tpu.dot_dimension_numbers<[1], [0], [0], [1], [0, 0, 1, 1], [], []>} : vector<8x8xf32>, vector<8x8xf32>, vector<8x8xf32> -> vector<8x8xf32>
    %195 = vector.extract_strided_slice %65 {offsets = [8, 24], sizes = [8, 8], strides = [1, 1]} : vector<16x32xf32> to vector<8x8xf32>
    %196 = vector.extract_strided_slice %66 {offsets = [8, 24], sizes = [8, 8], strides = [1, 1]} : vector<16x32xf32> to vector<8x8xf32>
    %197 = vector.extract_strided_slice %67 {offsets = [8, 24], sizes = [8, 8], strides = [1, 1]} : vector<16x32xf32> to vector<8x8xf32>
    %cst_62 = arith.constant dense<0.000000e+00> : vector<8x8xf32>
    %198 = tpu.matmul %195, %196, %cst_62 {dimension_numbers = #tpu.dot_dimension_numbers<[1], [1], [0], [0], [0, 0, 1, 0], [], []>} : vector<8x8xf32>, vector<8x8xf32>, vector<8x8xf32> -> vector<8x8xf32>
    %cst_63 = arith.constant 0.353553385 : f32
    %199 = vector.broadcast %cst_63 : f32 to vector<8x8xf32>
    %200 = arith.mulf %198, %199 : vector<8x8xf32>
    %201 = arith.addf %200, %57 : vector<8x8xf32>
    %cst_64 = arith.constant dense<0xFF800000> : vector<8xf32>
    %202 = vector.multi_reduction <maximumf>, %201, %cst_64 [1] : vector<8x8xf32> to vector<8xf32>
    %203 = vector.shape_cast %202 : vector<8xf32> to vector<8x1xf32>
    %204 = vector.broadcast %203 : vector<8x1xf32> to vector<8x8xf32>
    %205 = arith.subf %201, %204 : vector<8x8xf32>
    %206 = math.exp %205 : vector<8x8xf32>
    %cst_65 = arith.constant dense<0.000000e+00> : vector<8xf32>
    %207 = vector.multi_reduction <add>, %206, %cst_65 [1] : vector<8x8xf32> to vector<8xf32>
    %208 = vector.shape_cast %207 : vector<8xf32> to vector<8x1xf32>
    %209 = tpu.reciprocal %208 {approx = true} : vector<8x1xf32> -> vector<8x1xf32>
    %210 = vector.broadcast %209 : vector<8x1xf32> to vector<8x8xf32>
    %211 = arith.mulf %206, %210 : vector<8x8xf32>
    %cst_66 = arith.constant dense<0.000000e+00> : vector<8x8xf32>
    %212 = tpu.matmul %211, %197, %cst_66 {dimension_numbers = #tpu.dot_dimension_numbers<[1], [0], [0], [1], [0, 0, 1, 1], [], []>} : vector<8x8xf32>, vector<8x8xf32>, vector<8x8xf32> -> vector<8x8xf32>
    %213 = tpu.concatenate %158, %176, %194, %212 in 1 : vector<8x8xf32>, vector<8x8xf32>, vector<8x8xf32>, vector<8x8xf32> -> vector<8x32xf32>
    %214 = tpu.concatenate %140, %213 in 0 : vector<8x32xf32>, vector<8x32xf32> -> vector<16x32xf32>
    %c0_67 = arith.constant 0 : index
    %c0_68 = arith.constant 0 : index
    %c0_69 = arith.constant 0 : index
    %215 = vector.load %arg10[%c0_67, %c0_68, %c0_69] : memref<2x32x32xf32, #tpu.memory_space<vmem>>, vector<1x32x32xf32>
    %216 = vector.shape_cast %215 : vector<1x32x32xf32> to vector<32x32xf32>
    %cst_70 = arith.constant dense<0.000000e+00> : vector<16x32xf32>
    %217 = tpu.matmul %214, %216, %cst_70 {dimension_numbers = #tpu.dot_dimension_numbers<[1], [0], [0], [1], [0, 0, 1, 1], [], []>} : vector<16x32xf32>, vector<32x32xf32>, vector<16x32xf32> -> vector<16x32xf32>
    %c0_71 = arith.constant 0 : index
    %c0_72 = arith.constant 0 : index
    %c0_73 = arith.constant 0 : index
    %218 = vector.load %arg11[%c0_71, %c0_72, %c0_73] : memref<2x1x32xf32, #tpu.memory_space<vmem>>, vector<1x1x32xf32>
    %219 = vector.shape_cast %218 : vector<1x1x32xf32> to vector<1x32xf32>
    %220 = vector.broadcast %219 : vector<1x32xf32> to vector<16x32xf32>
    %221 = arith.addf %217, %220 : vector<16x32xf32>
    %222 = arith.addf %33, %221 : vector<16x32xf32>
    %c0_74 = arith.constant 0 : index
    %c0_75 = arith.constant 0 : index
    %c0_76 = arith.constant 0 : index
    %223 = vector.load %arg16[%c0_74, %c0_75, %c0_76] : memref<2x1x32xf32, #tpu.memory_space<vmem>>, vector<1x1x32xf32>
    %224 = vector.shape_cast %223 : vector<1x1x32xf32> to vector<1x32xf32>
    %c0_77 = arith.constant 0 : index
    %c0_78 = arith.constant 0 : index
    %c0_79 = arith.constant 0 : index
    %225 = vector.load %arg17[%c0_77, %c0_78, %c0_79] : memref<2x1x32xf32, #tpu.memory_space<vmem>>, vector<1x1x32xf32>
    %226 = vector.shape_cast %225 : vector<1x1x32xf32> to vector<1x32xf32>
    %cst_80 = arith.constant dense<0.000000e+00> : vector<16xf32>
    %227 = vector.multi_reduction <add>, %222, %cst_80 [1] : vector<16x32xf32> to vector<16xf32>
    %228 = vector.shape_cast %227 : vector<16xf32> to vector<16x1xf32>
    %cst_81 = arith.constant 3.200000e+01 : f32
    %229 = vector.broadcast %cst_81 : f32 to vector<16x1xf32>
    %230 = arith.divf %228, %229 : vector<16x1xf32>
    %231 = vector.broadcast %230 : vector<16x1xf32> to vector<16x32xf32>
    %232 = arith.subf %222, %231 : vector<16x32xf32>
    %233 = arith.mulf %232, %232 : vector<16x32xf32>
    %cst_82 = arith.constant dense<0.000000e+00> : vector<16xf32>
    %234 = vector.multi_reduction <add>, %233, %cst_82 [1] : vector<16x32xf32> to vector<16xf32>
    %235 = vector.shape_cast %234 : vector<16xf32> to vector<16x1xf32>
    %cst_83 = arith.constant 3.200000e+01 : f32
    %236 = vector.broadcast %cst_83 : f32 to vector<16x1xf32>
    %237 = arith.divf %235, %236 : vector<16x1xf32>
    %238 = vector.broadcast %230 : vector<16x1xf32> to vector<16x32xf32>
    %239 = arith.subf %222, %238 : vector<16x32xf32>
    %cst_84 = arith.constant 9.99999974E-6 : f32
    %240 = vector.broadcast %cst_84 : f32 to vector<16x1xf32>
    %241 = arith.addf %237, %240 : vector<16x1xf32>
    %242 = math.rsqrt %241 : vector<16x1xf32>
    %243 = vector.broadcast %242 : vector<16x1xf32> to vector<16x32xf32>
    %244 = arith.mulf %239, %243 : vector<16x32xf32>
    %245 = vector.broadcast %224 : vector<1x32xf32> to vector<16x32xf32>
    %246 = arith.mulf %244, %245 : vector<16x32xf32>
    %247 = vector.broadcast %226 : vector<1x32xf32> to vector<16x32xf32>
    %248 = arith.addf %246, %247 : vector<16x32xf32>
    %c0_85 = arith.constant 0 : index
    %c0_86 = arith.constant 0 : index
    %c0_87 = arith.constant 0 : index
    %249 = vector.load %arg12[%c0_85, %c0_86, %c0_87] : memref<2x32x64xf32, #tpu.memory_space<vmem>>, vector<1x32x64xf32>
    %250 = vector.shape_cast %249 : vector<1x32x64xf32> to vector<32x64xf32>
    %cst_88 = arith.constant dense<0.000000e+00> : vector<16x64xf32>
    %251 = tpu.matmul %248, %250, %cst_88 {dimension_numbers = #tpu.dot_dimension_numbers<[1], [0], [0], [1], [0, 0, 1, 1], [], []>} : vector<16x32xf32>, vector<32x64xf32>, vector<16x64xf32> -> vector<16x64xf32>
    %c0_89 = arith.constant 0 : index
    %c0_90 = arith.constant 0 : index
    %c0_91 = arith.constant 0 : index
    %252 = vector.load %arg13[%c0_89, %c0_90, %c0_91] : memref<2x1x64xf32, #tpu.memory_space<vmem>>, vector<1x1x64xf32>
    %253 = vector.shape_cast %252 : vector<1x1x64xf32> to vector<1x64xf32>
    %254 = vector.broadcast %253 : vector<1x64xf32> to vector<16x64xf32>
    %255 = arith.addf %251, %254 : vector<16x64xf32>
    %cst_92 = arith.constant 5.000000e-01 : f32
    %256 = vector.broadcast %cst_92 : f32 to vector<16x64xf32>
    %257 = arith.mulf %256, %255 : vector<16x64xf32>
    %cst_93 = arith.constant 4.471500e-02 : f32
    %258 = vector.broadcast %cst_93 : f32 to vector<16x64xf32>
    %259 = arith.mulf %258, %255 : vector<16x64xf32>
    %260 = arith.mulf %259, %255 : vector<16x64xf32>
    %261 = arith.mulf %260, %255 : vector<16x64xf32>
    %262 = arith.addf %255, %261 : vector<16x64xf32>
    %cst_94 = arith.constant 0.797884583 : f32
    %263 = vector.broadcast %cst_94 : f32 to vector<16x64xf32>
    %264 = arith.mulf %263, %262 : vector<16x64xf32>
    %265 = math.tanh %264 : vector<16x64xf32>
    %cst_95 = arith.constant 1.000000e+00 : f32
    %266 = vector.broadcast %cst_95 : f32 to vector<16x64xf32>
    %267 = arith.addf %266, %265 : vector<16x64xf32>
    %268 = arith.mulf %257, %267 : vector<16x64xf32>
    %c0_96 = arith.constant 0 : index
    %c0_97 = arith.constant 0 : index
    %c0_98 = arith.constant 0 : index
    %269 = vector.load %arg14[%c0_96, %c0_97, %c0_98] : memref<2x64x32xf32, #tpu.memory_space<vmem>>, vector<1x64x32xf32>
    %270 = vector.shape_cast %269 : vector<1x64x32xf32> to vector<64x32xf32>
    %cst_99 = arith.constant dense<0.000000e+00> : vector<16x32xf32>
    %271 = tpu.matmul %268, %270, %cst_99 {dimension_numbers = #tpu.dot_dimension_numbers<[1], [0], [0], [1], [0, 0, 1, 1], [], []>} : vector<16x64xf32>, vector<64x32xf32>, vector<16x32xf32> -> vector<16x32xf32>
    %c0_100 = arith.constant 0 : index
    %c0_101 = arith.constant 0 : index
    %c0_102 = arith.constant 0 : index
    %272 = vector.load %arg15[%c0_100, %c0_101, %c0_102] : memref<2x1x32xf32, #tpu.memory_space<vmem>>, vector<1x1x32xf32>
    %273 = vector.shape_cast %272 : vector<1x1x32xf32> to vector<1x32xf32>
    %274 = vector.broadcast %273 : vector<1x32xf32> to vector<16x32xf32>
    %275 = arith.addf %271, %274 : vector<16x32xf32>
    %276 = arith.addf %248, %275 : vector<16x32xf32>
    %c0_103 = arith.constant 0 : index
    %c0_104 = arith.constant 0 : index
    %c0_105 = arith.constant 0 : index
    %277 = vector.load %arg18[%c0_103, %c0_104, %c0_105] : memref<2x1x32xf32, #tpu.memory_space<vmem>>, vector<1x1x32xf32>
    %278 = vector.shape_cast %277 : vector<1x1x32xf32> to vector<1x32xf32>
    %c0_106 = arith.constant 0 : index
    %c0_107 = arith.constant 0 : index
    %c0_108 = arith.constant 0 : index
    %279 = vector.load %arg19[%c0_106, %c0_107, %c0_108] : memref<2x1x32xf32, #tpu.memory_space<vmem>>, vector<1x1x32xf32>
    %280 = vector.shape_cast %279 : vector<1x1x32xf32> to vector<1x32xf32>
    %cst_109 = arith.constant dense<0.000000e+00> : vector<16xf32>
    %281 = vector.multi_reduction <add>, %276, %cst_109 [1] : vector<16x32xf32> to vector<16xf32>
    %282 = vector.shape_cast %281 : vector<16xf32> to vector<16x1xf32>
    %cst_110 = arith.constant 3.200000e+01 : f32
    %283 = vector.broadcast %cst_110 : f32 to vector<16x1xf32>
    %284 = arith.divf %282, %283 : vector<16x1xf32>
    %285 = vector.broadcast %284 : vector<16x1xf32> to vector<16x32xf32>
    %286 = arith.subf %276, %285 : vector<16x32xf32>
    %287 = arith.mulf %286, %286 : vector<16x32xf32>
    %cst_111 = arith.constant dense<0.000000e+00> : vector<16xf32>
    %288 = vector.multi_reduction <add>, %287, %cst_111 [1] : vector<16x32xf32> to vector<16xf32>
    %289 = vector.shape_cast %288 : vector<16xf32> to vector<16x1xf32>
    %cst_112 = arith.constant 3.200000e+01 : f32
    %290 = vector.broadcast %cst_112 : f32 to vector<16x1xf32>
    %291 = arith.divf %289, %290 : vector<16x1xf32>
    %292 = vector.broadcast %284 : vector<16x1xf32> to vector<16x32xf32>
    %293 = arith.subf %276, %292 : vector<16x32xf32>
    %cst_113 = arith.constant 9.99999974E-6 : f32
    %294 = vector.broadcast %cst_113 : f32 to vector<16x1xf32>
    %295 = arith.addf %291, %294 : vector<16x1xf32>
    %296 = math.rsqrt %295 : vector<16x1xf32>
    %297 = vector.broadcast %296 : vector<16x1xf32> to vector<16x32xf32>
    %298 = arith.mulf %293, %297 : vector<16x32xf32>
    %299 = vector.broadcast %278 : vector<1x32xf32> to vector<16x32xf32>
    %300 = arith.mulf %298, %299 : vector<16x32xf32>
    %301 = vector.broadcast %280 : vector<1x32xf32> to vector<16x32xf32>
    %302 = arith.addf %300, %301 : vector<16x32xf32>
    %c1 = arith.constant 1 : index
    %c0_114 = arith.constant 0 : index
    %c0_115 = arith.constant 0 : index
    %303 = vector.load %arg8[%c1, %c0_114, %c0_115] : memref<2x32x96xf32, #tpu.memory_space<vmem>>, vector<1x32x96xf32>
    %304 = vector.shape_cast %303 : vector<1x32x96xf32> to vector<32x96xf32>
    %cst_116 = arith.constant dense<0.000000e+00> : vector<16x96xf32>
    %305 = tpu.matmul %302, %304, %cst_116 {dimension_numbers = #tpu.dot_dimension_numbers<[1], [0], [0], [1], [0, 0, 1, 1], [], []>} : vector<16x32xf32>, vector<32x96xf32>, vector<16x96xf32> -> vector<16x96xf32>
    %c1_117 = arith.constant 1 : index
    %c0_118 = arith.constant 0 : index
    %c0_119 = arith.constant 0 : index
    %306 = vector.load %arg9[%c1_117, %c0_118, %c0_119] : memref<2x1x96xf32, #tpu.memory_space<vmem>>, vector<1x1x96xf32>
    %307 = vector.shape_cast %306 : vector<1x1x96xf32> to vector<1x96xf32>
    %308 = vector.broadcast %307 : vector<1x96xf32> to vector<16x96xf32>
    %309 = arith.addf %305, %308 : vector<16x96xf32>
    %310 = vector.extract_strided_slice %309 {offsets = [0, 0], sizes = [16, 32], strides = [1, 1]} : vector<16x96xf32> to vector<16x32xf32>
    %311 = vector.extract_strided_slice %309 {offsets = [0, 32], sizes = [16, 32], strides = [1, 1]} : vector<16x96xf32> to vector<16x32xf32>
    %312 = vector.extract_strided_slice %309 {offsets = [0, 64], sizes = [16, 32], strides = [1, 1]} : vector<16x96xf32> to vector<16x32xf32>
    %313 = vector.extract_strided_slice %310 {offsets = [0, 0], sizes = [8, 8], strides = [1, 1]} : vector<16x32xf32> to vector<8x8xf32>
    %314 = vector.extract_strided_slice %311 {offsets = [0, 0], sizes = [8, 8], strides = [1, 1]} : vector<16x32xf32> to vector<8x8xf32>
    %315 = vector.extract_strided_slice %312 {offsets = [0, 0], sizes = [8, 8], strides = [1, 1]} : vector<16x32xf32> to vector<8x8xf32>
    %cst_120 = arith.constant dense<0.000000e+00> : vector<8x8xf32>
    %316 = tpu.matmul %313, %314, %cst_120 {dimension_numbers = #tpu.dot_dimension_numbers<[1], [1], [0], [0], [0, 0, 1, 0], [], []>} : vector<8x8xf32>, vector<8x8xf32>, vector<8x8xf32> -> vector<8x8xf32>
    %cst_121 = arith.constant 0.353553385 : f32
    %317 = vector.broadcast %cst_121 : f32 to vector<8x8xf32>
    %318 = arith.mulf %316, %317 : vector<8x8xf32>
    %319 = arith.addf %318, %50 : vector<8x8xf32>
    %cst_122 = arith.constant dense<0xFF800000> : vector<8xf32>
    %320 = vector.multi_reduction <maximumf>, %319, %cst_122 [1] : vector<8x8xf32> to vector<8xf32>
    %321 = vector.shape_cast %320 : vector<8xf32> to vector<8x1xf32>
    %322 = vector.broadcast %321 : vector<8x1xf32> to vector<8x8xf32>
    %323 = arith.subf %319, %322 : vector<8x8xf32>
    %324 = math.exp %323 : vector<8x8xf32>
    %cst_123 = arith.constant dense<0.000000e+00> : vector<8xf32>
    %325 = vector.multi_reduction <add>, %324, %cst_123 [1] : vector<8x8xf32> to vector<8xf32>
    %326 = vector.shape_cast %325 : vector<8xf32> to vector<8x1xf32>
    %327 = tpu.reciprocal %326 {approx = true} : vector<8x1xf32> -> vector<8x1xf32>
    %328 = vector.broadcast %327 : vector<8x1xf32> to vector<8x8xf32>
    %329 = arith.mulf %324, %328 : vector<8x8xf32>
    %cst_124 = arith.constant dense<0.000000e+00> : vector<8x8xf32>
    %330 = tpu.matmul %329, %315, %cst_124 {dimension_numbers = #tpu.dot_dimension_numbers<[1], [0], [0], [1], [0, 0, 1, 1], [], []>} : vector<8x8xf32>, vector<8x8xf32>, vector<8x8xf32> -> vector<8x8xf32>
    %331 = vector.extract_strided_slice %310 {offsets = [0, 8], sizes = [8, 8], strides = [1, 1]} : vector<16x32xf32> to vector<8x8xf32>
    %332 = vector.extract_strided_slice %311 {offsets = [0, 8], sizes = [8, 8], strides = [1, 1]} : vector<16x32xf32> to vector<8x8xf32>
    %333 = vector.extract_strided_slice %312 {offsets = [0, 8], sizes = [8, 8], strides = [1, 1]} : vector<16x32xf32> to vector<8x8xf32>
    %cst_125 = arith.constant dense<0.000000e+00> : vector<8x8xf32>
    %334 = tpu.matmul %331, %332, %cst_125 {dimension_numbers = #tpu.dot_dimension_numbers<[1], [1], [0], [0], [0, 0, 1, 0], [], []>} : vector<8x8xf32>, vector<8x8xf32>, vector<8x8xf32> -> vector<8x8xf32>
    %cst_126 = arith.constant 0.353553385 : f32
    %335 = vector.broadcast %cst_126 : f32 to vector<8x8xf32>
    %336 = arith.mulf %334, %335 : vector<8x8xf32>
    %337 = arith.addf %336, %50 : vector<8x8xf32>
    %cst_127 = arith.constant dense<0xFF800000> : vector<8xf32>
    %338 = vector.multi_reduction <maximumf>, %337, %cst_127 [1] : vector<8x8xf32> to vector<8xf32>
    %339 = vector.shape_cast %338 : vector<8xf32> to vector<8x1xf32>
    %340 = vector.broadcast %339 : vector<8x1xf32> to vector<8x8xf32>
    %341 = arith.subf %337, %340 : vector<8x8xf32>
    %342 = math.exp %341 : vector<8x8xf32>
    %cst_128 = arith.constant dense<0.000000e+00> : vector<8xf32>
    %343 = vector.multi_reduction <add>, %342, %cst_128 [1] : vector<8x8xf32> to vector<8xf32>
    %344 = vector.shape_cast %343 : vector<8xf32> to vector<8x1xf32>
    %345 = tpu.reciprocal %344 {approx = true} : vector<8x1xf32> -> vector<8x1xf32>
    %346 = vector.broadcast %345 : vector<8x1xf32> to vector<8x8xf32>
    %347 = arith.mulf %342, %346 : vector<8x8xf32>
    %cst_129 = arith.constant dense<0.000000e+00> : vector<8x8xf32>
    %348 = tpu.matmul %347, %333, %cst_129 {dimension_numbers = #tpu.dot_dimension_numbers<[1], [0], [0], [1], [0, 0, 1, 1], [], []>} : vector<8x8xf32>, vector<8x8xf32>, vector<8x8xf32> -> vector<8x8xf32>
    %349 = vector.extract_strided_slice %310 {offsets = [0, 16], sizes = [8, 8], strides = [1, 1]} : vector<16x32xf32> to vector<8x8xf32>
    %350 = vector.extract_strided_slice %311 {offsets = [0, 16], sizes = [8, 8], strides = [1, 1]} : vector<16x32xf32> to vector<8x8xf32>
    %351 = vector.extract_strided_slice %312 {offsets = [0, 16], sizes = [8, 8], strides = [1, 1]} : vector<16x32xf32> to vector<8x8xf32>
    %cst_130 = arith.constant dense<0.000000e+00> : vector<8x8xf32>
    %352 = tpu.matmul %349, %350, %cst_130 {dimension_numbers = #tpu.dot_dimension_numbers<[1], [1], [0], [0], [0, 0, 1, 0], [], []>} : vector<8x8xf32>, vector<8x8xf32>, vector<8x8xf32> -> vector<8x8xf32>
    %cst_131 = arith.constant 0.353553385 : f32
    %353 = vector.broadcast %cst_131 : f32 to vector<8x8xf32>
    %354 = arith.mulf %352, %353 : vector<8x8xf32>
    %355 = arith.addf %354, %50 : vector<8x8xf32>
    %cst_132 = arith.constant dense<0xFF800000> : vector<8xf32>
    %356 = vector.multi_reduction <maximumf>, %355, %cst_132 [1] : vector<8x8xf32> to vector<8xf32>
    %357 = vector.shape_cast %356 : vector<8xf32> to vector<8x1xf32>
    %358 = vector.broadcast %357 : vector<8x1xf32> to vector<8x8xf32>
    %359 = arith.subf %355, %358 : vector<8x8xf32>
    %360 = math.exp %359 : vector<8x8xf32>
    %cst_133 = arith.constant dense<0.000000e+00> : vector<8xf32>
    %361 = vector.multi_reduction <add>, %360, %cst_133 [1] : vector<8x8xf32> to vector<8xf32>
    %362 = vector.shape_cast %361 : vector<8xf32> to vector<8x1xf32>
    %363 = tpu.reciprocal %362 {approx = true} : vector<8x1xf32> -> vector<8x1xf32>
    %364 = vector.broadcast %363 : vector<8x1xf32> to vector<8x8xf32>
    %365 = arith.mulf %360, %364 : vector<8x8xf32>
    %cst_134 = arith.constant dense<0.000000e+00> : vector<8x8xf32>
    %366 = tpu.matmul %365, %351, %cst_134 {dimension_numbers = #tpu.dot_dimension_numbers<[1], [0], [0], [1], [0, 0, 1, 1], [], []>} : vector<8x8xf32>, vector<8x8xf32>, vector<8x8xf32> -> vector<8x8xf32>
    %367 = vector.extract_strided_slice %310 {offsets = [0, 24], sizes = [8, 8], strides = [1, 1]} : vector<16x32xf32> to vector<8x8xf32>
    %368 = vector.extract_strided_slice %311 {offsets = [0, 24], sizes = [8, 8], strides = [1, 1]} : vector<16x32xf32> to vector<8x8xf32>
    %369 = vector.extract_strided_slice %312 {offsets = [0, 24], sizes = [8, 8], strides = [1, 1]} : vector<16x32xf32> to vector<8x8xf32>
    %cst_135 = arith.constant dense<0.000000e+00> : vector<8x8xf32>
    %370 = tpu.matmul %367, %368, %cst_135 {dimension_numbers = #tpu.dot_dimension_numbers<[1], [1], [0], [0], [0, 0, 1, 0], [], []>} : vector<8x8xf32>, vector<8x8xf32>, vector<8x8xf32> -> vector<8x8xf32>
    %cst_136 = arith.constant 0.353553385 : f32
    %371 = vector.broadcast %cst_136 : f32 to vector<8x8xf32>
    %372 = arith.mulf %370, %371 : vector<8x8xf32>
    %373 = arith.addf %372, %50 : vector<8x8xf32>
    %cst_137 = arith.constant dense<0xFF800000> : vector<8xf32>
    %374 = vector.multi_reduction <maximumf>, %373, %cst_137 [1] : vector<8x8xf32> to vector<8xf32>
    %375 = vector.shape_cast %374 : vector<8xf32> to vector<8x1xf32>
    %376 = vector.broadcast %375 : vector<8x1xf32> to vector<8x8xf32>
    %377 = arith.subf %373, %376 : vector<8x8xf32>
    %378 = math.exp %377 : vector<8x8xf32>
    %cst_138 = arith.constant dense<0.000000e+00> : vector<8xf32>
    %379 = vector.multi_reduction <add>, %378, %cst_138 [1] : vector<8x8xf32> to vector<8xf32>
    %380 = vector.shape_cast %379 : vector<8xf32> to vector<8x1xf32>
    %381 = tpu.reciprocal %380 {approx = true} : vector<8x1xf32> -> vector<8x1xf32>
    %382 = vector.broadcast %381 : vector<8x1xf32> to vector<8x8xf32>
    %383 = arith.mulf %378, %382 : vector<8x8xf32>
    %cst_139 = arith.constant dense<0.000000e+00> : vector<8x8xf32>
    %384 = tpu.matmul %383, %369, %cst_139 {dimension_numbers = #tpu.dot_dimension_numbers<[1], [0], [0], [1], [0, 0, 1, 1], [], []>} : vector<8x8xf32>, vector<8x8xf32>, vector<8x8xf32> -> vector<8x8xf32>
    %385 = tpu.concatenate %330, %348, %366, %384 in 1 : vector<8x8xf32>, vector<8x8xf32>, vector<8x8xf32>, vector<8x8xf32> -> vector<8x32xf32>
    %386 = vector.extract_strided_slice %310 {offsets = [8, 0], sizes = [8, 8], strides = [1, 1]} : vector<16x32xf32> to vector<8x8xf32>
    %387 = vector.extract_strided_slice %311 {offsets = [8, 0], sizes = [8, 8], strides = [1, 1]} : vector<16x32xf32> to vector<8x8xf32>
    %388 = vector.extract_strided_slice %312 {offsets = [8, 0], sizes = [8, 8], strides = [1, 1]} : vector<16x32xf32> to vector<8x8xf32>
    %cst_140 = arith.constant dense<0.000000e+00> : vector<8x8xf32>
    %389 = tpu.matmul %386, %387, %cst_140 {dimension_numbers = #tpu.dot_dimension_numbers<[1], [1], [0], [0], [0, 0, 1, 0], [], []>} : vector<8x8xf32>, vector<8x8xf32>, vector<8x8xf32> -> vector<8x8xf32>
    %cst_141 = arith.constant 0.353553385 : f32
    %390 = vector.broadcast %cst_141 : f32 to vector<8x8xf32>
    %391 = arith.mulf %389, %390 : vector<8x8xf32>
    %392 = arith.addf %391, %57 : vector<8x8xf32>
    %cst_142 = arith.constant dense<0xFF800000> : vector<8xf32>
    %393 = vector.multi_reduction <maximumf>, %392, %cst_142 [1] : vector<8x8xf32> to vector<8xf32>
    %394 = vector.shape_cast %393 : vector<8xf32> to vector<8x1xf32>
    %395 = vector.broadcast %394 : vector<8x1xf32> to vector<8x8xf32>
    %396 = arith.subf %392, %395 : vector<8x8xf32>
    %397 = math.exp %396 : vector<8x8xf32>
    %cst_143 = arith.constant dense<0.000000e+00> : vector<8xf32>
    %398 = vector.multi_reduction <add>, %397, %cst_143 [1] : vector<8x8xf32> to vector<8xf32>
    %399 = vector.shape_cast %398 : vector<8xf32> to vector<8x1xf32>
    %400 = tpu.reciprocal %399 {approx = true} : vector<8x1xf32> -> vector<8x1xf32>
    %401 = vector.broadcast %400 : vector<8x1xf32> to vector<8x8xf32>
    %402 = arith.mulf %397, %401 : vector<8x8xf32>
    %cst_144 = arith.constant dense<0.000000e+00> : vector<8x8xf32>
    %403 = tpu.matmul %402, %388, %cst_144 {dimension_numbers = #tpu.dot_dimension_numbers<[1], [0], [0], [1], [0, 0, 1, 1], [], []>} : vector<8x8xf32>, vector<8x8xf32>, vector<8x8xf32> -> vector<8x8xf32>
    %404 = vector.extract_strided_slice %310 {offsets = [8, 8], sizes = [8, 8], strides = [1, 1]} : vector<16x32xf32> to vector<8x8xf32>
    %405 = vector.extract_strided_slice %311 {offsets = [8, 8], sizes = [8, 8], strides = [1, 1]} : vector<16x32xf32> to vector<8x8xf32>
    %406 = vector.extract_strided_slice %312 {offsets = [8, 8], sizes = [8, 8], strides = [1, 1]} : vector<16x32xf32> to vector<8x8xf32>
    %cst_145 = arith.constant dense<0.000000e+00> : vector<8x8xf32>
    %407 = tpu.matmul %404, %405, %cst_145 {dimension_numbers = #tpu.dot_dimension_numbers<[1], [1], [0], [0], [0, 0, 1, 0], [], []>} : vector<8x8xf32>, vector<8x8xf32>, vector<8x8xf32> -> vector<8x8xf32>
    %cst_146 = arith.constant 0.353553385 : f32
    %408 = vector.broadcast %cst_146 : f32 to vector<8x8xf32>
    %409 = arith.mulf %407, %408 : vector<8x8xf32>
    %410 = arith.addf %409, %57 : vector<8x8xf32>
    %cst_147 = arith.constant dense<0xFF800000> : vector<8xf32>
    %411 = vector.multi_reduction <maximumf>, %410, %cst_147 [1] : vector<8x8xf32> to vector<8xf32>
    %412 = vector.shape_cast %411 : vector<8xf32> to vector<8x1xf32>
    %413 = vector.broadcast %412 : vector<8x1xf32> to vector<8x8xf32>
    %414 = arith.subf %410, %413 : vector<8x8xf32>
    %415 = math.exp %414 : vector<8x8xf32>
    %cst_148 = arith.constant dense<0.000000e+00> : vector<8xf32>
    %416 = vector.multi_reduction <add>, %415, %cst_148 [1] : vector<8x8xf32> to vector<8xf32>
    %417 = vector.shape_cast %416 : vector<8xf32> to vector<8x1xf32>
    %418 = tpu.reciprocal %417 {approx = true} : vector<8x1xf32> -> vector<8x1xf32>
    %419 = vector.broadcast %418 : vector<8x1xf32> to vector<8x8xf32>
    %420 = arith.mulf %415, %419 : vector<8x8xf32>
    %cst_149 = arith.constant dense<0.000000e+00> : vector<8x8xf32>
    %421 = tpu.matmul %420, %406, %cst_149 {dimension_numbers = #tpu.dot_dimension_numbers<[1], [0], [0], [1], [0, 0, 1, 1], [], []>} : vector<8x8xf32>, vector<8x8xf32>, vector<8x8xf32> -> vector<8x8xf32>
    %422 = vector.extract_strided_slice %310 {offsets = [8, 16], sizes = [8, 8], strides = [1, 1]} : vector<16x32xf32> to vector<8x8xf32>
    %423 = vector.extract_strided_slice %311 {offsets = [8, 16], sizes = [8, 8], strides = [1, 1]} : vector<16x32xf32> to vector<8x8xf32>
    %424 = vector.extract_strided_slice %312 {offsets = [8, 16], sizes = [8, 8], strides = [1, 1]} : vector<16x32xf32> to vector<8x8xf32>
    %cst_150 = arith.constant dense<0.000000e+00> : vector<8x8xf32>
    %425 = tpu.matmul %422, %423, %cst_150 {dimension_numbers = #tpu.dot_dimension_numbers<[1], [1], [0], [0], [0, 0, 1, 0], [], []>} : vector<8x8xf32>, vector<8x8xf32>, vector<8x8xf32> -> vector<8x8xf32>
    %cst_151 = arith.constant 0.353553385 : f32
    %426 = vector.broadcast %cst_151 : f32 to vector<8x8xf32>
    %427 = arith.mulf %425, %426 : vector<8x8xf32>
    %428 = arith.addf %427, %57 : vector<8x8xf32>
    %cst_152 = arith.constant dense<0xFF800000> : vector<8xf32>
    %429 = vector.multi_reduction <maximumf>, %428, %cst_152 [1] : vector<8x8xf32> to vector<8xf32>
    %430 = vector.shape_cast %429 : vector<8xf32> to vector<8x1xf32>
    %431 = vector.broadcast %430 : vector<8x1xf32> to vector<8x8xf32>
    %432 = arith.subf %428, %431 : vector<8x8xf32>
    %433 = math.exp %432 : vector<8x8xf32>
    %cst_153 = arith.constant dense<0.000000e+00> : vector<8xf32>
    %434 = vector.multi_reduction <add>, %433, %cst_153 [1] : vector<8x8xf32> to vector<8xf32>
    %435 = vector.shape_cast %434 : vector<8xf32> to vector<8x1xf32>
    %436 = tpu.reciprocal %435 {approx = true} : vector<8x1xf32> -> vector<8x1xf32>
    %437 = vector.broadcast %436 : vector<8x1xf32> to vector<8x8xf32>
    %438 = arith.mulf %433, %437 : vector<8x8xf32>
    %cst_154 = arith.constant dense<0.000000e+00> : vector<8x8xf32>
    %439 = tpu.matmul %438, %424, %cst_154 {dimension_numbers = #tpu.dot_dimension_numbers<[1], [0], [0], [1], [0, 0, 1, 1], [], []>} : vector<8x8xf32>, vector<8x8xf32>, vector<8x8xf32> -> vector<8x8xf32>
    %440 = vector.extract_strided_slice %310 {offsets = [8, 24], sizes = [8, 8], strides = [1, 1]} : vector<16x32xf32> to vector<8x8xf32>
    %441 = vector.extract_strided_slice %311 {offsets = [8, 24], sizes = [8, 8], strides = [1, 1]} : vector<16x32xf32> to vector<8x8xf32>
    %442 = vector.extract_strided_slice %312 {offsets = [8, 24], sizes = [8, 8], strides = [1, 1]} : vector<16x32xf32> to vector<8x8xf32>
    %cst_155 = arith.constant dense<0.000000e+00> : vector<8x8xf32>
    %443 = tpu.matmul %440, %441, %cst_155 {dimension_numbers = #tpu.dot_dimension_numbers<[1], [1], [0], [0], [0, 0, 1, 0], [], []>} : vector<8x8xf32>, vector<8x8xf32>, vector<8x8xf32> -> vector<8x8xf32>
    %cst_156 = arith.constant 0.353553385 : f32
    %444 = vector.broadcast %cst_156 : f32 to vector<8x8xf32>
    %445 = arith.mulf %443, %444 : vector<8x8xf32>
    %446 = arith.addf %445, %57 : vector<8x8xf32>
    %cst_157 = arith.constant dense<0xFF800000> : vector<8xf32>
    %447 = vector.multi_reduction <maximumf>, %446, %cst_157 [1] : vector<8x8xf32> to vector<8xf32>
    %448 = vector.shape_cast %447 : vector<8xf32> to vector<8x1xf32>
    %449 = vector.broadcast %448 : vector<8x1xf32> to vector<8x8xf32>
    %450 = arith.subf %446, %449 : vector<8x8xf32>
    %451 = math.exp %450 : vector<8x8xf32>
    %cst_158 = arith.constant dense<0.000000e+00> : vector<8xf32>
    %452 = vector.multi_reduction <add>, %451, %cst_158 [1] : vector<8x8xf32> to vector<8xf32>
    %453 = vector.shape_cast %452 : vector<8xf32> to vector<8x1xf32>
    %454 = tpu.reciprocal %453 {approx = true} : vector<8x1xf32> -> vector<8x1xf32>
    %455 = vector.broadcast %454 : vector<8x1xf32> to vector<8x8xf32>
    %456 = arith.mulf %451, %455 : vector<8x8xf32>
    %cst_159 = arith.constant dense<0.000000e+00> : vector<8x8xf32>
    %457 = tpu.matmul %456, %442, %cst_159 {dimension_numbers = #tpu.dot_dimension_numbers<[1], [0], [0], [1], [0, 0, 1, 1], [], []>} : vector<8x8xf32>, vector<8x8xf32>, vector<8x8xf32> -> vector<8x8xf32>
    %458 = tpu.concatenate %403, %421, %439, %457 in 1 : vector<8x8xf32>, vector<8x8xf32>, vector<8x8xf32>, vector<8x8xf32> -> vector<8x32xf32>
    %459 = tpu.concatenate %385, %458 in 0 : vector<8x32xf32>, vector<8x32xf32> -> vector<16x32xf32>
    %c1_160 = arith.constant 1 : index
    %c0_161 = arith.constant 0 : index
    %c0_162 = arith.constant 0 : index
    %460 = vector.load %arg10[%c1_160, %c0_161, %c0_162] : memref<2x32x32xf32, #tpu.memory_space<vmem>>, vector<1x32x32xf32>
    %461 = vector.shape_cast %460 : vector<1x32x32xf32> to vector<32x32xf32>
    %cst_163 = arith.constant dense<0.000000e+00> : vector<16x32xf32>
    %462 = tpu.matmul %459, %461, %cst_163 {dimension_numbers = #tpu.dot_dimension_numbers<[1], [0], [0], [1], [0, 0, 1, 1], [], []>} : vector<16x32xf32>, vector<32x32xf32>, vector<16x32xf32> -> vector<16x32xf32>
    %c1_164 = arith.constant 1 : index
    %c0_165 = arith.constant 0 : index
    %c0_166 = arith.constant 0 : index
    %463 = vector.load %arg11[%c1_164, %c0_165, %c0_166] : memref<2x1x32xf32, #tpu.memory_space<vmem>>, vector<1x1x32xf32>
    %464 = vector.shape_cast %463 : vector<1x1x32xf32> to vector<1x32xf32>
    %465 = vector.broadcast %464 : vector<1x32xf32> to vector<16x32xf32>
    %466 = arith.addf %462, %465 : vector<16x32xf32>
    %467 = arith.addf %302, %466 : vector<16x32xf32>
    %c1_167 = arith.constant 1 : index
    %c0_168 = arith.constant 0 : index
    %c0_169 = arith.constant 0 : index
    %468 = vector.load %arg16[%c1_167, %c0_168, %c0_169] : memref<2x1x32xf32, #tpu.memory_space<vmem>>, vector<1x1x32xf32>
    %469 = vector.shape_cast %468 : vector<1x1x32xf32> to vector<1x32xf32>
    %c1_170 = arith.constant 1 : index
    %c0_171 = arith.constant 0 : index
    %c0_172 = arith.constant 0 : index
    %470 = vector.load %arg17[%c1_170, %c0_171, %c0_172] : memref<2x1x32xf32, #tpu.memory_space<vmem>>, vector<1x1x32xf32>
    %471 = vector.shape_cast %470 : vector<1x1x32xf32> to vector<1x32xf32>
    %cst_173 = arith.constant dense<0.000000e+00> : vector<16xf32>
    %472 = vector.multi_reduction <add>, %467, %cst_173 [1] : vector<16x32xf32> to vector<16xf32>
    %473 = vector.shape_cast %472 : vector<16xf32> to vector<16x1xf32>
    %cst_174 = arith.constant 3.200000e+01 : f32
    %474 = vector.broadcast %cst_174 : f32 to vector<16x1xf32>
    %475 = arith.divf %473, %474 : vector<16x1xf32>
    %476 = vector.broadcast %475 : vector<16x1xf32> to vector<16x32xf32>
    %477 = arith.subf %467, %476 : vector<16x32xf32>
    %478 = arith.mulf %477, %477 : vector<16x32xf32>
    %cst_175 = arith.constant dense<0.000000e+00> : vector<16xf32>
    %479 = vector.multi_reduction <add>, %478, %cst_175 [1] : vector<16x32xf32> to vector<16xf32>
    %480 = vector.shape_cast %479 : vector<16xf32> to vector<16x1xf32>
    %cst_176 = arith.constant 3.200000e+01 : f32
    %481 = vector.broadcast %cst_176 : f32 to vector<16x1xf32>
    %482 = arith.divf %480, %481 : vector<16x1xf32>
    %483 = vector.broadcast %475 : vector<16x1xf32> to vector<16x32xf32>
    %484 = arith.subf %467, %483 : vector<16x32xf32>
    %cst_177 = arith.constant 9.99999974E-6 : f32
    %485 = vector.broadcast %cst_177 : f32 to vector<16x1xf32>
    %486 = arith.addf %482, %485 : vector<16x1xf32>
    %487 = math.rsqrt %486 : vector<16x1xf32>
    %488 = vector.broadcast %487 : vector<16x1xf32> to vector<16x32xf32>
    %489 = arith.mulf %484, %488 : vector<16x32xf32>
    %490 = vector.broadcast %469 : vector<1x32xf32> to vector<16x32xf32>
    %491 = arith.mulf %489, %490 : vector<16x32xf32>
    %492 = vector.broadcast %471 : vector<1x32xf32> to vector<16x32xf32>
    %493 = arith.addf %491, %492 : vector<16x32xf32>
    %c1_178 = arith.constant 1 : index
    %c0_179 = arith.constant 0 : index
    %c0_180 = arith.constant 0 : index
    %494 = vector.load %arg12[%c1_178, %c0_179, %c0_180] : memref<2x32x64xf32, #tpu.memory_space<vmem>>, vector<1x32x64xf32>
    %495 = vector.shape_cast %494 : vector<1x32x64xf32> to vector<32x64xf32>
    %cst_181 = arith.constant dense<0.000000e+00> : vector<16x64xf32>
    %496 = tpu.matmul %493, %495, %cst_181 {dimension_numbers = #tpu.dot_dimension_numbers<[1], [0], [0], [1], [0, 0, 1, 1], [], []>} : vector<16x32xf32>, vector<32x64xf32>, vector<16x64xf32> -> vector<16x64xf32>
    %c1_182 = arith.constant 1 : index
    %c0_183 = arith.constant 0 : index
    %c0_184 = arith.constant 0 : index
    %497 = vector.load %arg13[%c1_182, %c0_183, %c0_184] : memref<2x1x64xf32, #tpu.memory_space<vmem>>, vector<1x1x64xf32>
    %498 = vector.shape_cast %497 : vector<1x1x64xf32> to vector<1x64xf32>
    %499 = vector.broadcast %498 : vector<1x64xf32> to vector<16x64xf32>
    %500 = arith.addf %496, %499 : vector<16x64xf32>
    %cst_185 = arith.constant 5.000000e-01 : f32
    %501 = vector.broadcast %cst_185 : f32 to vector<16x64xf32>
    %502 = arith.mulf %501, %500 : vector<16x64xf32>
    %cst_186 = arith.constant 4.471500e-02 : f32
    %503 = vector.broadcast %cst_186 : f32 to vector<16x64xf32>
    %504 = arith.mulf %503, %500 : vector<16x64xf32>
    %505 = arith.mulf %504, %500 : vector<16x64xf32>
    %506 = arith.mulf %505, %500 : vector<16x64xf32>
    %507 = arith.addf %500, %506 : vector<16x64xf32>
    %cst_187 = arith.constant 0.797884583 : f32
    %508 = vector.broadcast %cst_187 : f32 to vector<16x64xf32>
    %509 = arith.mulf %508, %507 : vector<16x64xf32>
    %510 = math.tanh %509 : vector<16x64xf32>
    %cst_188 = arith.constant 1.000000e+00 : f32
    %511 = vector.broadcast %cst_188 : f32 to vector<16x64xf32>
    %512 = arith.addf %511, %510 : vector<16x64xf32>
    %513 = arith.mulf %502, %512 : vector<16x64xf32>
    %c1_189 = arith.constant 1 : index
    %c0_190 = arith.constant 0 : index
    %c0_191 = arith.constant 0 : index
    %514 = vector.load %arg14[%c1_189, %c0_190, %c0_191] : memref<2x64x32xf32, #tpu.memory_space<vmem>>, vector<1x64x32xf32>
    %515 = vector.shape_cast %514 : vector<1x64x32xf32> to vector<64x32xf32>
    %cst_192 = arith.constant dense<0.000000e+00> : vector<16x32xf32>
    %516 = tpu.matmul %513, %515, %cst_192 {dimension_numbers = #tpu.dot_dimension_numbers<[1], [0], [0], [1], [0, 0, 1, 1], [], []>} : vector<16x64xf32>, vector<64x32xf32>, vector<16x32xf32> -> vector<16x32xf32>
    %c1_193 = arith.constant 1 : index
    %c0_194 = arith.constant 0 : index
    %c0_195 = arith.constant 0 : index
    %517 = vector.load %arg15[%c1_193, %c0_194, %c0_195] : memref<2x1x32xf32, #tpu.memory_space<vmem>>, vector<1x1x32xf32>
    %518 = vector.shape_cast %517 : vector<1x1x32xf32> to vector<1x32xf32>
    %519 = vector.broadcast %518 : vector<1x32xf32> to vector<16x32xf32>
    %520 = arith.addf %516, %519 : vector<16x32xf32>
    %521 = arith.addf %493, %520 : vector<16x32xf32>
    %c1_196 = arith.constant 1 : index
    %c0_197 = arith.constant 0 : index
    %c0_198 = arith.constant 0 : index
    %522 = vector.load %arg18[%c1_196, %c0_197, %c0_198] : memref<2x1x32xf32, #tpu.memory_space<vmem>>, vector<1x1x32xf32>
    %523 = vector.shape_cast %522 : vector<1x1x32xf32> to vector<1x32xf32>
    %c1_199 = arith.constant 1 : index
    %c0_200 = arith.constant 0 : index
    %c0_201 = arith.constant 0 : index
    %524 = vector.load %arg19[%c1_199, %c0_200, %c0_201] : memref<2x1x32xf32, #tpu.memory_space<vmem>>, vector<1x1x32xf32>
    %525 = vector.shape_cast %524 : vector<1x1x32xf32> to vector<1x32xf32>
    %cst_202 = arith.constant dense<0.000000e+00> : vector<16xf32>
    %526 = vector.multi_reduction <add>, %521, %cst_202 [1] : vector<16x32xf32> to vector<16xf32>
    %527 = vector.shape_cast %526 : vector<16xf32> to vector<16x1xf32>
    %cst_203 = arith.constant 3.200000e+01 : f32
    %528 = vector.broadcast %cst_203 : f32 to vector<16x1xf32>
    %529 = arith.divf %527, %528 : vector<16x1xf32>
    %530 = vector.broadcast %529 : vector<16x1xf32> to vector<16x32xf32>
    %531 = arith.subf %521, %530 : vector<16x32xf32>
    %532 = arith.mulf %531, %531 : vector<16x32xf32>
    %cst_204 = arith.constant dense<0.000000e+00> : vector<16xf32>
    %533 = vector.multi_reduction <add>, %532, %cst_204 [1] : vector<16x32xf32> to vector<16xf32>
    %534 = vector.shape_cast %533 : vector<16xf32> to vector<16x1xf32>
    %cst_205 = arith.constant 3.200000e+01 : f32
    %535 = vector.broadcast %cst_205 : f32 to vector<16x1xf32>
    %536 = arith.divf %534, %535 : vector<16x1xf32>
    %537 = vector.broadcast %529 : vector<16x1xf32> to vector<16x32xf32>
    %538 = arith.subf %521, %537 : vector<16x32xf32>
    %cst_206 = arith.constant 9.99999974E-6 : f32
    %539 = vector.broadcast %cst_206 : f32 to vector<16x1xf32>
    %540 = arith.addf %536, %539 : vector<16x1xf32>
    %541 = math.rsqrt %540 : vector<16x1xf32>
    %542 = vector.broadcast %541 : vector<16x1xf32> to vector<16x32xf32>
    %543 = arith.mulf %538, %542 : vector<16x32xf32>
    %544 = vector.broadcast %523 : vector<1x32xf32> to vector<16x32xf32>
    %545 = arith.mulf %543, %544 : vector<16x32xf32>
    %546 = vector.broadcast %525 : vector<1x32xf32> to vector<16x32xf32>
    %547 = arith.addf %545, %546 : vector<16x32xf32>
    %c0_207 = arith.constant 0 : index
    %c0_208 = arith.constant 0 : index
    %548 = vector.load %arg6[%c0_207, %c0_208] : memref<1x32xf32, #tpu.memory_space<vmem>>, vector<1x32xf32>
    %c0_209 = arith.constant 0 : index
    %c0_210 = arith.constant 0 : index
    %549 = vector.load %arg7[%c0_209, %c0_210] : memref<1x32xf32, #tpu.memory_space<vmem>>, vector<1x32xf32>
    %cst_211 = arith.constant dense<0.000000e+00> : vector<16xf32>
    %550 = vector.multi_reduction <add>, %547, %cst_211 [1] : vector<16x32xf32> to vector<16xf32>
    %551 = vector.shape_cast %550 : vector<16xf32> to vector<16x1xf32>
    %cst_212 = arith.constant 3.200000e+01 : f32
    %552 = vector.broadcast %cst_212 : f32 to vector<16x1xf32>
    %553 = arith.divf %551, %552 : vector<16x1xf32>
    %554 = vector.broadcast %553 : vector<16x1xf32> to vector<16x32xf32>
    %555 = arith.subf %547, %554 : vector<16x32xf32>
    %556 = arith.mulf %555, %555 : vector<16x32xf32>
    %cst_213 = arith.constant dense<0.000000e+00> : vector<16xf32>
    %557 = vector.multi_reduction <add>, %556, %cst_213 [1] : vector<16x32xf32> to vector<16xf32>
    %558 = vector.shape_cast %557 : vector<16xf32> to vector<16x1xf32>
    %cst_214 = arith.constant 3.200000e+01 : f32
    %559 = vector.broadcast %cst_214 : f32 to vector<16x1xf32>
    %560 = arith.divf %558, %559 : vector<16x1xf32>
    %561 = vector.broadcast %553 : vector<16x1xf32> to vector<16x32xf32>
    %562 = arith.subf %547, %561 : vector<16x32xf32>
    %cst_215 = arith.constant 9.99999974E-6 : f32
    %563 = vector.broadcast %cst_215 : f32 to vector<16x1xf32>
    %564 = arith.addf %560, %563 : vector<16x1xf32>
    %565 = math.rsqrt %564 : vector<16x1xf32>
    %566 = vector.broadcast %565 : vector<16x1xf32> to vector<16x32xf32>
    %567 = arith.mulf %562, %566 : vector<16x32xf32>
    %568 = vector.broadcast %548 : vector<1x32xf32> to vector<16x32xf32>
    %569 = arith.mulf %567, %568 : vector<16x32xf32>
    %570 = vector.broadcast %549 : vector<1x32xf32> to vector<16x32xf32>
    %571 = arith.addf %569, %570 : vector<16x32xf32>
    %c0_216 = arith.constant 0 : index
    %c0_217 = arith.constant 0 : index
    %572 = vector.load %arg20[%c0_216, %c0_217] : memref<16x32xf32, #tpu.memory_space<vmem>>, vector<16x32xf32>
    tpu.vector_store %arg20[%c0_216, %c0_217], %571 {strides = array<i32>} : memref<16x32xf32, #tpu.memory_space<vmem>>, vector<16x32xf32>,
    %cst_218 = arith.constant dense<0.000000e+00> : vector<16x64xf32>
    %573 = tpu.matmul %571, %6, %cst_218 {dimension_numbers = #tpu.dot_dimension_numbers<[1], [1], [0], [0], [0, 0, 1, 0], [], []>} : vector<16x32xf32>, vector<64x32xf32>, vector<16x64xf32> -> vector<16x64xf32>
    %c0_219 = arith.constant 0 : index
    %c0_220 = arith.constant 0 : index
    %574 = vector.load %arg21[%c0_219, %c0_220] : memref<16x64xf32, #tpu.memory_space<vmem>>, vector<16x64xf32>
    tpu.vector_store %arg21[%c0_219, %c0_220], %573 {strides = array<i32>} : memref<16x64xf32, #tpu.memory_space<vmem>>, vector<16x64xf32>,
    return
  }
}

</mosaic_0001>

<llo_original>
// kernel: transformer_forward.1
$region0: #{transformer_forward.1}
  #allocation0 [shape = 'u32[]', space=smem, size = 0x4, offset = 0x4, fixed_abs, tag = 'smem constant byte address 0x4 - core index']
  #allocation1 [shape = 'u32[72,128]{1,0:T(1,128)}', space=vmem, size = 0x9000, scoped, tag = 'internal scratch']
  %s0 = inlined_call_operand.vmem [shape: s32[16,1], index: 0, kind: input, shape index: {}]
  %s1 = inlined_call_operand.vmem [shape: s32[2,8], index: 1, kind: input, shape index: {}]
  %s2 = inlined_call_operand.vmem [shape: f32[64,32], index: 2, kind: input, shape index: {}]
  %s3 = inlined_call_operand.vmem [shape: f32[16,32], index: 3, kind: input, shape index: {}]
  %s4 = inlined_call_operand.vmem [shape: f32[1,32], index: 4, kind: input, shape index: {}]
  %s5 = inlined_call_operand.vmem [shape: f32[1,32], index: 5, kind: input, shape index: {}]
  %s6 = inlined_call_operand.vmem [shape: f32[1,32], index: 6, kind: input, shape index: {}]
  %s7 = inlined_call_operand.vmem [shape: f32[1,32], index: 7, kind: input, shape index: {}]
  %s8 = inlined_call_operand.vmem [shape: f32[2,32,96], index: 8, kind: input, shape index: {}]
  %s9 = inlined_call_operand.vmem [shape: f32[2,1,96], index: 9, kind: input, shape index: {}]
  %s10 = inlined_call_operand.vmem [shape: f32[2,32,32], index: 10, kind: input, shape index: {}]
  %s11 = inlined_call_operand.vmem [shape: f32[2,1,32], index: 11, kind: input, shape index: {}]
  %s12 = inlined_call_operand.vmem [shape: f32[2,32,64], index: 12, kind: input, shape index: {}]
  %s13 = inlined_call_operand.vmem [shape: f32[2,1,64], index: 13, kind: input, shape index: {}]
  %s14 = inlined_call_operand.vmem [shape: f32[2,64,32], index: 14, kind: input, shape index: {}]
  %s15 = inlined_call_operand.vmem [shape: f32[2,1,32], index: 15, kind: input, shape index: {}]
  %s16 = inlined_call_operand.vmem [shape: f32[2,1,32], index: 16, kind: input, shape index: {}]
  %s17 = inlined_call_operand.vmem [shape: f32[2,1,32], index: 17, kind: input, shape index: {}]
  %s18 = inlined_call_operand.vmem [shape: f32[2,1,32], index: 18, kind: input, shape index: {}]
  %s19 = inlined_call_operand.vmem [shape: f32[2,1,32], index: 19, kind: input, shape index: {}]
  %s20 = inlined_call_operand.hbm [shape: f32[16,32], index: 20, kind: output, shape index: {0}]
  %s21 = inlined_call_operand.hbm [shape: f32[16,64], index: 21, kind: output, shape index: {1}]
  %22 = xla_tuple %s20, %s21
  %s23 = sld [smem:[#allocation0]]
  $region98: #{transformer_forward.1} parent=0
    _
  %s25 = ssub.s32 1, %s23
  %s26 = scalar_select 0, %s25, %s23
  $region1: #{transformer_forward.1} parent=0
    #allocation2 [shape = 'u8[8192]{0}', space=vmem, size = 0x2000, scoped, tag = 'output window, operand 0, single buffered']
    #allocation3 [shape = 's32[1]{0}', space=sflag, size = 0x4, scoped, tag = 'scoped memory for transformer_forward.1']
    #allocation4 [shape = 'u8[8192]{0}', space=vmem, size = 0x2000, scoped, tag = 'output window, operand 1, single buffered']
    #allocation5 [shape = 's32[1]{0}', space=sflag, size = 0x4, scoped, tag = 'scoped memory for transformer_forward.1']
    %27 = vsyncpa [#allocation3], 0
    %28 = vsyncpa [#allocation5], 0
    // Predicated region
    $region2: #{transformer_forward.1} parent=1 // pred_check
      _
    $region3: #{transformer_forward.1} parent=1 // pred_check_branch
      %30 = sbr.rel (0) target = $region5
    $region4: #{transformer_forward.1} parent=1 // pred_region
      _
    $region5: #{transformer_forward.1} parent=1 // pred_fallthru
      _
    // Predicated region
    $region6: #{transformer_forward.1} parent=1 // pred_check
      _
    $region7: #{transformer_forward.1} parent=1 // pred_check_branch
      %32 = sbr.rel (0) target = $region9
    $region8: #{transformer_forward.1} parent=1 // pred_region
      _
    $region9: #{transformer_forward.1} parent=1 // pred_fallthru
      _
    // Predicated region
    $region10: #{transformer_forward.1} parent=1 // pred_check
      _
    $region11: #{transformer_forward.1} parent=1 // pred_check_branch
      %34 = sbr.rel (0) target = $region13
    $region12: #{transformer_forward.1} parent=1 // pred_region
      _
    $region13: #{transformer_forward.1} parent=1 // pred_fallthru
      _
    // Predicated region
    $region14: #{transformer_forward.1} parent=1 // pred_check
      _
    $region15: #{transformer_forward.1} parent=1 // pred_check_branch
      %36 = sbr.rel (0) target = $region17
    $region16: #{transformer_forward.1} parent=1 // pred_region
      _
    $region17: #{transformer_forward.1} parent=1 // pred_fallthru
      _
    // Predicated region
    $region18: #{transformer_forward.1} parent=1 // pred_check
      _
    $region19: #{transformer_forward.1} parent=1 // pred_check_branch
      %38 = sbr.rel (0) target = $region21
    $region20: #{transformer_forward.1} parent=1 // pred_region
      _
    $region21: #{transformer_forward.1} parent=1 // pred_fallthru
      _
    // Predicated region
    $region22: #{transformer_forward.1} parent=1 // pred_check
      _
    $region23: #{transformer_forward.1} parent=1 // pred_check_branch
      %40 = sbr.rel (0) target = $region25
    $region24: #{transformer_forward.1} parent=1 // pred_region
      _
    $region25: #{transformer_forward.1} parent=1 // pred_fallthru
      _
    // Predicated region
    $region26: #{transformer_forward.1} parent=1 // pred_check
      _
    $region27: #{transformer_forward.1} parent=1 // pred_check_branch
      %42 = sbr.rel (0) target = $region29
    $region28: #{transformer_forward.1} parent=1 // pred_region
      _
    $region29: #{transformer_forward.1} parent=1 // pred_fallthru
      _
    // Predicated region
    $region30: #{transformer_forward.1} parent=1 // pred_check
      _
    $region31: #{transformer_forward.1} parent=1 // pred_check_branch
      %44 = sbr.rel (0) target = $region33
    $region32: #{transformer_forward.1} parent=1 // pred_region
      _
    $region33: #{transformer_forward.1} parent=1 // pred_fallthru
      _
    // Predicated region
    $region34: #{transformer_forward.1} parent=1 // pred_check
      _
    $region35: #{transformer_forward.1} parent=1 // pred_check_branch
      %46 = sbr.rel (0) target = $region37
    $region36: #{transformer_forward.1} parent=1 // pred_region
      _
    $region37: #{transformer_forward.1} parent=1 // pred_fallthru
      _
    // Predicated region
    $region38: #{transformer_forward.1} parent=1 // pred_check
      _
    $region39: #{transformer_forward.1} parent=1 // pred_check_branch
      %48 = sbr.rel (0) target = $region41
    $region40: #{transformer_forward.1} parent=1 // pred_region
      _
    $region41: #{transformer_forward.1} parent=1 // pred_fallthru
      _
    // Predicated region
    $region42: #{transformer_forward.1} parent=1 // pred_check
      _
    $region43: #{transformer_forward.1} parent=1 // pred_check_branch
      %50 = sbr.rel (0) target = $region45
    $region44: #{transformer_forward.1} parent=1 // pred_region
      _
    $region45: #{transformer_forward.1} parent=1 // pred_fallthru
      _
    // Predicated region
    $region46: #{transformer_forward.1} parent=1 // pred_check
      _
    $region47: #{transformer_forward.1} parent=1 // pred_check_branch
      %52 = sbr.rel (0) target = $region49
    $region48: #{transformer_forward.1} parent=1 // pred_region
      _
    $region49: #{transformer_forward.1} parent=1 // pred_fallthru
      _
    // Predicated region
    $region50: #{transformer_forward.1} parent=1 // pred_check
      _
    $region51: #{transformer_forward.1} parent=1 // pred_check_branch
      %54 = sbr.rel (0) target = $region53
    $region52: #{transformer_forward.1} parent=1 // pred_region
      _
    $region53: #{transformer_forward.1} parent=1 // pred_fallthru
      _
    // Predicated region
    $region54: #{transformer_forward.1} parent=1 // pred_check
      _
    $region55: #{transformer_forward.1} parent=1 // pred_check_branch
      %56 = sbr.rel (0) target = $region57
    $region56: #{transformer_forward.1} parent=1 // pred_region
      _
    $region57: #{transformer_forward.1} parent=1 // pred_fallthru
      _
    // Predicated region
    $region58: #{transformer_forward.1} parent=1 // pred_check
      _
    $region59: #{transformer_forward.1} parent=1 // pred_check_branch
      %58 = sbr.rel (0) target = $region61
    $region60: #{transformer_forward.1} parent=1 // pred_region
      _
    $region61: #{transformer_forward.1} parent=1 // pred_fallthru
      _
    // Predicated region
    $region62: #{transformer_forward.1} parent=1 // pred_check
      _
    $region63: #{transformer_forward.1} parent=1 // pred_check_branch
      %60 = sbr.rel (0) target = $region65
    $region64: #{transformer_forward.1} parent=1 // pred_region
      _
    $region65: #{transformer_forward.1} parent=1 // pred_fallthru
      _
    // Predicated region
    $region66: #{transformer_forward.1} parent=1 // pred_check
      _
    $region67: #{transformer_forward.1} parent=1 // pred_check_branch
      %62 = sbr.rel (0) target = $region69
    $region68: #{transformer_forward.1} parent=1 // pred_region
      _
    $region69: #{transformer_forward.1} parent=1 // pred_fallthru
      _
    // Predicated region
    $region70: #{transformer_forward.1} parent=1 // pred_check
      _
    $region71: #{transformer_forward.1} parent=1 // pred_check_branch
      %64 = sbr.rel (0) target = $region73
    $region72: #{transformer_forward.1} parent=1 // pred_region
      _
    $region73: #{transformer_forward.1} parent=1 // pred_fallthru
      _
    // Predicated region
    $region74: #{transformer_forward.1} parent=1 // pred_check
      _
    $region75: #{transformer_forward.1} parent=1 // pred_check_branch
      %66 = sbr.rel (0) target = $region77
    $region76: #{transformer_forward.1} parent=1 // pred_region
      _
    $region77: #{transformer_forward.1} parent=1 // pred_fallthru
      _
    // Predicated region
    $region78: #{transformer_forward.1} parent=1 // pred_check
      _
    $region79: #{transformer_forward.1} parent=1 // pred_check_branch
      %68 = sbr.rel (0) target = $region81
    $region80: #{transformer_forward.1} parent=1 // pred_region
      _
    $region81: #{transformer_forward.1} parent=1 // pred_fallthru
      _
    %v69 = vld [vmem:[%s0] sm:$0xff]
    %v70 = vld [vmem:[%s0 + $0x8] sm:$0xff]
    %v71 = vlaneseq
    %v72 = vand.u32 %v71, 127
    %73 = vset.pattern.permute.xlu0 0
    %74 = vperm.xlu0 %73, %v69
    %v75 = vpop.permute.xlu0 %74
    %76 = vset.pattern.permute.xlu0 0
    %77 = vperm.xlu0 %76, %v70
    %v78 = vpop.permute.xlu0 %77
    %vm79 = vcmp.eq.s32.totalorder %v72, %v75
    %vm80 = vcmp.eq.s32.totalorder %v72, %v78
    %v81 = vsel %vm79, 1, 0
    %v82 = vsel %vm80, 1, 0
    %v83 = vcvt.s32.f32 %v81
    %v84 = vcvt.s32.f32 %v82
    %v85 = vld [vmem:[%s2] sm:$0xff]
    %v86 = vld [vmem:[%s2 + $0x8] sm:$0xff]
    %v87 = vld [vmem:[%s2 + $0x10] sm:$0xff]
    %v88 = vld [vmem:[%s2 + $0x18] sm:$0xff]
    %v89 = vld [vmem:[%s2 + $0x20] sm:$0xff]
    %v90 = vld [vmem:[%s2 + $0x28] sm:$0xff]
    %v91 = vld [vmem:[%s2 + $0x30] sm:$0xff]
    %v92 = vld [vmem:[%s2 + $0x38] sm:$0xff]
    %v93 = vld [vmem:[%s3] sm:$0xff]
    %v94 = vld [vmem:[%s3 + $0x8] sm:$0xff]
    %vm95 = vcmask 523264
    %v97 = vsel %vm95, %v83, 0
    %v100 = vsel %vm95, %v84, 0
    %102 = vmatpush.msra.mxu0 0.0
    %103 = vmatpush.msra.mxu0 0.0
    %104 = vmatpush.msra.mxu0 0.0
    %105 = vmatpush.msra.mxu0 0.0
    %106 = vmatpush.msra.mxu0 0.0
    %107 = vmatpush.msra.mxu0 0.0
    %108 = vmatpush.msra.mxu0 0.0
    %109 = vmatpush.msra.mxu0 0.0
    %110 = vmatpush.msra.mxu0 %v92
    %111 = vmatpush.msra.mxu0 %v91
    %112 = vmatpush.msra.mxu0 %v90
    %113 = vmatpush.msra.mxu0 %v89
    %114 = vmatpush.msra.mxu0 %v88
    %115 = vmatpush.msra.mxu0 %v87
    %116 = vmatpush.msra.mxu0 %v86
    %117 = vmatpush.msra.mxu0 %v85
    %118 = vmatmul.f32.gmra.mxu0 %v97
    %v119 = vpop.f32.mrf.mxu0
    %v120 = vadd.f32 %v93, %v119
    %121 = vmatmul.f32.gmra.mxu0 %v100
    %v122 = vpop.f32.mrf.mxu0
    %v123 = vadd.f32 %v94, %v122
    %124 = vdwg.mxu0
    %v125 = vld [vmem:[%s4] sm:$0x1]
    %v126 = vld [vmem:[%s5] sm:$0x1]
    %vm127 = vcmask 261120
    %v128 = vsel %vm127, %v120, 0.0
    %129 = vadd.xlane.f32.xlu0 %v128
    %v130 = vpop.xlane.xlu0 %129
    %v131 = vsel %vm127, %v123, 0.0
    %132 = vadd.xlane.f32.xlu0 %v131
    %v133 = vpop.xlane.xlu0 %132
    %v134 = vrcp.pop 32.0
    %v135 = vmul.f32 32.0, %v134
    %v136 = vsub.f32 1.0, %v135
    %v137 = vmul.f32 %v134, %v136
    %v138 = vadd.f32 %v134, %v137
    %vm139 = vweird.f32 %v134
    %v140 = vsel %vm139, %v134, %v138
    %v141 = vmul.f32 %v130, %v140
    %v142 = vmul.f32 %v133, %v140
    %v143 = vsub.f32 %v120, %v141
    %v144 = vsub.f32 %v123, %v142
    %v145 = vmul.f32 %v143, %v143
    %v146 = vmul.f32 %v144, %v144
    %v147 = vsel %vm127, %v145, 0.0
    %148 = vadd.xlane.f32.xlu0 %v147
    %v149 = vpop.xlane.xlu0 %148
    %v150 = vsel %vm127, %v146, 0.0
    %151 = vadd.xlane.f32.xlu0 %v150
    %v152 = vpop.xlane.xlu0 %151
    %v153 = vmul.f32 %v149, %v140
    %v154 = vmul.f32 %v152, %v140
    %v155 = vadd.f32 %v153, 1e-05
    %v156 = vadd.f32 %v154, 1e-05
    %v157 = vrsqrt.pop %v155
    %v158 = vmul.f32 %v157, %v155
    %v159 = vmul.f32 %v158, %v157
    %v160 = vmul.f32 0.5, %v159
    %v161 = vsub.f32 1.5, %v160
    %v162 = vmul.f32 %v157, %v161
    %vm163 = vweird.f32 %v155
    %vm164 = vweird.f32 %v157
    %vm165 = vmor %vm163, %vm164
    %v166 = vsel %vm165, %v157, %v162
    %v167 = vrsqrt.pop %v156
    %v168 = vmul.f32 %v167, %v156
    %v169 = vmul.f32 %v168, %v167
    %v170 = vmul.f32 0.5, %v169
    %v171 = vsub.f32 1.5, %v170
    %v172 = vmul.f32 %v167, %v171
    %vm173 = vweird.f32 %v156
    %vm174 = vweird.f32 %v167
    %vm175 = vmor %vm173, %vm174
    %v176 = vsel %vm175, %v167, %v172
    %v177 = vmul.f32 %v143, %v166
    %v178 = vmul.f32 %v144, %v176
    %v180 = vperm.slane %v125, 0
    %v182 = vmul.f32 %v177, %v180
    %v183 = vmul.f32 %v178, %v180
    %v185 = vperm.slane %v126, 0
    %v187 = vadd.f32 %v182, %v185
    %v188 = vadd.f32 %v183, %v185
    %v189 = vlaneseq
    %v190 = vshrl.u32 %v189, 7
    %vm191 = vcmp.ge.s32.totalorder %v190, %v72
    %v192 = vsel %vm191, 1, 0
    %v193 = vcvt.s32.f32 %v192
    %v194 = vld [vmem:[%s1] sm:$0x3]
    %vm195 = vcmp.ne.s32.totalorder %v194, 0
    %v196 = vsel %vm195, 1, 0
    %v197 = vcvt.s32.f32 %v196
    %v198 = vperm.slane %v197, 0
    %v199 = vmul.f32 %v193, %v198
    %v200 = vsub.f32 %v199, 1.0
    %v201 = vmul.f32 %v200, 1e+09
    %v202 = vperm.slane %v197, 1
    %v203 = vmul.f32 %v193, %v202
    %v204 = vsub.f32 %v203, 1.0
    %v205 = vmul.f32 %v204, 1e+09
    %v206 = vld [vmem:[%s8] sm:$0xff]
    %v207 = vld [vmem:[%s8 + $0x8] sm:$0xff]
    %v208 = vld [vmem:[%s8 + $0x10] sm:$0xff]
    %v209 = vld [vmem:[%s8 + $0x18] sm:$0xff]
    %v210 = vld [vmem:[%s9] sm:$0x1]
    %v212 = vperm.slane %v210, 0
    %v215 = vsel %vm127, %v187, 0
    %v218 = vsel %vm127, %v188, 0
    %220 = vmatpush.msra.mxu0 0.0
    %221 = vmatpush.msra.mxu0 0.0
    %222 = vmatpush.msra.mxu0 0.0
    %223 = vmatpush.msra.mxu0 0.0
    %224 = vmatpush.msra.mxu0 0.0
    %225 = vmatpush.msra.mxu0 0.0
    %226 = vmatpush.msra.mxu0 0.0
    %227 = vmatpush.msra.mxu0 0.0
    %228 = vmatpush.msra.mxu0 0.0
    %229 = vmatpush.msra.mxu0 0.0
    %230 = vmatpush.msra.mxu0 0.0
    %231 = vmatpush.msra.mxu0 0.0
    %232 = vmatpush.msra.mxu0 %v209
    %233 = vmatpush.msra.mxu0 %v208
    %234 = vmatpush.msra.mxu0 %v207
    %235 = vmatpush.msra.mxu0 %v206
    %236 = vmatmul.f32.gmra.mxu0 %v215
    %v237 = vpop.f32.mrf.mxu0
    %v238 = vadd.f32 %v212, %v237
    %239 = vmatmul.f32.gmra.mxu0 %v218
    %v240 = vpop.f32.mrf.mxu0
    %v241 = vadd.f32 %v212, %v240
    %242 = vdwg.mxu0
    %244 = vrot.lane.b32.xlu0 %v238, 96
    %v245 = vpop.permute.xlu0 %244
    %vm246 = vcmask 64512
    %v247 = vsel %vm246, %v238, 0
    %v249 = vsel %vm246, %v245, 0
    %251 = vmatpush.xpose.msra.mxu0 0.0
    %252 = vmatpush.xpose.msra.mxu0 0.0
    %253 = vmatpush.xpose.msra.mxu0 0.0
    %254 = vmatpush.xpose.msra.mxu0 0.0
    %255 = vmatpush.xpose.msra.mxu0 0.0
    %256 = vmatpush.xpose.msra.mxu0 0.0
    %257 = vmatpush.xpose.msra.mxu0 0.0
    %258 = vmatpush.xpose.msra.mxu0 0.0
    %259 = vmatpush.xpose.msra.mxu0 0.0
    %260 = vmatpush.xpose.msra.mxu0 0.0
    %261 = vmatpush.xpose.msra.mxu0 0.0
    %262 = vmatpush.xpose.msra.mxu0 0.0
    %263 = vmatpush.xpose.msra.mxu0 0.0
    %264 = vmatpush.xpose.msra.mxu0 0.0
    %265 = vmatpush.xpose.msra.mxu0 0.0
    %266 = vmatpush.xpose.msra.mxu0 %v249
    %267 = vmatmul.f32.gmra.mxu0 %v247
    %v268 = vpop.f32.mrf.mxu0
    %v269 = vadd.f32 0.0, %v268
    %270 = vdwg.mxu0
    %v271 = vmul.f32 %v269, 0.35355338
    %v272 = vadd.f32 %v271, %v201
    %v273 = vsel %vm246, %v272, -inf
    %274 = vmax.xlane.f32.xlu0 %v273
    %v275 = vpop.xlane.xlu0 %274
    %v276 = vsub.f32 %v272, %v275
    %v277 = vmul.f32 %v276, 1.442695
    %v278 = vpow.pop %v277
    %v279 = vsel %vm246, %v278, 0.0
    %280 = vadd.xlane.f32.xlu0 %v279
    %v281 = vpop.xlane.xlu0 %280
    %v282 = vrcp.pop %v281
    %v283 = vmul.f32 %v278, %v282
    %284 = vrot.lane.b32.xlu0 %v238, 64
    %v285 = vpop.permute.xlu0 %284
    %v288 = vsel %vm246, %v283, 0
    %290 = vmatpush.msra.mxu0 0.0
    %291 = vmatpush.msra.mxu0 0.0
    %292 = vmatpush.msra.mxu0 0.0
    %293 = vmatpush.msra.mxu0 0.0
    %294 = vmatpush.msra.mxu0 0.0
    %295 = vmatpush.msra.mxu0 0.0
    %296 = vmatpush.msra.mxu0 0.0
    %297 = vmatpush.msra.mxu0 0.0
    %298 = vmatpush.msra.mxu0 0.0
    %299 = vmatpush.msra.mxu0 0.0
    %300 = vmatpush.msra.mxu0 0.0
    %301 = vmatpush.msra.mxu0 0.0
    %302 = vmatpush.msra.mxu0 0.0
    %303 = vmatpush.msra.mxu0 0.0
    %304 = vmatpush.msra.mxu0 0.0
    %305 = vmatpush.msra.mxu0 %v285
    %306 = vmatmul.f32.gmra.mxu0 %v288
    %v307 = vpop.f32.mrf.mxu0
    %v308 = vadd.f32 0.0, %v307
    %309 = vdwg.mxu0
    %310 = vrot.lane.b32.xlu0 %v238, 120
    %v311 = vpop.permute.xlu0 %310
    %312 = vrot.lane.b32.xlu0 %v238, 88
    %v313 = vpop.permute.xlu0 %312
    %v314 = vsel %vm246, %v311, 0
    %v316 = vsel %vm246, %v313, 0
    %318 = vmatpush.xpose.msra.mxu0 0.0
    %319 = vmatpush.xpose.msra.mxu0 0.0
    %320 = vmatpush.xpose.msra.mxu0 0.0
    %321 = vmatpush.xpose.msra.mxu0 0.0
    %322 = vmatpush.xpose.msra.mxu0 0.0
    %323 = vmatpush.xpose.msra.mxu0 0.0
    %324 = vmatpush.xpose.msra.mxu0 0.0
    %325 = vmatpush.xpose.msra.mxu0 0.0
    %326 = vmatpush.xpose.msra.mxu0 0.0
    %327 = vmatpush.xpose.msra.mxu0 0.0
    %328 = vmatpush.xpose.msra.mxu0 0.0
    %329 = vmatpush.xpose.msra.mxu0 0.0
    %330 = vmatpush.xpose.msra.mxu0 0.0
    %331 = vmatpush.xpose.msra.mxu0 0.0
    %332 = vmatpush.xpose.msra.mxu0 0.0
    %333 = vmatpush.xpose.msra.mxu0 %v316
    %334 = vmatmul.f32.gmra.mxu0 %v314
    %v335 = vpop.f32.mrf.mxu0
    %v336 = vadd.f32 0.0, %v335
    %337 = vdwg.mxu0
    %v338 = vmul.f32 %v336, 0.35355338
    %v339 = vadd.f32 %v338, %v201
    %v340 = vsel %vm246, %v339, -inf
    %341 = vmax.xlane.f32.xlu0 %v340
    %v342 = vpop.xlane.xlu0 %341
    %v343 = vsub.f32 %v339, %v342
    %v344 = vmul.f32 %v343, 1.442695
    %v345 = vpow.pop %v344
    %v346 = vsel %vm246, %v345, 0.0
    %347 = vadd.xlane.f32.xlu0 %v346
    %v348 = vpop.xlane.xlu0 %347
    %v349 = vrcp.pop %v348
    %v350 = vmul.f32 %v345, %v349
    %351 = vrot.lane.b32.xlu0 %v238, 56
    %v352 = vpop.permute.xlu0 %351
    %v355 = vsel %vm246, %v350, 0
    %357 = vmatpush.msra.mxu0 0.0
    %358 = vmatpush.msra.mxu0 0.0
    %359 = vmatpush.msra.mxu0 0.0
    %360 = vmatpush.msra.mxu0 0.0
    %361 = vmatpush.msra.mxu0 0.0
    %362 = vmatpush.msra.mxu0 0.0
    %363 = vmatpush.msra.mxu0 0.0
    %364 = vmatpush.msra.mxu0 0.0
    %365 = vmatpush.msra.mxu0 0.0
    %366 = vmatpush.msra.mxu0 0.0
    %367 = vmatpush.msra.mxu0 0.0
    %368 = vmatpush.msra.mxu0 0.0
    %369 = vmatpush.msra.mxu0 0.0
    %370 = vmatpush.msra.mxu0 0.0
    %371 = vmatpush.msra.mxu0 0.0
    %372 = vmatpush.msra.mxu0 %v352
    %373 = vmatmul.f32.gmra.mxu0 %v355
    %v374 = vpop.f32.mrf.mxu0
    %v375 = vadd.f32 0.0, %v374
    %376 = vdwg.mxu0
    %377 = vrot.lane.b32.xlu0 %v238, 112
    %v378 = vpop.permute.xlu0 %377
    %379 = vrot.lane.b32.xlu0 %v238, 80
    %v380 = vpop.permute.xlu0 %379
    %v381 = vsel %vm246, %v378, 0
    %v383 = vsel %vm246, %v380, 0
    %385 = vmatpush.xpose.msra.mxu0 0.0
    %386 = vmatpush.xpose.msra.mxu0 0.0
    %387 = vmatpush.xpose.msra.mxu0 0.0
    %388 = vmatpush.xpose.msra.mxu0 0.0
    %389 = vmatpush.xpose.msra.mxu0 0.0
    %390 = vmatpush.xpose.msra.mxu0 0.0
    %391 = vmatpush.xpose.msra.mxu0 0.0
    %392 = vmatpush.xpose.msra.mxu0 0.0
    %393 = vmatpush.xpose.msra.mxu0 0.0
    %394 = vmatpush.xpose.msra.mxu0 0.0
    %395 = vmatpush.xpose.msra.mxu0 0.0
    %396 = vmatpush.xpose.msra.mxu0 0.0
    %397 = vmatpush.xpose.msra.mxu0 0.0
    %398 = vmatpush.xpose.msra.mxu0 0.0
    %399 = vmatpush.xpose.msra.mxu0 0.0
    %400 = vmatpush.xpose.msra.mxu0 %v383
    %401 = vmatmul.f32.gmra.mxu0 %v381
    %v402 = vpop.f32.mrf.mxu0
    %v403 = vadd.f32 0.0, %v402
    %404 = vdwg.mxu0
    %v405 = vmul.f32 %v403, 0.35355338
    %v406 = vadd.f32 %v405, %v201
    %v407 = vsel %vm246, %v406, -inf
    %408 = vmax.xlane.f32.xlu0 %v407
    %v409 = vpop.xlane.xlu0 %408
    %v410 = vsub.f32 %v406, %v409
    %v411 = vmul.f32 %v410, 1.442695
    %v412 = vpow.pop %v411
    %v413 = vsel %vm246, %v412, 0.0
    %414 = vadd.xlane.f32.xlu0 %v413
    %v415 = vpop.xlane.xlu0 %414
    %v416 = vrcp.pop %v415
    %v417 = vmul.f32 %v412, %v416
    %418 = vrot.lane.b32.xlu0 %v238, 48
    %v419 = vpop.permute.xlu0 %418
    %v422 = vsel %vm246, %v417, 0
    %424 = vmatpush.msra.mxu0 0.0
    %425 = vmatpush.msra.mxu0 0.0
    %426 = vmatpush.msra.mxu0 0.0
    %427 = vmatpush.msra.mxu0 0.0
    %428 = vmatpush.msra.mxu0 0.0
    %429 = vmatpush.msra.mxu0 0.0
    %430 = vmatpush.msra.mxu0 0.0
    %431 = vmatpush.msra.mxu0 0.0
    %432 = vmatpush.msra.mxu0 0.0
    %433 = vmatpush.msra.mxu0 0.0
    %434 = vmatpush.msra.mxu0 0.0
    %435 = vmatpush.msra.mxu0 0.0
    %436 = vmatpush.msra.mxu0 0.0
    %437 = vmatpush.msra.mxu0 0.0
    %438 = vmatpush.msra.mxu0 0.0
    %439 = vmatpush.msra.mxu0 %v419
    %440 = vmatmul.f32.gmra.mxu0 %v422
    %v441 = vpop.f32.mrf.mxu0
    %v442 = vadd.f32 0.0, %v441
    %443 = vdwg.mxu0
    %444 = vrot.lane.b32.xlu0 %v238, 104
    %v445 = vpop.permute.xlu0 %444
    %446 = vrot.lane.b32.xlu0 %v238, 72
    %v447 = vpop.permute.xlu0 %446
    %v448 = vsel %vm246, %v445, 0
    %v450 = vsel %vm246, %v447, 0
    %452 = vmatpush.xpose.msra.mxu0 0.0
    %453 = vmatpush.xpose.msra.mxu0 0.0
    %454 = vmatpush.xpose.msra.mxu0 0.0
    %455 = vmatpush.xpose.msra.mxu0 0.0
    %456 = vmatpush.xpose.msra.mxu0 0.0
    %457 = vmatpush.xpose.msra.mxu0 0.0
    %458 = vmatpush.xpose.msra.mxu0 0.0
    %459 = vmatpush.xpose.msra.mxu0 0.0
    %460 = vmatpush.xpose.msra.mxu0 0.0
    %461 = vmatpush.xpose.msra.mxu0 0.0
    %462 = vmatpush.xpose.msra.mxu0 0.0
    %463 = vmatpush.xpose.msra.mxu0 0.0
    %464 = vmatpush.xpose.msra.mxu0 0.0
    %465 = vmatpush.xpose.msra.mxu0 0.0
    %466 = vmatpush.xpose.msra.mxu0 0.0
    %467 = vmatpush.xpose.msra.mxu0 %v450
    %468 = vmatmul.f32.gmra.mxu0 %v448
    %v469 = vpop.f32.mrf.mxu0
    %v470 = vadd.f32 0.0, %v469
    %471 = vdwg.mxu0
    %v472 = vmul.f32 %v470, 0.35355338
    %v473 = vadd.f32 %v472, %v201
    %v474 = vsel %vm246, %v473, -inf
    %475 = vmax.xlane.f32.xlu0 %v474
    %v476 = vpop.xlane.xlu0 %475
    %v477 = vsub.f32 %v473, %v476
    %v478 = vmul.f32 %v477, 1.442695
    %v479 = vpow.pop %v478
    %v480 = vsel %vm246, %v479, 0.0
    %481 = vadd.xlane.f32.xlu0 %v480
    %v482 = vpop.xlane.xlu0 %481
    %v483 = vrcp.pop %v482
    %v484 = vmul.f32 %v479, %v483
    %485 = vrot.lane.b32.xlu0 %v238, 40
    %v486 = vpop.permute.xlu0 %485
    %v489 = vsel %vm246, %v484, 0
    %491 = vmatpush.msra.mxu0 0.0
    %492 = vmatpush.msra.mxu0 0.0
    %493 = vmatpush.msra.mxu0 0.0
    %494 = vmatpush.msra.mxu0 0.0
    %495 = vmatpush.msra.mxu0 0.0
    %496 = vmatpush.msra.mxu0 0.0
    %497 = vmatpush.msra.mxu0 0.0
    %498 = vmatpush.msra.mxu0 0.0
    %499 = vmatpush.msra.mxu0 0.0
    %500 = vmatpush.msra.mxu0 0.0
    %501 = vmatpush.msra.mxu0 0.0
    %502 = vmatpush.msra.mxu0 0.0
    %503 = vmatpush.msra.mxu0 0.0
    %504 = vmatpush.msra.mxu0 0.0
    %505 = vmatpush.msra.mxu0 0.0
    %506 = vmatpush.msra.mxu0 %v486
    %507 = vmatmul.f32.gmra.mxu0 %v489
    %v508 = vpop.f32.mrf.mxu0
    %v509 = vadd.f32 0.0, %v508
    %510 = vdwg.mxu0
    %512 = vrot.lane.b32.xlu0 %v375, 8
    %v513 = vpop.permute.xlu0 %512
    %516 = vrot.lane.b32.xlu0 %v442, 16
    %v517 = vpop.permute.xlu0 %516
    %520 = vrot.lane.b32.xlu0 %v509, 24
    %v521 = vpop.permute.xlu0 %520
    %v523 = vsel %vm246, %v308, %v513
    %vm524 = vcmask 130048
    %v525 = vsel %vm524, %v523, %v517
    %vm526 = vcmask 195584
    %v527 = vsel %vm526, %v525, %v521
    %529 = vrot.lane.b32.xlu0 %v241, 96
    %v530 = vpop.permute.xlu0 %529
    %v531 = vsel %vm246, %v241, 0
    %v533 = vsel %vm246, %v530, 0
    %535 = vmatpush.xpose.msra.mxu0 0.0
    %536 = vmatpush.xpose.msra.mxu0 0.0
    %537 = vmatpush.xpose.msra.mxu0 0.0
    %538 = vmatpush.xpose.msra.mxu0 0.0
    %539 = vmatpush.xpose.msra.mxu0 0.0
    %540 = vmatpush.xpose.msra.mxu0 0.0
    %541 = vmatpush.xpose.msra.mxu0 0.0
    %542 = vmatpush.xpose.msra.mxu0 0.0
    %543 = vmatpush.xpose.msra.mxu0 0.0
    %544 = vmatpush.xpose.msra.mxu0 0.0
    %545 = vmatpush.xpose.msra.mxu0 0.0
    %546 = vmatpush.xpose.msra.mxu0 0.0
    %547 = vmatpush.xpose.msra.mxu0 0.0
    %548 = vmatpush.xpose.msra.mxu0 0.0
    %549 = vmatpush.xpose.msra.mxu0 0.0
    %550 = vmatpush.xpose.msra.mxu0 %v533
    %551 = vmatmul.f32.gmra.mxu0 %v531
    %v552 = vpop.f32.mrf.mxu0
    %v553 = vadd.f32 0.0, %v552
    %554 = vdwg.mxu0
    %v555 = vmul.f32 %v553, 0.35355338
    %v556 = vadd.f32 %v555, %v205
    %v557 = vsel %vm246, %v556, -inf
    %558 = vmax.xlane.f32.xlu0 %v557
    %v559 = vpop.xlane.xlu0 %558
    %v560 = vsub.f32 %v556, %v559
    %v561 = vmul.f32 %v560, 1.442695
    %v562 = vpow.pop %v561
    %v563 = vsel %vm246, %v562, 0.0
    %564 = vadd.xlane.f32.xlu0 %v563
    %v565 = vpop.xlane.xlu0 %564
    %v566 = vrcp.pop %v565
    %v567 = vmul.f32 %v562, %v566
    %568 = vrot.lane.b32.xlu0 %v241, 64
    %v569 = vpop.permute.xlu0 %568
    %v572 = vsel %vm246, %v567, 0
    %574 = vmatpush.msra.mxu0 0.0
    %575 = vmatpush.msra.mxu0 0.0
    %576 = vmatpush.msra.mxu0 0.0
    %577 = vmatpush.msra.mxu0 0.0
    %578 = vmatpush.msra.mxu0 0.0
    %579 = vmatpush.msra.mxu0 0.0
    %580 = vmatpush.msra.mxu0 0.0
    %581 = vmatpush.msra.mxu0 0.0
    %582 = vmatpush.msra.mxu0 0.0
    %583 = vmatpush.msra.mxu0 0.0
    %584 = vmatpush.msra.mxu0 0.0
    %585 = vmatpush.msra.mxu0 0.0
    %586 = vmatpush.msra.mxu0 0.0
    %587 = vmatpush.msra.mxu0 0.0
    %588 = vmatpush.msra.mxu0 0.0
    %589 = vmatpush.msra.mxu0 %v569
    %590 = vmatmul.f32.gmra.mxu0 %v572
    %v591 = vpop.f32.mrf.mxu0
    %v592 = vadd.f32 0.0, %v591
    %593 = vdwg.mxu0
    %594 = vrot.lane.b32.xlu0 %v241, 120
    %v595 = vpop.permute.xlu0 %594
    %596 = vrot.lane.b32.xlu0 %v241, 88
    %v597 = vpop.permute.xlu0 %596
    %v598 = vsel %vm246, %v595, 0
    %v600 = vsel %vm246, %v597, 0
    %602 = vmatpush.xpose.msra.mxu0 0.0
    %603 = vmatpush.xpose.msra.mxu0 0.0
    %604 = vmatpush.xpose.msra.mxu0 0.0
    %605 = vmatpush.xpose.msra.mxu0 0.0
    %606 = vmatpush.xpose.msra.mxu0 0.0
    %607 = vmatpush.xpose.msra.mxu0 0.0
    %608 = vmatpush.xpose.msra.mxu0 0.0
    %609 = vmatpush.xpose.msra.mxu0 0.0
    %610 = vmatpush.xpose.msra.mxu0 0.0
    %611 = vmatpush.xpose.msra.mxu0 0.0
    %612 = vmatpush.xpose.msra.mxu0 0.0
    %613 = vmatpush.xpose.msra.mxu0 0.0
    %614 = vmatpush.xpose.msra.mxu0 0.0
    %615 = vmatpush.xpose.msra.mxu0 0.0
    %616 = vmatpush.xpose.msra.mxu0 0.0
    %617 = vmatpush.xpose.msra.mxu0 %v600
    %618 = vmatmul.f32.gmra.mxu0 %v598
    %v619 = vpop.f32.mrf.mxu0
    %v620 = vadd.f32 0.0, %v619
    %621 = vdwg.mxu0
    %v622 = vmul.f32 %v620, 0.35355338
    %v623 = vadd.f32 %v622, %v205
    %v624 = vsel %vm246, %v623, -inf
    %625 = vmax.xlane.f32.xlu0 %v624
    %v626 = vpop.xlane.xlu0 %625
    %v627 = vsub.f32 %v623, %v626
    %v628 = vmul.f32 %v627, 1.442695
    %v629 = vpow.pop %v628
    %v630 = vsel %vm246, %v629, 0.0
    %631 = vadd.xlane.f32.xlu0 %v630
    %v632 = vpop.xlane.xlu0 %631
    %v633 = vrcp.pop %v632
    %v634 = vmul.f32 %v629, %v633
    %635 = vrot.lane.b32.xlu0 %v241, 56
    %v636 = vpop.permute.xlu0 %635
    %v639 = vsel %vm246, %v634, 0
    %641 = vmatpush.msra.mxu0 0.0
    %642 = vmatpush.msra.mxu0 0.0
    %643 = vmatpush.msra.mxu0 0.0
    %644 = vmatpush.msra.mxu0 0.0
    %645 = vmatpush.msra.mxu0 0.0
    %646 = vmatpush.msra.mxu0 0.0
    %647 = vmatpush.msra.mxu0 0.0
    %648 = vmatpush.msra.mxu0 0.0
    %649 = vmatpush.msra.mxu0 0.0
    %650 = vmatpush.msra.mxu0 0.0
    %651 = vmatpush.msra.mxu0 0.0
    %652 = vmatpush.msra.mxu0 0.0
    %653 = vmatpush.msra.mxu0 0.0
    %654 = vmatpush.msra.mxu0 0.0
    %655 = vmatpush.msra.mxu0 0.0
    %656 = vmatpush.msra.mxu0 %v636
    %657 = vmatmul.f32.gmra.mxu0 %v639
    %v658 = vpop.f32.mrf.mxu0
    %v659 = vadd.f32 0.0, %v658
    %660 = vdwg.mxu0
    %661 = vrot.lane.b32.xlu0 %v241, 112
    %v662 = vpop.permute.xlu0 %661
    %663 = vrot.lane.b32.xlu0 %v241, 80
    %v664 = vpop.permute.xlu0 %663
    %v665 = vsel %vm246, %v662, 0
    %v667 = vsel %vm246, %v664, 0
    %669 = vmatpush.xpose.msra.mxu0 0.0
    %670 = vmatpush.xpose.msra.mxu0 0.0
    %671 = vmatpush.xpose.msra.mxu0 0.0
    %672 = vmatpush.xpose.msra.mxu0 0.0
    %673 = vmatpush.xpose.msra.mxu0 0.0
    %674 = vmatpush.xpose.msra.mxu0 0.0
    %675 = vmatpush.xpose.msra.mxu0 0.0
    %676 = vmatpush.xpose.msra.mxu0 0.0
    %677 = vmatpush.xpose.msra.mxu0 0.0
    %678 = vmatpush.xpose.msra.mxu0 0.0
    %679 = vmatpush.xpose.msra.mxu0 0.0
    %680 = vmatpush.xpose.msra.mxu0 0.0
    %681 = vmatpush.xpose.msra.mxu0 0.0
    %682 = vmatpush.xpose.msra.mxu0 0.0
    %683 = vmatpush.xpose.msra.mxu0 0.0
    %684 = vmatpush.xpose.msra.mxu0 %v667
    %685 = vmatmul.f32.gmra.mxu0 %v665
    %v686 = vpop.f32.mrf.mxu0
    %v687 = vadd.f32 0.0, %v686
    %688 = vdwg.mxu0
    %v689 = vmul.f32 %v687, 0.35355338
    %v690 = vadd.f32 %v689, %v205
    %v691 = vsel %vm246, %v690, -inf
    %692 = vmax.xlane.f32.xlu0 %v691
    %v693 = vpop.xlane.xlu0 %692
    %v694 = vsub.f32 %v690, %v693
    %v695 = vmul.f32 %v694, 1.442695
    %v696 = vpow.pop %v695
    %v697 = vsel %vm246, %v696, 0.0
    %698 = vadd.xlane.f32.xlu0 %v697
    %v699 = vpop.xlane.xlu0 %698
    %v700 = vrcp.pop %v699
    %v701 = vmul.f32 %v696, %v700
    %702 = vrot.lane.b32.xlu0 %v241, 48
    %v703 = vpop.permute.xlu0 %702
    %v706 = vsel %vm246, %v701, 0
    %708 = vmatpush.msra.mxu0 0.0
    %709 = vmatpush.msra.mxu0 0.0
    %710 = vmatpush.msra.mxu0 0.0
    %711 = vmatpush.msra.mxu0 0.0
    %712 = vmatpush.msra.mxu0 0.0
    %713 = vmatpush.msra.mxu0 0.0
    %714 = vmatpush.msra.mxu0 0.0
    %715 = vmatpush.msra.mxu0 0.0
    %716 = vmatpush.msra.mxu0 0.0
    %717 = vmatpush.msra.mxu0 0.0
    %718 = vmatpush.msra.mxu0 0.0
    %719 = vmatpush.msra.mxu0 0.0
    %720 = vmatpush.msra.mxu0 0.0
    %721 = vmatpush.msra.mxu0 0.0
    %722 = vmatpush.msra.mxu0 0.0
    %723 = vmatpush.msra.mxu0 %v703
    %724 = vmatmul.f32.gmra.mxu0 %v706
    %v725 = vpop.f32.mrf.mxu0
    %v726 = vadd.f32 0.0, %v725
    %727 = vdwg.mxu0
    %728 = vrot.lane.b32.xlu0 %v241, 104
    %v729 = vpop.permute.xlu0 %728
    %730 = vrot.lane.b32.xlu0 %v241, 72
    %v731 = vpop.permute.xlu0 %730
    %v732 = vsel %vm246, %v729, 0
    %v734 = vsel %vm246, %v731, 0
    %736 = vmatpush.xpose.msra.mxu0 0.0
    %737 = vmatpush.xpose.msra.mxu0 0.0
    %738 = vmatpush.xpose.msra.mxu0 0.0
    %739 = vmatpush.xpose.msra.mxu0 0.0
    %740 = vmatpush.xpose.msra.mxu0 0.0
    %741 = vmatpush.xpose.msra.mxu0 0.0
    %742 = vmatpush.xpose.msra.mxu0 0.0
    %743 = vmatpush.xpose.msra.mxu0 0.0
    %744 = vmatpush.xpose.msra.mxu0 0.0
    %745 = vmatpush.xpose.msra.mxu0 0.0
    %746 = vmatpush.xpose.msra.mxu0 0.0
    %747 = vmatpush.xpose.msra.mxu0 0.0
    %748 = vmatpush.xpose.msra.mxu0 0.0
    %749 = vmatpush.xpose.msra.mxu0 0.0
    %750 = vmatpush.xpose.msra.mxu0 0.0
    %751 = vmatpush.xpose.msra.mxu0 %v734
    %752 = vmatmul.f32.gmra.mxu0 %v732
    %v753 = vpop.f32.mrf.mxu0
    %v754 = vadd.f32 0.0, %v753
    %755 = vdwg.mxu0
    %v756 = vmul.f32 %v754, 0.35355338
    %v757 = vadd.f32 %v756, %v205
    %v758 = vsel %vm246, %v757, -inf
    %759 = vmax.xlane.f32.xlu0 %v758
    %v760 = vpop.xlane.xlu0 %759
    %v761 = vsub.f32 %v757, %v760
    %v762 = vmul.f32 %v761, 1.442695
    %v763 = vpow.pop %v762
    %v764 = vsel %vm246, %v763, 0.0
    %765 = vadd.xlane.f32.xlu0 %v764
    %v766 = vpop.xlane.xlu0 %765
    %v767 = vrcp.pop %v766
    %v768 = vmul.f32 %v763, %v767
    %769 = vrot.lane.b32.xlu0 %v241, 40
    %v770 = vpop.permute.xlu0 %769
    %v773 = vsel %vm246, %v768, 0
    %775 = vmatpush.msra.mxu0 0.0
    %776 = vmatpush.msra.mxu0 0.0
    %777 = vmatpush.msra.mxu0 0.0
    %778 = vmatpush.msra.mxu0 0.0
    %779 = vmatpush.msra.mxu0 0.0
    %780 = vmatpush.msra.mxu0 0.0
    %781 = vmatpush.msra.mxu0 0.0
    %782 = vmatpush.msra.mxu0 0.0
    %783 = vmatpush.msra.mxu0 0.0
    %784 = vmatpush.msra.mxu0 0.0
    %785 = vmatpush.msra.mxu0 0.0
    %786 = vmatpush.msra.mxu0 0.0
    %787 = vmatpush.msra.mxu0 0.0
    %788 = vmatpush.msra.mxu0 0.0
    %789 = vmatpush.msra.mxu0 0.0
    %790 = vmatpush.msra.mxu0 %v770
    %791 = vmatmul.f32.gmra.mxu0 %v773
    %v792 = vpop.f32.mrf.mxu0
    %v793 = vadd.f32 0.0, %v792
    %794 = vdwg.mxu0
    %796 = vrot.lane.b32.xlu0 %v659, 8
    %v797 = vpop.permute.xlu0 %796
    %800 = vrot.lane.b32.xlu0 %v726, 16
    %v801 = vpop.permute.xlu0 %800
    %804 = vrot.lane.b32.xlu0 %v793, 24
    %v805 = vpop.permute.xlu0 %804
    %v807 = vsel %vm246, %v592, %v797
    %v808 = vsel %vm524, %v807, %v801
    %v809 = vsel %vm526, %v808, %v805
    %v810 = vld [vmem:[%s10] sm:$0xff]
    %v811 = vld [vmem:[%s10 + $0x8] sm:$0xff]
    %v812 = vld [vmem:[%s10 + $0x10] sm:$0xff]
    %v813 = vld [vmem:[%s10 + $0x18] sm:$0xff]
    %v814 = vld [vmem:[%s11] sm:$0x1]
    %v816 = vperm.slane %v814, 0
    %v819 = vsel %vm127, %v527, 0
    %v822 = vsel %vm127, %v809, 0
    %824 = vmatpush.msra.mxu0 0.0
    %825 = vmatpush.msra.mxu0 0.0
    %826 = vmatpush.msra.mxu0 0.0
    %827 = vmatpush.msra.mxu0 0.0
    %828 = vmatpush.msra.mxu0 0.0
    %829 = vmatpush.msra.mxu0 0.0
    %830 = vmatpush.msra.mxu0 0.0
    %831 = vmatpush.msra.mxu0 0.0
    %832 = vmatpush.msra.mxu0 0.0
    %833 = vmatpush.msra.mxu0 0.0
    %834 = vmatpush.msra.mxu0 0.0
    %835 = vmatpush.msra.mxu0 0.0
    %836 = vmatpush.msra.mxu0 %v813
    %837 = vmatpush.msra.mxu0 %v812
    %838 = vmatpush.msra.mxu0 %v811
    %839 = vmatpush.msra.mxu0 %v810
    %840 = vmatmul.f32.gmra.mxu0 %v819
    %v841 = vpop.f32.mrf.mxu0
    %v842 = vadd.f32 %v816, %v841
    %843 = vmatmul.f32.gmra.mxu0 %v822
    %v844 = vpop.f32.mrf.mxu0
    %v845 = vadd.f32 %v816, %v844
    %846 = vdwg.mxu0
    %v847 = vadd.f32 %v187, %v842
    %v848 = vadd.f32 %v188, %v845
    %v849 = vld [vmem:[%s16] sm:$0x1]
    %v850 = vld [vmem:[%s17] sm:$0x1]
    %v851 = vsel %vm127, %v847, 0.0
    %852 = vadd.xlane.f32.xlu0 %v851
    %v853 = vpop.xlane.xlu0 %852
    %v854 = vsel %vm127, %v848, 0.0
    %855 = vadd.xlane.f32.xlu0 %v854
    %v856 = vpop.xlane.xlu0 %855
    %v857 = vmul.f32 %v853, %v140
    %v858 = vmul.f32 %v856, %v140
    %v859 = vsub.f32 %v847, %v857
    %v860 = vsub.f32 %v848, %v858
    %v861 = vmul.f32 %v859, %v859
    %v862 = vmul.f32 %v860, %v860
    %v863 = vsel %vm127, %v861, 0.0
    %864 = vadd.xlane.f32.xlu0 %v863
    %v865 = vpop.xlane.xlu0 %864
    %v866 = vsel %vm127, %v862, 0.0
    %867 = vadd.xlane.f32.xlu0 %v866
    %v868 = vpop.xlane.xlu0 %867
    %v869 = vmul.f32 %v865, %v140
    %v870 = vmul.f32 %v868, %v140
    %v871 = vadd.f32 %v869, 1e-05
    %v872 = vadd.f32 %v870, 1e-05
    %v873 = vrsqrt.pop %v871
    %v874 = vmul.f32 %v873, %v871
    %v875 = vmul.f32 %v874, %v873
    %v876 = vmul.f32 0.5, %v875
    %v877 = vsub.f32 1.5, %v876
    %v878 = vmul.f32 %v873, %v877
    %vm879 = vweird.f32 %v871
    %vm880 = vweird.f32 %v873
    %vm881 = vmor %vm879, %vm880
    %v882 = vsel %vm881, %v873, %v878
    %v883 = vrsqrt.pop %v872
    %v884 = vmul.f32 %v883, %v872
    %v885 = vmul.f32 %v884, %v883
    %v886 = vmul.f32 0.5, %v885
    %v887 = vsub.f32 1.5, %v886
    %v888 = vmul.f32 %v883, %v887
    %vm889 = vweird.f32 %v872
    %vm890 = vweird.f32 %v883
    %vm891 = vmor %vm889, %vm890
    %v892 = vsel %vm891, %v883, %v888
    %v893 = vmul.f32 %v859, %v882
    %v894 = vmul.f32 %v860, %v892
    %v896 = vperm.slane %v849, 0
    %v898 = vmul.f32 %v893, %v896
    %v899 = vmul.f32 %v894, %v896
    %v901 = vperm.slane %v850, 0
    %v903 = vadd.f32 %v898, %v901
    %v904 = vadd.f32 %v899, %v901
    %v905 = vld [vmem:[%s12] sm:$0xff]
    %v906 = vld [vmem:[%s12 + $0x8] sm:$0xff]
    %v907 = vld [vmem:[%s12 + $0x10] sm:$0xff]
    %v908 = vld [vmem:[%s12 + $0x18] sm:$0xff]
    %v909 = vld [vmem:[%s13] sm:$0x1]
    %v911 = vperm.slane %v909, 0
    %v914 = vsel %vm127, %v903, 0
    %v917 = vsel %vm127, %v904, 0
    %919 = vmatpush.msra.mxu0 0.0
    %920 = vmatpush.msra.mxu0 0.0
    %921 = vmatpush.msra.mxu0 0.0
    %922 = vmatpush.msra.mxu0 0.0
    %923 = vmatpush.msra.mxu0 0.0
    %924 = vmatpush.msra.mxu0 0.0
    %925 = vmatpush.msra.mxu0 0.0
    %926 = vmatpush.msra.mxu0 0.0
    %927 = vmatpush.msra.mxu0 0.0
    %928 = vmatpush.msra.mxu0 0.0
    %929 = vmatpush.msra.mxu0 0.0
    %930 = vmatpush.msra.mxu0 0.0
    %931 = vmatpush.msra.mxu0 %v908
    %932 = vmatpush.msra.mxu0 %v907
    %933 = vmatpush.msra.mxu0 %v906
    %934 = vmatpush.msra.mxu0 %v905
    %935 = vmatmul.f32.gmra.mxu0 %v914
    %v936 = vpop.f32.mrf.mxu0
    %v937 = vadd.f32 %v911, %v936
    %938 = vmatmul.f32.gmra.mxu0 %v917
    %v939 = vpop.f32.mrf.mxu0
    %v940 = vadd.f32 %v911, %v939
    %941 = vdwg.mxu0
    %v942 = vmul.f32 %v937, 0.5
    %v943 = vmul.f32 %v940, 0.5
    %v944 = vmul.f32 %v937, 0.044715
    %v945 = vmul.f32 %v940, 0.044715
    %v946 = vmul.f32 %v944, %v937
    %v947 = vmul.f32 %v945, %v940
    %v948 = vmul.f32 %v946, %v937
    %v949 = vmul.f32 %v947, %v940
    %v950 = vadd.f32 %v937, %v948
    %v951 = vadd.f32 %v940, %v949
    %v952 = vmul.f32 %v950, 0.7978846
    %v953 = vmul.f32 %v951, 0.7978846
    %v954 = vtanh.pop %v952
    %v955 = vtanh.pop %v953
    %v956 = vadd.f32 %v954, 1.0
    %v957 = vadd.f32 %v955, 1.0
    %v958 = vmul.f32 %v942, %v956
    %v959 = vmul.f32 %v943, %v957
    %v960 = vld [vmem:[%s14] sm:$0xff]
    %v961 = vld [vmem:[%s14 + $0x8] sm:$0xff]
    %v962 = vld [vmem:[%s14 + $0x10] sm:$0xff]
    %v963 = vld [vmem:[%s14 + $0x18] sm:$0xff]
    %v964 = vld [vmem:[%s14 + $0x20] sm:$0xff]
    %v965 = vld [vmem:[%s14 + $0x28] sm:$0xff]
    %v966 = vld [vmem:[%s14 + $0x30] sm:$0xff]
    %v967 = vld [vmem:[%s14 + $0x38] sm:$0xff]
    %v968 = vld [vmem:[%s15] sm:$0x1]
    %v970 = vperm.slane %v968, 0
    %v973 = vsel %vm95, %v958, 0
    %v976 = vsel %vm95, %v959, 0
    %978 = vmatpush.msra.mxu0 0.0
    %979 = vmatpush.msra.mxu0 0.0
    %980 = vmatpush.msra.mxu0 0.0
    %981 = vmatpush.msra.mxu0 0.0
    %982 = vmatpush.msra.mxu0 0.0
    %983 = vmatpush.msra.mxu0 0.0
    %984 = vmatpush.msra.mxu0 0.0
    %985 = vmatpush.msra.mxu0 0.0
    %986 = vmatpush.msra.mxu0 %v967
    %987 = vmatpush.msra.mxu0 %v966
    %988 = vmatpush.msra.mxu0 %v965
    %989 = vmatpush.msra.mxu0 %v964
    %990 = vmatpush.msra.mxu0 %v963
    %991 = vmatpush.msra.mxu0 %v962
    %992 = vmatpush.msra.mxu0 %v961
    %993 = vmatpush.msra.mxu0 %v960
    %994 = vmatmul.f32.gmra.mxu0 %v973
    %v995 = vpop.f32.mrf.mxu0
    %v996 = vadd.f32 %v970, %v995
    %997 = vmatmul.f32.gmra.mxu0 %v976
    %v998 = vpop.f32.mrf.mxu0
    %v999 = vadd.f32 %v970, %v998
    %1000 = vdwg.mxu0
    %v1001 = vadd.f32 %v903, %v996
    %v1002 = vadd.f32 %v904, %v999
    %v1003 = vld [vmem:[%s18] sm:$0x1]
    %v1004 = vld [vmem:[%s19] sm:$0x1]
    %v1005 = vsel %vm127, %v1001, 0.0
    %1006 = vadd.xlane.f32.xlu0 %v1005
    %v1007 = vpop.xlane.xlu0 %1006
    %v1008 = vsel %vm127, %v1002, 0.0
    %1009 = vadd.xlane.f32.xlu0 %v1008
    %v1010 = vpop.xlane.xlu0 %1009
    %v1011 = vmul.f32 %v1007, %v140
    %v1012 = vmul.f32 %v1010, %v140
    %v1013 = vsub.f32 %v1001, %v1011
    %v1014 = vsub.f32 %v1002, %v1012
    %v1015 = vmul.f32 %v1013, %v1013
    %v1016 = vmul.f32 %v1014, %v1014
    %v1017 = vsel %vm127, %v1015, 0.0
    %1018 = vadd.xlane.f32.xlu0 %v1017
    %v1019 = vpop.xlane.xlu0 %1018
    %v1020 = vsel %vm127, %v1016, 0.0
    %1021 = vadd.xlane.f32.xlu0 %v1020
    %v1022 = vpop.xlane.xlu0 %1021
    %v1023 = vmul.f32 %v1019, %v140
    %v1024 = vmul.f32 %v1022, %v140
    %v1025 = vadd.f32 %v1023, 1e-05
    %v1026 = vadd.f32 %v1024, 1e-05
    %v1027 = vrsqrt.pop %v1025
    %v1028 = vmul.f32 %v1027, %v1025
    %v1029 = vmul.f32 %v1028, %v1027
    %v1030 = vmul.f32 0.5, %v1029
    %v1031 = vsub.f32 1.5, %v1030
    %v1032 = vmul.f32 %v1027, %v1031
    %vm1033 = vweird.f32 %v1025
    %vm1034 = vweird.f32 %v1027
    %vm1035 = vmor %vm1033, %vm1034
    %v1036 = vsel %vm1035, %v1027, %v1032
    %v1037 = vrsqrt.pop %v1026
    %v1038 = vmul.f32 %v1037, %v1026
    %v1039 = vmul.f32 %v1038, %v1037
    %v1040 = vmul.f32 0.5, %v1039
    %v1041 = vsub.f32 1.5, %v1040
    %v1042 = vmul.f32 %v1037, %v1041
    %vm1043 = vweird.f32 %v1026
    %vm1044 = vweird.f32 %v1037
    %vm1045 = vmor %vm1043, %vm1044
    %v1046 = vsel %vm1045, %v1037, %v1042
    %v1047 = vmul.f32 %v1013, %v1036
    %v1048 = vmul.f32 %v1014, %v1046
    %v1050 = vperm.slane %v1003, 0
    %v1052 = vmul.f32 %v1047, %v1050
    %v1053 = vmul.f32 %v1048, %v1050
    %v1055 = vperm.slane %v1004, 0
    %v1057 = vadd.f32 %v1052, %v1055
    %v1058 = vadd.f32 %v1053, %v1055
    %s1059 = scalar_lea.vmem %s8, 32
    %v1060 = vld [vmem:[%s1059] sm:$0xff]
    %v1061 = vld [vmem:[%s1059 + $0x8] sm:$0xff]
    %v1062 = vld [vmem:[%s1059 + $0x10] sm:$0xff]
    %v1063 = vld [vmem:[%s1059 + $0x18] sm:$0xff]
    %s1064 = scalar_lea.vmem %s9, 1
    %v1065 = vld [vmem:[%s1064] sm:$0x1]
    %v1067 = vperm.slane %v1065, 0
    %v1070 = vsel %vm127, %v1057, 0
    %v1073 = vsel %vm127, %v1058, 0
    %1075 = vmatpush.msra.mxu0 0.0
    %1076 = vmatpush.msra.mxu0 0.0
    %1077 = vmatpush.msra.mxu0 0.0
    %1078 = vmatpush.msra.mxu0 0.0
    %1079 = vmatpush.msra.mxu0 0.0
    %1080 = vmatpush.msra.mxu0 0.0
    %1081 = vmatpush.msra.mxu0 0.0
    %1082 = vmatpush.msra.mxu0 0.0
    %1083 = vmatpush.msra.mxu0 0.0
    %1084 = vmatpush.msra.mxu0 0.0
    %1085 = vmatpush.msra.mxu0 0.0
    %1086 = vmatpush.msra.mxu0 0.0
    %1087 = vmatpush.msra.mxu0 %v1063
    %1088 = vmatpush.msra.mxu0 %v1062
    %1089 = vmatpush.msra.mxu0 %v1061
    %1090 = vmatpush.msra.mxu0 %v1060
    %1091 = vmatmul.f32.gmra.mxu0 %v1070
    %v1092 = vpop.f32.mrf.mxu0
    %v1093 = vadd.f32 %v1067, %v1092
    %1094 = vmatmul.f32.gmra.mxu0 %v1073
    %v1095 = vpop.f32.mrf.mxu0
    %v1096 = vadd.f32 %v1067, %v1095
    %1097 = vdwg.mxu0
    %1099 = vrot.lane.b32.xlu0 %v1093, 96
    %v1100 = vpop.permute.xlu0 %1099
    %v1101 = vsel %vm246, %v1093, 0
    %v1103 = vsel %vm246, %v1100, 0
    %1105 = vmatpush.xpose.msra.mxu0 0.0
    %1106 = vmatpush.xpose.msra.mxu0 0.0
    %1107 = vmatpush.xpose.msra.mxu0 0.0
    %1108 = vmatpush.xpose.msra.mxu0 0.0
    %1109 = vmatpush.xpose.msra.mxu0 0.0
    %1110 = vmatpush.xpose.msra.mxu0 0.0
    %1111 = vmatpush.xpose.msra.mxu0 0.0
    %1112 = vmatpush.xpose.msra.mxu0 0.0
    %1113 = vmatpush.xpose.msra.mxu0 0.0
    %1114 = vmatpush.xpose.msra.mxu0 0.0
    %1115 = vmatpush.xpose.msra.mxu0 0.0
    %1116 = vmatpush.xpose.msra.mxu0 0.0
    %1117 = vmatpush.xpose.msra.mxu0 0.0
    %1118 = vmatpush.xpose.msra.mxu0 0.0
    %1119 = vmatpush.xpose.msra.mxu0 0.0
    %1120 = vmatpush.xpose.msra.mxu0 %v1103
    %1121 = vmatmul.f32.gmra.mxu0 %v1101
    %v1122 = vpop.f32.mrf.mxu0
    %v1123 = vadd.f32 0.0, %v1122
    %1124 = vdwg.mxu0
    %v1125 = vmul.f32 %v1123, 0.35355338
    %v1126 = vadd.f32 %v1125, %v201
    %v1127 = vsel %vm246, %v1126, -inf
    %1128 = vmax.xlane.f32.xlu0 %v1127
    %v1129 = vpop.xlane.xlu0 %1128
    %v1130 = vsub.f32 %v1126, %v1129
    %v1131 = vmul.f32 %v1130, 1.442695
    %v1132 = vpow.pop %v1131
    %v1133 = vsel %vm246, %v1132, 0.0
    %1134 = vadd.xlane.f32.xlu0 %v1133
    %v1135 = vpop.xlane.xlu0 %1134
    %v1136 = vrcp.pop %v1135
    %v1137 = vmul.f32 %v1132, %v1136
    %1138 = vrot.lane.b32.xlu0 %v1093, 64
    %v1139 = vpop.permute.xlu0 %1138
    %v1142 = vsel %vm246, %v1137, 0
    %1144 = vmatpush.msra.mxu0 0.0
    %1145 = vmatpush.msra.mxu0 0.0
    %1146 = vmatpush.msra.mxu0 0.0
    %1147 = vmatpush.msra.mxu0 0.0
    %1148 = vmatpush.msra.mxu0 0.0
    %1149 = vmatpush.msra.mxu0 0.0
    %1150 = vmatpush.msra.mxu0 0.0
    %1151 = vmatpush.msra.mxu0 0.0
    %1152 = vmatpush.msra.mxu0 0.0
    %1153 = vmatpush.msra.mxu0 0.0
    %1154 = vmatpush.msra.mxu0 0.0
    %1155 = vmatpush.msra.mxu0 0.0
    %1156 = vmatpush.msra.mxu0 0.0
    %1157 = vmatpush.msra.mxu0 0.0
    %1158 = vmatpush.msra.mxu0 0.0
    %1159 = vmatpush.msra.mxu0 %v1139
    %1160 = vmatmul.f32.gmra.mxu0 %v1142
    %v1161 = vpop.f32.mrf.mxu0
    %v1162 = vadd.f32 0.0, %v1161
    %1163 = vdwg.mxu0
    %1164 = vrot.lane.b32.xlu0 %v1093, 120
    %v1165 = vpop.permute.xlu0 %1164
    %1166 = vrot.lane.b32.xlu0 %v1093, 88
    %v1167 = vpop.permute.xlu0 %1166
    %v1168 = vsel %vm246, %v1165, 0
    %v1170 = vsel %vm246, %v1167, 0
    %1172 = vmatpush.xpose.msra.mxu0 0.0
    %1173 = vmatpush.xpose.msra.mxu0 0.0
    %1174 = vmatpush.xpose.msra.mxu0 0.0
    %1175 = vmatpush.xpose.msra.mxu0 0.0
    %1176 = vmatpush.xpose.msra.mxu0 0.0
    %1177 = vmatpush.xpose.msra.mxu0 0.0
    %1178 = vmatpush.xpose.msra.mxu0 0.0
    %1179 = vmatpush.xpose.msra.mxu0 0.0
    %1180 = vmatpush.xpose.msra.mxu0 0.0
    %1181 = vmatpush.xpose.msra.mxu0 0.0
    %1182 = vmatpush.xpose.msra.mxu0 0.0
    %1183 = vmatpush.xpose.msra.mxu0 0.0
    %1184 = vmatpush.xpose.msra.mxu0 0.0
    %1185 = vmatpush.xpose.msra.mxu0 0.0
    %1186 = vmatpush.xpose.msra.mxu0 0.0
    %1187 = vmatpush.xpose.msra.mxu0 %v1170
    %1188 = vmatmul.f32.gmra.mxu0 %v1168
    %v1189 = vpop.f32.mrf.mxu0
    %v1190 = vadd.f32 0.0, %v1189
    %1191 = vdwg.mxu0
    %v1192 = vmul.f32 %v1190, 0.35355338
    %v1193 = vadd.f32 %v1192, %v201
    %v1194 = vsel %vm246, %v1193, -inf
    %1195 = vmax.xlane.f32.xlu0 %v1194
    %v1196 = vpop.xlane.xlu0 %1195
    %v1197 = vsub.f32 %v1193, %v1196
    %v1198 = vmul.f32 %v1197, 1.442695
    %v1199 = vpow.pop %v1198
    %v1200 = vsel %vm246, %v1199, 0.0
    %1201 = vadd.xlane.f32.xlu0 %v1200
    %v1202 = vpop.xlane.xlu0 %1201
    %v1203 = vrcp.pop %v1202
    %v1204 = vmul.f32 %v1199, %v1203
    %1205 = vrot.lane.b32.xlu0 %v1093, 56
    %v1206 = vpop.permute.xlu0 %1205
    %v1209 = vsel %vm246, %v1204, 0
    %1211 = vmatpush.msra.mxu0 0.0
    %1212 = vmatpush.msra.mxu0 0.0
    %1213 = vmatpush.msra.mxu0 0.0
    %1214 = vmatpush.msra.mxu0 0.0
    %1215 = vmatpush.msra.mxu0 0.0
    %1216 = vmatpush.msra.mxu0 0.0
    %1217 = vmatpush.msra.mxu0 0.0
    %1218 = vmatpush.msra.mxu0 0.0
    %1219 = vmatpush.msra.mxu0 0.0
    %1220 = vmatpush.msra.mxu0 0.0
    %1221 = vmatpush.msra.mxu0 0.0
    %1222 = vmatpush.msra.mxu0 0.0
    %1223 = vmatpush.msra.mxu0 0.0
    %1224 = vmatpush.msra.mxu0 0.0
    %1225 = vmatpush.msra.mxu0 0.0
    %1226 = vmatpush.msra.mxu0 %v1206
    %1227 = vmatmul.f32.gmra.mxu0 %v1209
    %v1228 = vpop.f32.mrf.mxu0
    %v1229 = vadd.f32 0.0, %v1228
    %1230 = vdwg.mxu0
    %1231 = vrot.lane.b32.xlu0 %v1093, 112
    %v1232 = vpop.permute.xlu0 %1231
    %1233 = vrot.lane.b32.xlu0 %v1093, 80
    %v1234 = vpop.permute.xlu0 %1233
    %v1235 = vsel %vm246, %v1232, 0
    %v1237 = vsel %vm246, %v1234, 0
    %1239 = vmatpush.xpose.msra.mxu0 0.0
    %1240 = vmatpush.xpose.msra.mxu0 0.0
    %1241 = vmatpush.xpose.msra.mxu0 0.0
    %1242 = vmatpush.xpose.msra.mxu0 0.0
    %1243 = vmatpush.xpose.msra.mxu0 0.0
    %1244 = vmatpush.xpose.msra.mxu0 0.0
    %1245 = vmatpush.xpose.msra.mxu0 0.0
    %1246 = vmatpush.xpose.msra.mxu0 0.0
    %1247 = vmatpush.xpose.msra.mxu0 0.0
    %1248 = vmatpush.xpose.msra.mxu0 0.0
    %1249 = vmatpush.xpose.msra.mxu0 0.0
    %1250 = vmatpush.xpose.msra.mxu0 0.0
    %1251 = vmatpush.xpose.msra.mxu0 0.0
    %1252 = vmatpush.xpose.msra.mxu0 0.0
    %1253 = vmatpush.xpose.msra.mxu0 0.0
    %1254 = vmatpush.xpose.msra.mxu0 %v1237
    %1255 = vmatmul.f32.gmra.mxu0 %v1235
    %v1256 = vpop.f32.mrf.mxu0
    %v1257 = vadd.f32 0.0, %v1256
    %1258 = vdwg.mxu0
    %v1259 = vmul.f32 %v1257, 0.35355338
    %v1260 = vadd.f32 %v1259, %v201
    %v1261 = vsel %vm246, %v1260, -inf
    %1262 = vmax.xlane.f32.xlu0 %v1261
    %v1263 = vpop.xlane.xlu0 %1262
    %v1264 = vsub.f32 %v1260, %v1263
    %v1265 = vmul.f32 %v1264, 1.442695
    %v1266 = vpow.pop %v1265
    %v1267 = vsel %vm246, %v1266, 0.0
    %1268 = vadd.xlane.f32.xlu0 %v1267
    %v1269 = vpop.xlane.xlu0 %1268
    %v1270 = vrcp.pop %v1269
    %v1271 = vmul.f32 %v1266, %v1270
    %1272 = vrot.lane.b32.xlu0 %v1093, 48
    %v1273 = vpop.permute.xlu0 %1272
    %v1276 = vsel %vm246, %v1271, 0
    %1278 = vmatpush.msra.mxu0 0.0
    %1279 = vmatpush.msra.mxu0 0.0
    %1280 = vmatpush.msra.mxu0 0.0
    %1281 = vmatpush.msra.mxu0 0.0
    %1282 = vmatpush.msra.mxu0 0.0
    %1283 = vmatpush.msra.mxu0 0.0
    %1284 = vmatpush.msra.mxu0 0.0
    %1285 = vmatpush.msra.mxu0 0.0
    %1286 = vmatpush.msra.mxu0 0.0
    %1287 = vmatpush.msra.mxu0 0.0
    %1288 = vmatpush.msra.mxu0 0.0
    %1289 = vmatpush.msra.mxu0 0.0
    %1290 = vmatpush.msra.mxu0 0.0
    %1291 = vmatpush.msra.mxu0 0.0
    %1292 = vmatpush.msra.mxu0 0.0
    %1293 = vmatpush.msra.mxu0 %v1273
    %1294 = vmatmul.f32.gmra.mxu0 %v1276
    %v1295 = vpop.f32.mrf.mxu0
    %v1296 = vadd.f32 0.0, %v1295
    %1297 = vdwg.mxu0
    %1298 = vrot.lane.b32.xlu0 %v1093, 104
    %v1299 = vpop.permute.xlu0 %1298
    %1300 = vrot.lane.b32.xlu0 %v1093, 72
    %v1301 = vpop.permute.xlu0 %1300
    %v1302 = vsel %vm246, %v1299, 0
    %v1304 = vsel %vm246, %v1301, 0
    %1306 = vmatpush.xpose.msra.mxu0 0.0
    %1307 = vmatpush.xpose.msra.mxu0 0.0
    %1308 = vmatpush.xpose.msra.mxu0 0.0
    %1309 = vmatpush.xpose.msra.mxu0 0.0
    %1310 = vmatpush.xpose.msra.mxu0 0.0
    %1311 = vmatpush.xpose.msra.mxu0 0.0
    %1312 = vmatpush.xpose.msra.mxu0 0.0
    %1313 = vmatpush.xpose.msra.mxu0 0.0
    %1314 = vmatpush.xpose.msra.mxu0 0.0
    %1315 = vmatpush.xpose.msra.mxu0 0.0
    %1316 = vmatpush.xpose.msra.mxu0 0.0
    %1317 = vmatpush.xpose.msra.mxu0 0.0
    %1318 = vmatpush.xpose.msra.mxu0 0.0
    %1319 = vmatpush.xpose.msra.mxu0 0.0
    %1320 = vmatpush.xpose.msra.mxu0 0.0
    %1321 = vmatpush.xpose.msra.mxu0 %v1304
    %1322 = vmatmul.f32.gmra.mxu0 %v1302
    %v1323 = vpop.f32.mrf.mxu0
    %v1324 = vadd.f32 0.0, %v1323
    %1325 = vdwg.mxu0
    %v1326 = vmul.f32 %v1324, 0.35355338
    %v1327 = vadd.f32 %v1326, %v201
    %v1328 = vsel %vm246, %v1327, -inf
    %1329 = vmax.xlane.f32.xlu0 %v1328
    %v1330 = vpop.xlane.xlu0 %1329
    %v1331 = vsub.f32 %v1327, %v1330
    %v1332 = vmul.f32 %v1331, 1.442695
    %v1333 = vpow.pop %v1332
    %v1334 = vsel %vm246, %v1333, 0.0
    %1335 = vadd.xlane.f32.xlu0 %v1334
    %v1336 = vpop.xlane.xlu0 %1335
    %v1337 = vrcp.pop %v1336
    %v1338 = vmul.f32 %v1333, %v1337
    %1339 = vrot.lane.b32.xlu0 %v1093, 40
    %v1340 = vpop.permute.xlu0 %1339
    %v1343 = vsel %vm246, %v1338, 0
    %1345 = vmatpush.msra.mxu0 0.0
    %1346 = vmatpush.msra.mxu0 0.0
    %1347 = vmatpush.msra.mxu0 0.0
    %1348 = vmatpush.msra.mxu0 0.0
    %1349 = vmatpush.msra.mxu0 0.0
    %1350 = vmatpush.msra.mxu0 0.0
    %1351 = vmatpush.msra.mxu0 0.0
    %1352 = vmatpush.msra.mxu0 0.0
    %1353 = vmatpush.msra.mxu0 0.0
    %1354 = vmatpush.msra.mxu0 0.0
    %1355 = vmatpush.msra.mxu0 0.0
    %1356 = vmatpush.msra.mxu0 0.0
    %1357 = vmatpush.msra.mxu0 0.0
    %1358 = vmatpush.msra.mxu0 0.0
    %1359 = vmatpush.msra.mxu0 0.0
    %1360 = vmatpush.msra.mxu0 %v1340
    %1361 = vmatmul.f32.gmra.mxu0 %v1343
    %v1362 = vpop.f32.mrf.mxu0
    %v1363 = vadd.f32 0.0, %v1362
    %1364 = vdwg.mxu0
    %1366 = vrot.lane.b32.xlu0 %v1229, 8
    %v1367 = vpop.permute.xlu0 %1366
    %1370 = vrot.lane.b32.xlu0 %v1296, 16
    %v1371 = vpop.permute.xlu0 %1370
    %1374 = vrot.lane.b32.xlu0 %v1363, 24
    %v1375 = vpop.permute.xlu0 %1374
    %v1377 = vsel %vm246, %v1162, %v1367
    %v1378 = vsel %vm524, %v1377, %v1371
    %v1379 = vsel %vm526, %v1378, %v1375
    %1381 = vrot.lane.b32.xlu0 %v1096, 96
    %v1382 = vpop.permute.xlu0 %1381
    %v1383 = vsel %vm246, %v1096, 0
    %v1385 = vsel %vm246, %v1382, 0
    %1387 = vmatpush.xpose.msra.mxu0 0.0
    %1388 = vmatpush.xpose.msra.mxu0 0.0
    %1389 = vmatpush.xpose.msra.mxu0 0.0
    %1390 = vmatpush.xpose.msra.mxu0 0.0
    %1391 = vmatpush.xpose.msra.mxu0 0.0
    %1392 = vmatpush.xpose.msra.mxu0 0.0
    %1393 = vmatpush.xpose.msra.mxu0 0.0
    %1394 = vmatpush.xpose.msra.mxu0 0.0
    %1395 = vmatpush.xpose.msra.mxu0 0.0
    %1396 = vmatpush.xpose.msra.mxu0 0.0
    %1397 = vmatpush.xpose.msra.mxu0 0.0
    %1398 = vmatpush.xpose.msra.mxu0 0.0
    %1399 = vmatpush.xpose.msra.mxu0 0.0
    %1400 = vmatpush.xpose.msra.mxu0 0.0
    %1401 = vmatpush.xpose.msra.mxu0 0.0
    %1402 = vmatpush.xpose.msra.mxu0 %v1385
    %1403 = vmatmul.f32.gmra.mxu0 %v1383
    %v1404 = vpop.f32.mrf.mxu0
    %v1405 = vadd.f32 0.0, %v1404
    %1406 = vdwg.mxu0
    %v1407 = vmul.f32 %v1405, 0.35355338
    %v1408 = vadd.f32 %v1407, %v205
    %v1409 = vsel %vm246, %v1408, -inf
    %1410 = vmax.xlane.f32.xlu0 %v1409
    %v1411 = vpop.xlane.xlu0 %1410
    %v1412 = vsub.f32 %v1408, %v1411
    %v1413 = vmul.f32 %v1412, 1.442695
    %v1414 = vpow.pop %v1413
    %v1415 = vsel %vm246, %v1414, 0.0
    %1416 = vadd.xlane.f32.xlu0 %v1415
    %v1417 = vpop.xlane.xlu0 %1416
    %v1418 = vrcp.pop %v1417
    %v1419 = vmul.f32 %v1414, %v1418
    %1420 = vrot.lane.b32.xlu0 %v1096, 64
    %v1421 = vpop.permute.xlu0 %1420
    %v1424 = vsel %vm246, %v1419, 0
    %1426 = vmatpush.msra.mxu0 0.0
    %1427 = vmatpush.msra.mxu0 0.0
    %1428 = vmatpush.msra.mxu0 0.0
    %1429 = vmatpush.msra.mxu0 0.0
    %1430 = vmatpush.msra.mxu0 0.0
    %1431 = vmatpush.msra.mxu0 0.0
    %1432 = vmatpush.msra.mxu0 0.0
    %1433 = vmatpush.msra.mxu0 0.0
    %1434 = vmatpush.msra.mxu0 0.0
    %1435 = vmatpush.msra.mxu0 0.0
    %1436 = vmatpush.msra.mxu0 0.0
    %1437 = vmatpush.msra.mxu0 0.0
    %1438 = vmatpush.msra.mxu0 0.0
    %1439 = vmatpush.msra.mxu0 0.0
    %1440 = vmatpush.msra.mxu0 0.0
    %1441 = vmatpush.msra.mxu0 %v1421
    %1442 = vmatmul.f32.gmra.mxu0 %v1424
    %v1443 = vpop.f32.mrf.mxu0
    %v1444 = vadd.f32 0.0, %v1443
    %1445 = vdwg.mxu0
    %1446 = vrot.lane.b32.xlu0 %v1096, 120
    %v1447 = vpop.permute.xlu0 %1446
    %1448 = vrot.lane.b32.xlu0 %v1096, 88
    %v1449 = vpop.permute.xlu0 %1448
    %v1450 = vsel %vm246, %v1447, 0
    %v1452 = vsel %vm246, %v1449, 0
    %1454 = vmatpush.xpose.msra.mxu0 0.0
    %1455 = vmatpush.xpose.msra.mxu0 0.0
    %1456 = vmatpush.xpose.msra.mxu0 0.0
    %1457 = vmatpush.xpose.msra.mxu0 0.0
    %1458 = vmatpush.xpose.msra.mxu0 0.0
    %1459 = vmatpush.xpose.msra.mxu0 0.0
    %1460 = vmatpush.xpose.msra.mxu0 0.0
    %1461 = vmatpush.xpose.msra.mxu0 0.0
    %1462 = vmatpush.xpose.msra.mxu0 0.0
    %1463 = vmatpush.xpose.msra.mxu0 0.0
    %1464 = vmatpush.xpose.msra.mxu0 0.0
    %1465 = vmatpush.xpose.msra.mxu0 0.0
    %1466 = vmatpush.xpose.msra.mxu0 0.0
    %1467 = vmatpush.xpose.msra.mxu0 0.0
    %1468 = vmatpush.xpose.msra.mxu0 0.0
    %1469 = vmatpush.xpose.msra.mxu0 %v1452
    %1470 = vmatmul.f32.gmra.mxu0 %v1450
    %v1471 = vpop.f32.mrf.mxu0
    %v1472 = vadd.f32 0.0, %v1471
    %1473 = vdwg.mxu0
    %v1474 = vmul.f32 %v1472, 0.35355338
    %v1475 = vadd.f32 %v1474, %v205
    %v1476 = vsel %vm246, %v1475, -inf
    %1477 = vmax.xlane.f32.xlu0 %v1476
    %v1478 = vpop.xlane.xlu0 %1477
    %v1479 = vsub.f32 %v1475, %v1478
    %v1480 = vmul.f32 %v1479, 1.442695
    %v1481 = vpow.pop %v1480
    %v1482 = vsel %vm246, %v1481, 0.0
    %1483 = vadd.xlane.f32.xlu0 %v1482
    %v1484 = vpop.xlane.xlu0 %1483
    %v1485 = vrcp.pop %v1484
    %v1486 = vmul.f32 %v1481, %v1485
    %1487 = vrot.lane.b32.xlu0 %v1096, 56
    %v1488 = vpop.permute.xlu0 %1487
    %v1491 = vsel %vm246, %v1486, 0
    %1493 = vmatpush.msra.mxu0 0.0
    %1494 = vmatpush.msra.mxu0 0.0
    %1495 = vmatpush.msra.mxu0 0.0
    %1496 = vmatpush.msra.mxu0 0.0
    %1497 = vmatpush.msra.mxu0 0.0
    %1498 = vmatpush.msra.mxu0 0.0
    %1499 = vmatpush.msra.mxu0 0.0
    %1500 = vmatpush.msra.mxu0 0.0
    %1501 = vmatpush.msra.mxu0 0.0
    %1502 = vmatpush.msra.mxu0 0.0
    %1503 = vmatpush.msra.mxu0 0.0
    %1504 = vmatpush.msra.mxu0 0.0
    %1505 = vmatpush.msra.mxu0 0.0
    %1506 = vmatpush.msra.mxu0 0.0
    %1507 = vmatpush.msra.mxu0 0.0
    %1508 = vmatpush.msra.mxu0 %v1488
    %1509 = vmatmul.f32.gmra.mxu0 %v1491
    %v1510 = vpop.f32.mrf.mxu0
    %v1511 = vadd.f32 0.0, %v1510
    %1512 = vdwg.mxu0
    %1513 = vrot.lane.b32.xlu0 %v1096, 112
    %v1514 = vpop.permute.xlu0 %1513
    %1515 = vrot.lane.b32.xlu0 %v1096, 80
    %v1516 = vpop.permute.xlu0 %1515
    %v1517 = vsel %vm246, %v1514, 0
    %v1519 = vsel %vm246, %v1516, 0
    %1521 = vmatpush.xpose.msra.mxu0 0.0
    %1522 = vmatpush.xpose.msra.mxu0 0.0
    %1523 = vmatpush.xpose.msra.mxu0 0.0
    %1524 = vmatpush.xpose.msra.mxu0 0.0
    %1525 = vmatpush.xpose.msra.mxu0 0.0
    %1526 = vmatpush.xpose.msra.mxu0 0.0
    %1527 = vmatpush.xpose.msra.mxu0 0.0
    %1528 = vmatpush.xpose.msra.mxu0 0.0
    %1529 = vmatpush.xpose.msra.mxu0 0.0
    %1530 = vmatpush.xpose.msra.mxu0 0.0
    %1531 = vmatpush.xpose.msra.mxu0 0.0
    %1532 = vmatpush.xpose.msra.mxu0 0.0
    %1533 = vmatpush.xpose.msra.mxu0 0.0
    %1534 = vmatpush.xpose.msra.mxu0 0.0
    %1535 = vmatpush.xpose.msra.mxu0 0.0
    %1536 = vmatpush.xpose.msra.mxu0 %v1519
    %1537 = vmatmul.f32.gmra.mxu0 %v1517
    %v1538 = vpop.f32.mrf.mxu0
    %v1539 = vadd.f32 0.0, %v1538
    %1540 = vdwg.mxu0
    %v1541 = vmul.f32 %v1539, 0.35355338
    %v1542 = vadd.f32 %v1541, %v205
    %v1543 = vsel %vm246, %v1542, -inf
    %1544 = vmax.xlane.f32.xlu0 %v1543
    %v1545 = vpop.xlane.xlu0 %1544
    %v1546 = vsub.f32 %v1542, %v1545
    %v1547 = vmul.f32 %v1546, 1.442695
    %v1548 = vpow.pop %v1547
    %v1549 = vsel %vm246, %v1548, 0.0
    %1550 = vadd.xlane.f32.xlu0 %v1549
    %v1551 = vpop.xlane.xlu0 %1550
    %v1552 = vrcp.pop %v1551
    %v1553 = vmul.f32 %v1548, %v1552
    %1554 = vrot.lane.b32.xlu0 %v1096, 48
    %v1555 = vpop.permute.xlu0 %1554
    %v1558 = vsel %vm246, %v1553, 0
    %1560 = vmatpush.msra.mxu0 0.0
    %1561 = vmatpush.msra.mxu0 0.0
    %1562 = vmatpush.msra.mxu0 0.0
    %1563 = vmatpush.msra.mxu0 0.0
    %1564 = vmatpush.msra.mxu0 0.0
    %1565 = vmatpush.msra.mxu0 0.0
    %1566 = vmatpush.msra.mxu0 0.0
    %1567 = vmatpush.msra.mxu0 0.0
    %1568 = vmatpush.msra.mxu0 0.0
    %1569 = vmatpush.msra.mxu0 0.0
    %1570 = vmatpush.msra.mxu0 0.0
    %1571 = vmatpush.msra.mxu0 0.0
    %1572 = vmatpush.msra.mxu0 0.0
    %1573 = vmatpush.msra.mxu0 0.0
    %1574 = vmatpush.msra.mxu0 0.0
    %1575 = vmatpush.msra.mxu0 %v1555
    %1576 = vmatmul.f32.gmra.mxu0 %v1558
    %v1577 = vpop.f32.mrf.mxu0
    %v1578 = vadd.f32 0.0, %v1577
    %1579 = vdwg.mxu0
    %1580 = vrot.lane.b32.xlu0 %v1096, 104
    %v1581 = vpop.permute.xlu0 %1580
    %1582 = vrot.lane.b32.xlu0 %v1096, 72
    %v1583 = vpop.permute.xlu0 %1582
    %v1584 = vsel %vm246, %v1581, 0
    %v1586 = vsel %vm246, %v1583, 0
    %1588 = vmatpush.xpose.msra.mxu0 0.0
    %1589 = vmatpush.xpose.msra.mxu0 0.0
    %1590 = vmatpush.xpose.msra.mxu0 0.0
    %1591 = vmatpush.xpose.msra.mxu0 0.0
    %1592 = vmatpush.xpose.msra.mxu0 0.0
    %1593 = vmatpush.xpose.msra.mxu0 0.0
    %1594 = vmatpush.xpose.msra.mxu0 0.0
    %1595 = vmatpush.xpose.msra.mxu0 0.0
    %1596 = vmatpush.xpose.msra.mxu0 0.0
    %1597 = vmatpush.xpose.msra.mxu0 0.0
    %1598 = vmatpush.xpose.msra.mxu0 0.0
    %1599 = vmatpush.xpose.msra.mxu0 0.0
    %1600 = vmatpush.xpose.msra.mxu0 0.0
    %1601 = vmatpush.xpose.msra.mxu0 0.0
    %1602 = vmatpush.xpose.msra.mxu0 0.0
    %1603 = vmatpush.xpose.msra.mxu0 %v1586
    %1604 = vmatmul.f32.gmra.mxu0 %v1584
    %v1605 = vpop.f32.mrf.mxu0
    %v1606 = vadd.f32 0.0, %v1605
    %1607 = vdwg.mxu0
    %v1608 = vmul.f32 %v1606, 0.35355338
    %v1609 = vadd.f32 %v1608, %v205
    %v1610 = vsel %vm246, %v1609, -inf
    %1611 = vmax.xlane.f32.xlu0 %v1610
    %v1612 = vpop.xlane.xlu0 %1611
    %v1613 = vsub.f32 %v1609, %v1612
    %v1614 = vmul.f32 %v1613, 1.442695
    %v1615 = vpow.pop %v1614
    %v1616 = vsel %vm246, %v1615, 0.0
    %1617 = vadd.xlane.f32.xlu0 %v1616
    %v1618 = vpop.xlane.xlu0 %1617
    %v1619 = vrcp.pop %v1618
    %v1620 = vmul.f32 %v1615, %v1619
    %1621 = vrot.lane.b32.xlu0 %v1096, 40
    %v1622 = vpop.permute.xlu0 %1621
    %v1625 = vsel %vm246, %v1620, 0
    %1627 = vmatpush.msra.mxu0 0.0
    %1628 = vmatpush.msra.mxu0 0.0
    %1629 = vmatpush.msra.mxu0 0.0
    %1630 = vmatpush.msra.mxu0 0.0
    %1631 = vmatpush.msra.mxu0 0.0
    %1632 = vmatpush.msra.mxu0 0.0
    %1633 = vmatpush.msra.mxu0 0.0
    %1634 = vmatpush.msra.mxu0 0.0
    %1635 = vmatpush.msra.mxu0 0.0
    %1636 = vmatpush.msra.mxu0 0.0
    %1637 = vmatpush.msra.mxu0 0.0
    %1638 = vmatpush.msra.mxu0 0.0
    %1639 = vmatpush.msra.mxu0 0.0
    %1640 = vmatpush.msra.mxu0 0.0
    %1641 = vmatpush.msra.mxu0 0.0
    %1642 = vmatpush.msra.mxu0 %v1622
    %1643 = vmatmul.f32.gmra.mxu0 %v1625
    %v1644 = vpop.f32.mrf.mxu0
    %v1645 = vadd.f32 0.0, %v1644
    %1646 = vdwg.mxu0
    %1648 = vrot.lane.b32.xlu0 %v1511, 8
    %v1649 = vpop.permute.xlu0 %1648
    %1652 = vrot.lane.b32.xlu0 %v1578, 16
    %v1653 = vpop.permute.xlu0 %1652
    %1656 = vrot.lane.b32.xlu0 %v1645, 24
    %v1657 = vpop.permute.xlu0 %1656
    %v1659 = vsel %vm246, %v1444, %v1649
    %v1660 = vsel %vm524, %v1659, %v1653
    %v1661 = vsel %vm526, %v1660, %v1657
    %s1662 = scalar_lea.vmem %s10, 32
    %v1663 = vld [vmem:[%s1662] sm:$0xff]
    %v1664 = vld [vmem:[%s1662 + $0x8] sm:$0xff]
    %v1665 = vld [vmem:[%s1662 + $0x10] sm:$0xff]
    %v1666 = vld [vmem:[%s1662 + $0x18] sm:$0xff]
    %s1667 = scalar_lea.vmem %s11, 1
    %v1668 = vld [vmem:[%s1667] sm:$0x1]
    %v1670 = vperm.slane %v1668, 0
    %v1673 = vsel %vm127, %v1379, 0
    %v1676 = vsel %vm127, %v1661, 0
    %1678 = vmatpush.msra.mxu0 0.0
    %1679 = vmatpush.msra.mxu0 0.0
    %1680 = vmatpush.msra.mxu0 0.0
    %1681 = vmatpush.msra.mxu0 0.0
    %1682 = vmatpush.msra.mxu0 0.0
    %1683 = vmatpush.msra.mxu0 0.0
    %1684 = vmatpush.msra.mxu0 0.0
    %1685 = vmatpush.msra.mxu0 0.0
    %1686 = vmatpush.msra.mxu0 0.0
    %1687 = vmatpush.msra.mxu0 0.0
    %1688 = vmatpush.msra.mxu0 0.0
    %1689 = vmatpush.msra.mxu0 0.0
    %1690 = vmatpush.msra.mxu0 %v1666
    %1691 = vmatpush.msra.mxu0 %v1665
    %1692 = vmatpush.msra.mxu0 %v1664
    %1693 = vmatpush.msra.mxu0 %v1663
    %1694 = vmatmul.f32.gmra.mxu0 %v1673
    %v1695 = vpop.f32.mrf.mxu0
    %v1696 = vadd.f32 %v1670, %v1695
    %1697 = vmatmul.f32.gmra.mxu0 %v1676
    %v1698 = vpop.f32.mrf.mxu0
    %v1699 = vadd.f32 %v1670, %v1698
    %1700 = vdwg.mxu0
    %v1701 = vadd.f32 %v1057, %v1696
    %v1702 = vadd.f32 %v1058, %v1699
    %s1703 = scalar_lea.vmem %s16, 1
    %v1704 = vld [vmem:[%s1703] sm:$0x1]
    %s1705 = scalar_lea.vmem %s17, 1
    %v1706 = vld [vmem:[%s1705] sm:$0x1]
    %v1707 = vsel %vm127, %v1701, 0.0
    %1708 = vadd.xlane.f32.xlu0 %v1707
    %v1709 = vpop.xlane.xlu0 %1708
    %v1710 = vsel %vm127, %v1702, 0.0
    %1711 = vadd.xlane.f32.xlu0 %v1710
    %v1712 = vpop.xlane.xlu0 %1711
    %v1713 = vmul.f32 %v1709, %v140
    %v1714 = vmul.f32 %v1712, %v140
    %v1715 = vsub.f32 %v1701, %v1713
    %v1716 = vsub.f32 %v1702, %v1714
    %v1717 = vmul.f32 %v1715, %v1715
    %v1718 = vmul.f32 %v1716, %v1716
    %v1719 = vsel %vm127, %v1717, 0.0
    %1720 = vadd.xlane.f32.xlu0 %v1719
    %v1721 = vpop.xlane.xlu0 %1720
    %v1722 = vsel %vm127, %v1718, 0.0
    %1723 = vadd.xlane.f32.xlu0 %v1722
    %v1724 = vpop.xlane.xlu0 %1723
    %v1725 = vmul.f32 %v1721, %v140
    %v1726 = vmul.f32 %v1724, %v140
    %v1727 = vadd.f32 %v1725, 1e-05
    %v1728 = vadd.f32 %v1726, 1e-05
    %v1729 = vrsqrt.pop %v1727
    %v1730 = vmul.f32 %v1729, %v1727
    %v1731 = vmul.f32 %v1730, %v1729
    %v1732 = vmul.f32 0.5, %v1731
    %v1733 = vsub.f32 1.5, %v1732
    %v1734 = vmul.f32 %v1729, %v1733
    %vm1735 = vweird.f32 %v1727
    %vm1736 = vweird.f32 %v1729
    %vm1737 = vmor %vm1735, %vm1736
    %v1738 = vsel %vm1737, %v1729, %v1734
    %v1739 = vrsqrt.pop %v1728
    %v1740 = vmul.f32 %v1739, %v1728
    %v1741 = vmul.f32 %v1740, %v1739
    %v1742 = vmul.f32 0.5, %v1741
    %v1743 = vsub.f32 1.5, %v1742
    %v1744 = vmul.f32 %v1739, %v1743
    %vm1745 = vweird.f32 %v1728
    %vm1746 = vweird.f32 %v1739
    %vm1747 = vmor %vm1745, %vm1746
    %v1748 = vsel %vm1747, %v1739, %v1744
    %v1749 = vmul.f32 %v1715, %v1738
    %v1750 = vmul.f32 %v1716, %v1748
    %v1752 = vperm.slane %v1704, 0
    %v1754 = vmul.f32 %v1749, %v1752
    %v1755 = vmul.f32 %v1750, %v1752
    %v1757 = vperm.slane %v1706, 0
    %v1759 = vadd.f32 %v1754, %v1757
    %v1760 = vadd.f32 %v1755, %v1757
    %s1761 = scalar_lea.vmem %s12, 32
    %v1762 = vld [vmem:[%s1761] sm:$0xff]
    %v1763 = vld [vmem:[%s1761 + $0x8] sm:$0xff]
    %v1764 = vld [vmem:[%s1761 + $0x10] sm:$0xff]
    %v1765 = vld [vmem:[%s1761 + $0x18] sm:$0xff]
    %s1766 = scalar_lea.vmem %s13, 1
    %v1767 = vld [vmem:[%s1766] sm:$0x1]
    %v1769 = vperm.slane %v1767, 0
    %v1772 = vsel %vm127, %v1759, 0
    %v1775 = vsel %vm127, %v1760, 0
    %1777 = vmatpush.msra.mxu0 0.0
    %1778 = vmatpush.msra.mxu0 0.0
    %1779 = vmatpush.msra.mxu0 0.0
    %1780 = vmatpush.msra.mxu0 0.0
    %1781 = vmatpush.msra.mxu0 0.0
    %1782 = vmatpush.msra.mxu0 0.0
    %1783 = vmatpush.msra.mxu0 0.0
    %1784 = vmatpush.msra.mxu0 0.0
    %1785 = vmatpush.msra.mxu0 0.0
    %1786 = vmatpush.msra.mxu0 0.0
    %1787 = vmatpush.msra.mxu0 0.0
    %1788 = vmatpush.msra.mxu0 0.0
    %1789 = vmatpush.msra.mxu0 %v1765
    %1790 = vmatpush.msra.mxu0 %v1764
    %1791 = vmatpush.msra.mxu0 %v1763
    %1792 = vmatpush.msra.mxu0 %v1762
    %1793 = vmatmul.f32.gmra.mxu0 %v1772
    %v1794 = vpop.f32.mrf.mxu0
    %v1795 = vadd.f32 %v1769, %v1794
    %1796 = vmatmul.f32.gmra.mxu0 %v1775
    %v1797 = vpop.f32.mrf.mxu0
    %v1798 = vadd.f32 %v1769, %v1797
    %1799 = vdwg.mxu0
    %v1800 = vmul.f32 %v1795, 0.5
    %v1801 = vmul.f32 %v1798, 0.5
    %v1802 = vmul.f32 %v1795, 0.044715
    %v1803 = vmul.f32 %v1798, 0.044715
    %v1804 = vmul.f32 %v1802, %v1795
    %v1805 = vmul.f32 %v1803, %v1798
    %v1806 = vmul.f32 %v1804, %v1795
    %v1807 = vmul.f32 %v1805, %v1798
    %v1808 = vadd.f32 %v1795, %v1806
    %v1809 = vadd.f32 %v1798, %v1807
    %v1810 = vmul.f32 %v1808, 0.7978846
    %v1811 = vmul.f32 %v1809, 0.7978846
    %v1812 = vtanh.pop %v1810
    %v1813 = vtanh.pop %v1811
    %v1814 = vadd.f32 %v1812, 1.0
    %v1815 = vadd.f32 %v1813, 1.0
    %v1816 = vmul.f32 %v1800, %v1814
    %v1817 = vmul.f32 %v1801, %v1815
    %s1818 = scalar_lea.vmem %s14, 64
    %v1819 = vld [vmem:[%s1818] sm:$0xff]
    %v1820 = vld [vmem:[%s1818 + $0x8] sm:$0xff]
    %v1821 = vld [vmem:[%s1818 + $0x10] sm:$0xff]
    %v1822 = vld [vmem:[%s1818 + $0x18] sm:$0xff]
    %v1823 = vld [vmem:[%s1818 + $0x20] sm:$0xff]
    %v1824 = vld [vmem:[%s1818 + $0x28] sm:$0xff]
    %v1825 = vld [vmem:[%s1818 + $0x30] sm:$0xff]
    %v1826 = vld [vmem:[%s1818 + $0x38] sm:$0xff]
    %s1827 = scalar_lea.vmem %s15, 1
    %v1828 = vld [vmem:[%s1827] sm:$0x1]
    %v1830 = vperm.slane %v1828, 0
    %v1833 = vsel %vm95, %v1816, 0
    %v1836 = vsel %vm95, %v1817, 0
    %1838 = vmatpush.msra.mxu0 0.0
    %1839 = vmatpush.msra.mxu0 0.0
    %1840 = vmatpush.msra.mxu0 0.0
    %1841 = vmatpush.msra.mxu0 0.0
    %1842 = vmatpush.msra.mxu0 0.0
    %1843 = vmatpush.msra.mxu0 0.0
    %1844 = vmatpush.msra.mxu0 0.0
    %1845 = vmatpush.msra.mxu0 0.0
    %1846 = vmatpush.msra.mxu0 %v1826
    %1847 = vmatpush.msra.mxu0 %v1825
    %1848 = vmatpush.msra.mxu0 %v1824
    %1849 = vmatpush.msra.mxu0 %v1823
    %1850 = vmatpush.msra.mxu0 %v1822
    %1851 = vmatpush.msra.mxu0 %v1821
    %1852 = vmatpush.msra.mxu0 %v1820
    %1853 = vmatpush.msra.mxu0 %v1819
    %1854 = vmatmul.f32.gmra.mxu0 %v1833
    %v1855 = vpop.f32.mrf.mxu0
    %v1856 = vadd.f32 %v1830, %v1855
    %1857 = vmatmul.f32.gmra.mxu0 %v1836
    %v1858 = vpop.f32.mrf.mxu0
    %v1859 = vadd.f32 %v1830, %v1858
    %1860 = vdwg.mxu0
    %v1861 = vadd.f32 %v1759, %v1856
    %v1862 = vadd.f32 %v1760, %v1859
    %s1863 = scalar_lea.vmem %s18, 1
    %v1864 = vld [vmem:[%s1863] sm:$0x1]
    %s1865 = scalar_lea.vmem %s19, 1
    %v1866 = vld [vmem:[%s1865] sm:$0x1]
    %v1867 = vsel %vm127, %v1861, 0.0
    %1868 = vadd.xlane.f32.xlu0 %v1867
    %v1869 = vpop.xlane.xlu0 %1868
    %v1870 = vsel %vm127, %v1862, 0.0
    %1871 = vadd.xlane.f32.xlu0 %v1870
    %v1872 = vpop.xlane.xlu0 %1871
    %v1873 = vmul.f32 %v1869, %v140
    %v1874 = vmul.f32 %v1872, %v140
    %v1875 = vsub.f32 %v1861, %v1873
    %v1876 = vsub.f32 %v1862, %v1874
    %v1877 = vmul.f32 %v1875, %v1875
    %v1878 = vmul.f32 %v1876, %v1876
    %v1879 = vsel %vm127, %v1877, 0.0
    %1880 = vadd.xlane.f32.xlu0 %v1879
    %v1881 = vpop.xlane.xlu0 %1880
    %v1882 = vsel %vm127, %v1878, 0.0
    %1883 = vadd.xlane.f32.xlu0 %v1882
    %v1884 = vpop.xlane.xlu0 %1883
    %v1885 = vmul.f32 %v1881, %v140
    %v1886 = vmul.f32 %v1884, %v140
    %v1887 = vadd.f32 %v1885, 1e-05
    %v1888 = vadd.f32 %v1886, 1e-05
    %v1889 = vrsqrt.pop %v1887
    %v1890 = vmul.f32 %v1889, %v1887
    %v1891 = vmul.f32 %v1890, %v1889
    %v1892 = vmul.f32 0.5, %v1891
    %v1893 = vsub.f32 1.5, %v1892
    %v1894 = vmul.f32 %v1889, %v1893
    %vm1895 = vweird.f32 %v1887
    %vm1896 = vweird.f32 %v1889
    %vm1897 = vmor %vm1895, %vm1896
    %v1898 = vsel %vm1897, %v1889, %v1894
    %v1899 = vrsqrt.pop %v1888
    %v1900 = vmul.f32 %v1899, %v1888
    %v1901 = vmul.f32 %v1900, %v1899
    %v1902 = vmul.f32 0.5, %v1901
    %v1903 = vsub.f32 1.5, %v1902
    %v1904 = vmul.f32 %v1899, %v1903
    %vm1905 = vweird.f32 %v1888
    %vm1906 = vweird.f32 %v1899
    %vm1907 = vmor %vm1905, %vm1906
    %v1908 = vsel %vm1907, %v1899, %v1904
    %v1909 = vmul.f32 %v1875, %v1898
    %v1910 = vmul.f32 %v1876, %v1908
    %v1912 = vperm.slane %v1864, 0
    %v1914 = vmul.f32 %v1909, %v1912
    %v1915 = vmul.f32 %v1910, %v1912
    %v1917 = vperm.slane %v1866, 0
    %v1919 = vadd.f32 %v1914, %v1917
    %v1920 = vadd.f32 %v1915, %v1917
    %v1921 = vld [vmem:[%s6] sm:$0x1]
    %v1922 = vld [vmem:[%s7] sm:$0x1]
    %v1923 = vsel %vm127, %v1919, 0.0
    %1924 = vadd.xlane.f32.xlu0 %v1923
    %v1925 = vpop.xlane.xlu0 %1924
    %v1926 = vsel %vm127, %v1920, 0.0
    %1927 = vadd.xlane.f32.xlu0 %v1926
    %v1928 = vpop.xlane.xlu0 %1927
    %v1929 = vmul.f32 %v1925, %v140
    %v1930 = vmul.f32 %v1928, %v140
    %v1931 = vsub.f32 %v1919, %v1929
    %v1932 = vsub.f32 %v1920, %v1930
    %v1933 = vmul.f32 %v1931, %v1931
    %v1934 = vmul.f32 %v1932, %v1932
    %v1935 = vsel %vm127, %v1933, 0.0
    %1936 = vadd.xlane.f32.xlu0 %v1935
    %v1937 = vpop.xlane.xlu0 %1936
    %v1938 = vsel %vm127, %v1934, 0.0
    %1939 = vadd.xlane.f32.xlu0 %v1938
    %v1940 = vpop.xlane.xlu0 %1939
    %v1941 = vmul.f32 %v1937, %v140
    %v1942 = vmul.f32 %v1940, %v140
    %v1943 = vadd.f32 %v1941, 1e-05
    %v1944 = vadd.f32 %v1942, 1e-05
    %v1945 = vrsqrt.pop %v1943
    %v1946 = vmul.f32 %v1945, %v1943
    %v1947 = vmul.f32 %v1946, %v1945
    %v1948 = vmul.f32 0.5, %v1947
    %v1949 = vsub.f32 1.5, %v1948
    %v1950 = vmul.f32 %v1945, %v1949
    %vm1951 = vweird.f32 %v1943
    %vm1952 = vweird.f32 %v1945
    %vm1953 = vmor %vm1951, %vm1952
    %v1954 = vsel %vm1953, %v1945, %v1950
    %v1955 = vrsqrt.pop %v1944
    %v1956 = vmul.f32 %v1955, %v1944
    %v1957 = vmul.f32 %v1956, %v1955
    %v1958 = vmul.f32 0.5, %v1957
    %v1959 = vsub.f32 1.5, %v1958
    %v1960 = vmul.f32 %v1955, %v1959
    %vm1961 = vweird.f32 %v1944
    %vm1962 = vweird.f32 %v1955
    %vm1963 = vmor %vm1961, %vm1962
    %v1964 = vsel %vm1963, %v1955, %v1960
    %v1965 = vmul.f32 %v1931, %v1954
    %v1966 = vmul.f32 %v1932, %v1964
    %v1968 = vperm.slane %v1921, 0
    %v1970 = vmul.f32 %v1965, %v1968
    %v1971 = vmul.f32 %v1966, %v1968
    %v1973 = vperm.slane %v1922, 0
    %v1975 = vadd.f32 %v1970, %v1973
    %v1976 = vadd.f32 %v1971, %v1973
    %1977 = vst.msk [vmem:[#allocation2] sm:$0xff] %vm127, %v1975
    %1978 = vst.msk [vmem:[#allocation2 + $0x8] sm:$0xff] %vm127, %v1976
    %v1980 = vsel %vm127, %v1975, 0
    %v1983 = vsel %vm127, %v1976, 0
    %v1986 = vsel %vm127, %v85, 0
    %v1989 = vsel %vm127, %v86, 0
    %v1992 = vsel %vm127, %v87, 0
    %v1995 = vsel %vm127, %v88, 0
    %v1998 = vsel %vm127, %v89, 0
    %v2001 = vsel %vm127, %v90, 0
    %v2004 = vsel %vm127, %v91, 0
    %v2007 = vsel %vm127, %v92, 0
    %2009 = vmatpush.xpose.msra.mxu0 0.0
    %2010 = vmatpush.xpose.msra.mxu0 0.0
    %2011 = vmatpush.xpose.msra.mxu0 0.0
    %2012 = vmatpush.xpose.msra.mxu0 0.0
    %2013 = vmatpush.xpose.msra.mxu0 0.0
    %2014 = vmatpush.xpose.msra.mxu0 0.0
    %2015 = vmatpush.xpose.msra.mxu0 0.0
    %2016 = vmatpush.xpose.msra.mxu0 0.0
    %2017 = vmatpush.xpose.msra.mxu0 %v2007
    %2018 = vmatpush.xpose.msra.mxu0 %v2004
    %2019 = vmatpush.xpose.msra.mxu0 %v2001
    %2020 = vmatpush.xpose.msra.mxu0 %v1998
    %2021 = vmatpush.xpose.msra.mxu0 %v1995
    %2022 = vmatpush.xpose.msra.mxu0 %v1992
    %2023 = vmatpush.xpose.msra.mxu0 %v1989
    %2024 = vmatpush.xpose.msra.mxu0 %v1986
    %2025 = vmatmul.f32.gmra.mxu0 %v1980
    %v2026 = vpop.f32.mrf.mxu0
    %v2027 = vadd.f32 0.0, %v2026
    %2028 = vmatmul.f32.gmra.mxu0 %v1983
    %v2029 = vpop.f32.mrf.mxu0
    %v2030 = vadd.f32 0.0, %v2029
    %2031 = vdwg.mxu0
    %2032 = vst.msk [vmem:[#allocation4] sm:$0xff] %vm95, %v2027
    %2033 = vst.msk [vmem:[#allocation4 + $0x8] sm:$0xff] %vm95, %v2030
    // Predicated region
    $region82: #{transformer_forward.1} parent=1 // pred_check
      _
    $region83: #{transformer_forward.1} parent=1 // pred_check_branch
      %2035 = sbr.rel (0) target = $region85
    $region84: #{transformer_forward.1} parent=1 // pred_region
      %2037 = vsyncadd [#allocation3], 0
      %s2038 = sshll.u32 [#allocation2], 4
      %s2039 = int_to_ptr.vmem [resolvable:$true] %s2038
      %s2040 = sshll.u32 %s20, 4
      %s2041 = int_to_ptr.hbm [resolvable:$true] %s2040
      %2046 = dma.vmem_to_hbm [thread:$0]  %s2039, 256, %s2041, [#allocation3], 128, 128, 8
    $region85: #{transformer_forward.1} parent=1 // pred_fallthru
      _
    // Predicated region
    $region86: #{transformer_forward.1} parent=1 // pred_check
      _
    $region87: #{transformer_forward.1} parent=1 // pred_check_branch
      %2048 = sbr.rel (0) target = $region89
    $region88: #{transformer_forward.1} parent=1 // pred_region
      %2050 = vsyncadd [#allocation5], 0
      %s2051 = sshll.u32 [#allocation4], 4
      %s2052 = int_to_ptr.vmem [resolvable:$true] %s2051
      %s2053 = sshll.u32 %s21, 4
      %s2054 = int_to_ptr.hbm [resolvable:$true] %s2053
      %2059 = dma.vmem_to_hbm [thread:$0]  %s2052, 256, %s2054, [#allocation5], 128, 128, 8
    $region89: #{transformer_forward.1} parent=1 // pred_fallthru
      _
    // Predicated region
    $region90: #{transformer_forward.1} parent=1 // pred_check
      _
    $region91: #{transformer_forward.1} parent=1 // pred_check_branch
      %2061 = sbr.rel (0) target = $region93
    $region92: #{transformer_forward.1} parent=1 // pred_region
      %2063 = dma.done [#allocation3], 256
    $region93: #{transformer_forward.1} parent=1 // pred_fallthru
      _
    // Predicated region
    $region94: #{transformer_forward.1} parent=1 // pred_check
      _
    $region95: #{transformer_forward.1} parent=1 // pred_check_branch
      %2065 = sbr.rel (0) target = $region97
    $region96: #{transformer_forward.1} parent=1 // pred_region
      %2067 = dma.done [#allocation5], 256
    $region97: #{transformer_forward.1} parent=1 // pred_fallthru
      _
    %2068 = vsyncpa [#allocation3], 1
    %2069 = vsyncpa [#allocation5], 1

</llo_original>
